<compile_context>
chip_gen: v7x
topology: tpu7x:2x2x1
jax: 0.10.0
libtpu: 0.0.40
codegen_flags: <defaults>
</compile_context>

<pallas_src>
import functools

import jax
import jax.numpy as jnp
import numpy as np
from jax.experimental import pallas as pl
from jax.experimental.pallas import tpu as pltpu


# ---------------------------------------------------------------------------
# Elementwise helper (runs inside the kernel)
# ---------------------------------------------------------------------------
def _gelu(x):
    # TODO(synk): PyTorch F.gelu default is the exact erf form; the tanh approximation
    # (max abs err ~1e-3) is used here for robust Mosaic lowering (EUP tanh).
    c = jnp.float32(0.7978845608028654)  # sqrt(2/pi)
    return 0.5 * x * (1.0 + jnp.tanh(c * (x + 0.044715 * x * x * x)))


# ---------------------------------------------------------------------------
# Fused MEGNet forward kernel: one grid program per batch tile of BT elements.
# All activations live as (T*BT, C) time-major slabs (row = t*BT + b).
# ---------------------------------------------------------------------------
def _megnet_kernel(x_ref,
                   w1_ref, b1_ref, w2_ref, b2_ref, w3_ref, b3_ref, w4_ref, b4_ref,
                   wih_ref, bih_ref, whh_ref, blend_ref,
                   hw_ref, hb_ref,
                   o_ref,
                   *, T, BT, H):
    R = T * BT

    def conv_bn_gelu(h, w_ref, b_ref):
        # h: (R, Cin).  w_ref: (Cin, 3*Cout) = [w_{t-1} | w_t | w_{t+1}], BN folded.
        cout = w_ref.shape[-1] // 3
        a = jnp.dot(h, w_ref[...], preferred_element_type=jnp.float32)      # (R, 3*Cout)
        zero = jnp.zeros((BT, cout), jnp.float32)
        # time-major rows: shifting by BT rows moves exactly one time step per batch elem,
        # the zero block provides the 'same' padding at t==0 / t==T-1.
        left = jnp.concatenate([zero, a[0:R - BT, 0:cout]], axis=0)          # x[t-1] @ w_{t-1}
        center = a[:, cout:2 * cout]                                         # x[t]   @ w_t
        right = jnp.concatenate([a[BT:R, 2 * cout:3 * cout], zero], axis=0)  # x[t+1] @ w_{t+1}
        return _gelu(left + center + right + b_ref[...])

    h = x_ref[0]                                    # (R, C0)
    h = conv_bn_gelu(h, w1_ref, b1_ref)
    h = conv_bn_gelu(h, w2_ref, b2_ref)
    h = conv_bn_gelu(h, w3_ref, b3_ref)
    h = conv_bn_gelu(h, w4_ref, b4_ref)             # (R, cnn_hid)
    # Dropout: identity in eval mode.

    # BiLSTM input projection for both directions, hoisted out of the recurrence.
    # Column layout: [i_f i_b | f_f f_b | o_f o_b | g_f g_b]  (each sub-block width H).
    G = 8 * H
    g_proj = jnp.dot(h, wih_ref[...], preferred_element_type=jnp.float32) + bih_ref[...]
    whh = whh_ref[...]                              # (2H, 8H) block-diag per direction
    blend = blend_ref[...]                          # (1, 8H): 1.0 on fwd columns, 0.0 on bwd

    h_cat = jnp.zeros((BT, 2 * H), jnp.float32)     # [h_fwd | h_bwd]
    c_cat = jnp.zeros((BT, 2 * H), jnp.float32)
    sum_h = jnp.zeros((BT, 2 * H), jnp.float32)

    # Fully unrolled (T is small & static).  Per step: one MXU push, one sigmoid sweep,
    # two tanh sweeps, fused (BT, 2H) element-wise cell update.  The mean-pool only
    # needs the running sum, so the (T, 2H) sequence is never materialised.
    for t in range(T):
        gf = g_proj[t * BT:(t + 1) * BT, :]                 # fwd direction sees x_t
        gb = g_proj[(T - 1 - t) * BT:(T - t) * BT, :]       # bwd direction sees x_{T-1-t}
        g_in = gb + (gf - gb) * blend                       # per-column fwd/bwd select (VPU)
        g = g_in + jnp.dot(h_cat, whh, preferred_element_type=jnp.float32)
        s = jax.nn.sigmoid(g[:, 0:6 * H])                   # [i | f | o] gates (both dirs)
        gg = jnp.tanh(g[:, 6 * H:8 * H])                    # [g] gate (both dirs)
        c_cat = s[:, 2 * H:4 * H] * c_cat + s[:, 0:2 * H] * gg
        h_cat = s[:, 4 * H:6 * H] * jnp.tanh(c_cat)
        sum_h = sum_h + h_cat

    # AdaptiveAvgPool1d(1) over time + Linear(2H -> num_classes), fused epilogue.
    logits = jnp.dot(sum_h * jnp.float32(1.0 / T), hw_ref[...],
                     preferred_element_type=jnp.float32) + hb_ref[...]
    o_ref[...] = logits


def megnet_forward(params, X, subject_idxs):
    """X: (B, in_channels, seq_len)  [PyTorch NCL];  subject_idxs: (B,) int32."""
    B, _, T = X.shape
    emb = params["emb"]
    subj = emb[jnp.asarray(subject_idxs, jnp.int32)]                 # (B, E) embedding (glue)
    x = jnp.transpose(X, (0, 2, 1)).astype(jnp.float32)              # NLC (B, T, Cin)
    x = jnp.concatenate(
        [x, jnp.broadcast_to(subj[:, None, :], (B, T, emb.shape[-1]))], axis=-1)
    C0 = x.shape[-1]

    # Batch tile: 8 rows per program when possible (full sublane utilisation, aligned
    # BT-row shifts); otherwise the whole batch in one program.
    BT = 8 if B % 8 == 0 else B
    nb = B // BT
    # Per-tile TIME-MAJOR flat layout (row = t*BT + b), built once in plain JAX.
    x_tiles = x.reshape(nb, BT, T, C0).transpose(0, 2, 1, 3).reshape(nb, T * BT, C0)

    conv = params["conv"]
    H = params["whh"].shape[0] // 2
    nc = params["head_w"].shape[-1]

    # fwd/bwd column-select mask for the interleaved gate layout.
    blend = jnp.asarray(
        np.tile(np.concatenate([np.ones(H, np.float32), np.zeros(H, np.float32)]), 4)
    ).reshape(1, 8 * H)

    operands = [x_tiles]
    for layer in conv:
        operands += [layer["w"], layer["b"]]
    operands += [params["wih"], params["bih"], params["whh"], blend,
                 params["head_w"], params["head_b"]]

    def _full_spec(arr):
        n = arr.ndim
        return pl.BlockSpec(arr.shape, lambda i, n=n: (0,) * n)

    in_specs = ([pl.BlockSpec((1, T * BT, C0), lambda i: (i, 0, 0))]
                + [_full_spec(a) for a in operands[1:]])

    return pl.pallas_call(
        functools.partial(_megnet_kernel, T=T, BT=BT, H=H),
        out_shape=jax.ShapeDtypeStruct((B, nc), jnp.float32),
        grid=(nb,),
        in_specs=in_specs,
        out_specs=pl.BlockSpec((BT, nc), lambda i: (i, 0)),
        compiler_params=pltpu.CompilerParams(dimension_semantics=("parallel",)),
    )(*operands)


# ---------------------------------------------------------------------------
# Parameters (deterministic synthetic init).  Eval-mode BatchNorm is folded into the
# conv weights; the BiLSTM weights are laid out in the kernel's combined gate order
# [i_f i_b | f_f f_b | o_f o_b | g_f g_b] (a torch state_dict would be permuted from
# the (i, f, g, o) order at load time); b_ih + b_hh are combined into one bias.
# ---------------------------------------------------------------------------
def init_params(key, num_classes, in_channels, num_subjects,
                subject_emb_dim, cnn_hid_dim, rnn_hid_dim):
    keys = iter(jax.random.split(key, 64))

    def nrm(shape, s=0.1):
        return (s * jax.random.normal(next(keys), shape)).astype(jnp.float32)

    eps = 1e-5
    params = {"emb": nrm((num_subjects, subject_emb_dim), 1.0)}

    c0 = in_channels + subject_emb_dim
    layer_dims = [(c0, cnn_hid_dim), (cnn_hid_dim, cnn_hid_dim),            # ConvBlock 0
                  (cnn_hid_dim, cnn_hid_dim), (cnn_hid_dim, cnn_hid_dim)]   # ConvBlock 1
    conv_layers = []
    for cin, cout in layer_dims:
        w = nrm((3, cin, cout))              # torch conv weight (Cout, Cin, 3), permuted
        b = nrm((1, cout))
        gamma = 1.0 + nrm((1, cout))
        beta = nrm((1, cout))
        # eval-mode BN fold (running_mean=0, running_var=1 for a fresh module):
        scale = gamma / jnp.sqrt(1.0 + eps)
        w_folded = w * scale[None]
        # pre-concat taps along output axis -> (Cin, 3*Cout) = [w_{t-1} | w_t | w_{t+1}]
        w_all = jnp.transpose(w_folded, (1, 0, 2)).reshape(cin, 3 * cout)
        b_fold = b * scale + beta
        conv_layers.append({"w": w_all, "b": b_fold})
    params["conv"] = conv_layers

    H = rnn_hid_dim

    def per_gate(shape):
        return {g: nrm(shape) for g in ("i", "f", "o", "g")}

    wih_f, wih_b = per_gate((cnn_hid_dim, H)), per_gate((cnn_hid_dim, H))
    whh_f, whh_b = per_gate((H, H)), per_gate((H, H))
    bih_f, bih_b = per_gate((1, H)), per_gate((1, H))        # b_ih + b_hh combined

    def interleave(fd, bd):
        return jnp.concatenate([fd["i"], bd["i"], fd["f"], bd["f"],
                                fd["o"], bd["o"], fd["g"], bd["g"]], axis=-1)

    params["wih"] = interleave(wih_f, wih_b)                 # (C, 8H)
    params["bih"] = interleave(bih_f, bih_b)                 # (1, 8H)

    zH = jnp.zeros((H, H), jnp.float32)
    whh_top = jnp.concatenate([whh_f["i"], zH, whh_f["f"], zH,
                               whh_f["o"], zH, whh_f["g"], zH], axis=-1)
    whh_bot = jnp.concatenate([zH, whh_b["i"], zH, whh_b["f"],
                               zH, whh_b["o"], zH, whh_b["g"]], axis=-1)
    params["whh"] = jnp.concatenate([whh_top, whh_bot], axis=0)   # (2H, 8H) block-diagonal

    params["head_w"] = nrm((2 * H, num_classes))             # rows ordered [fwd H ; bwd H]
    params["head_b"] = nrm((1, num_classes))
    return params


if __name__ == "__main__":
    B, in_channels, seq_len = 2, 4, 16
    num_subjects, subject_emb_dim = 4, 10
    cnn_hid_dim, rnn_hid_dim, num_classes = 32, 16, 4

    key = jax.random.PRNGKey(0)
    kp, kx, ks = jax.random.split(key, 3)
    params = init_params(kp, num_classes, in_channels, num_subjects,
                         subject_emb_dim, cnn_hid_dim, rnn_hid_dim)
    X = jax.random.normal(kx, (B, in_channels, seq_len), jnp.float32)
    subject_idxs = jax.random.randint(ks, (B,), 0, num_subjects)

    out = megnet_forward(params, X, subject_idxs)
    out = jax.block_until_ready(out)
    assert out.shape == (B, num_classes)
    assert jnp.all(jnp.isfinite(out))
    print("KERNEL_OK")
</pallas_src>

<mosaic_0001>
module attributes {stable_mosaic.version = 11 : i64} {
  func.func @_megnet_kernel(%arg0: i32, %arg1: memref<1x32x14xf32, #tpu.memory_space<vmem>>, %arg2: memref<14x96xf32, #tpu.memory_space<vmem>>, %arg3: memref<1x32xf32, #tpu.memory_space<vmem>>, %arg4: memref<32x96xf32, #tpu.memory_space<vmem>>, %arg5: memref<1x32xf32, #tpu.memory_space<vmem>>, %arg6: memref<32x96xf32, #tpu.memory_space<vmem>>, %arg7: memref<1x32xf32, #tpu.memory_space<vmem>>, %arg8: memref<32x96xf32, #tpu.memory_space<vmem>>, %arg9: memref<1x32xf32, #tpu.memory_space<vmem>>, %arg10: memref<32x128xf32, #tpu.memory_space<vmem>>, %arg11: memref<1x128xf32, #tpu.memory_space<vmem>>, %arg12: memref<32x128xf32, #tpu.memory_space<vmem>>, %arg13: memref<1x128xf32, #tpu.memory_space<vmem>>, %arg14: memref<32x4xf32, #tpu.memory_space<vmem>>, %arg15: memref<1x4xf32, #tpu.memory_space<vmem>>, %arg16: memref<2x4xf32, #tpu.memory_space<vmem>>) attributes {dimension_semantics = [#tpu.dimension_semantics<parallel>], iteration_bounds = array<i64: 1>, scalar_prefetch = 0 : i64, scratch_operands = 0 : i64, tpu.core_type = #tpu.core_type<tc>, window_params = [{transform_indices = @transform_0, window_bounds = array<i64: 1, 32, 14>}, {pipeline_mode = #tpu.pipeline_mode<synchronous>, transform_indices = @transform_1, window_bounds = array<i64: 14, 96>}, {pipeline_mode = #tpu.pipeline_mode<synchronous>, transform_indices = @transform_2, window_bounds = array<i64: 1, 32>}, {pipeline_mode = #tpu.pipeline_mode<synchronous>, transform_indices = @transform_3, window_bounds = array<i64: 32, 96>}, {pipeline_mode = #tpu.pipeline_mode<synchronous>, transform_indices = @transform_4, window_bounds = array<i64: 1, 32>}, {pipeline_mode = #tpu.pipeline_mode<synchronous>, transform_indices = @transform_5, window_bounds = array<i64: 32, 96>}, {pipeline_mode = #tpu.pipeline_mode<synchronous>, transform_indices = @transform_6, window_bounds = array<i64: 1, 32>}, {pipeline_mode = #tpu.pipeline_mode<synchronous>, transform_indices = @transform_7, window_bounds = array<i64: 32, 96>}, {pipeline_mode = #tpu.pipeline_mode<synchronous>, transform_indices = @transform_8, window_bounds = array<i64: 1, 32>}, {pipeline_mode = #tpu.pipeline_mode<synchronous>, transform_indices = @transform_9, window_bounds = array<i64: 32, 128>}, {pipeline_mode = #tpu.pipeline_mode<synchronous>, transform_indices = @transform_10, window_bounds = array<i64: 1, 128>}, {pipeline_mode = #tpu.pipeline_mode<synchronous>, transform_indices = @transform_11, window_bounds = array<i64: 32, 128>}, {pipeline_mode = #tpu.pipeline_mode<synchronous>, transform_indices = @transform_12, window_bounds = array<i64: 1, 128>}, {pipeline_mode = #tpu.pipeline_mode<synchronous>, transform_indices = @transform_13, window_bounds = array<i64: 32, 4>}, {pipeline_mode = #tpu.pipeline_mode<synchronous>, transform_indices = @transform_14, window_bounds = array<i64: 1, 4>}, {transform_indices = @transform_15, window_bounds = array<i64: 2, 4>}]} {
    %c0 = arith.constant 0 : index
    %c0_0 = arith.constant 0 : index
    %c0_1 = arith.constant 0 : index
    %0 = vector.load %arg1[%c0, %c0_0, %c0_1] : memref<1x32x14xf32, #tpu.memory_space<vmem>>, vector<1x32x14xf32>
    %1 = vector.shape_cast %0 : vector<1x32x14xf32> to vector<32x14xf32>
    %c0_2 = arith.constant 0 : index
    %c0_3 = arith.constant 0 : index
    %2 = vector.load %arg2[%c0_2, %c0_3] : memref<14x96xf32, #tpu.memory_space<vmem>>, vector<14x96xf32>
    %cst = arith.constant dense<0.000000e+00> : vector<32x96xf32>
    %3 = tpu.matmul %1, %2, %cst {dimension_numbers = #tpu.dot_dimension_numbers<[1], [0], [0], [1], [0, 0, 1, 1], [], []>} : vector<32x14xf32>, vector<14x96xf32>, vector<32x96xf32> -> vector<32x96xf32>
    %cst_4 = arith.constant 0.000000e+00 : f32
    %4 = vector.broadcast %cst_4 : f32 to vector<2x32xf32>
    %5 = vector.extract_strided_slice %3 {offsets = [0, 0], sizes = [30, 32], strides = [1, 1]} : vector<32x96xf32> to vector<30x32xf32>
    %6 = tpu.concatenate %4, %5 in 0 : vector<2x32xf32>, vector<30x32xf32> -> vector<32x32xf32>
    %7 = vector.extract_strided_slice %3 {offsets = [0, 32], sizes = [32, 32], strides = [1, 1]} : vector<32x96xf32> to vector<32x32xf32>
    %8 = vector.extract_strided_slice %3 {offsets = [2, 64], sizes = [30, 32], strides = [1, 1]} : vector<32x96xf32> to vector<30x32xf32>
    %9 = tpu.concatenate %8, %4 in 0 : vector<30x32xf32>, vector<2x32xf32> -> vector<32x32xf32>
    %10 = arith.addf %6, %7 : vector<32x32xf32>
    %11 = arith.addf %10, %9 : vector<32x32xf32>
    %c0_5 = arith.constant 0 : index
    %c0_6 = arith.constant 0 : index
    %12 = vector.load %arg3[%c0_5, %c0_6] : memref<1x32xf32, #tpu.memory_space<vmem>>, vector<1x32xf32>
    %13 = vector.broadcast %12 : vector<1x32xf32> to vector<32x32xf32>
    %14 = arith.addf %11, %13 : vector<32x32xf32>
    %cst_7 = arith.constant 5.000000e-01 : f32
    %15 = vector.broadcast %cst_7 : f32 to vector<32x32xf32>
    %16 = arith.mulf %15, %14 : vector<32x32xf32>
    %cst_8 = arith.constant 4.471500e-02 : f32
    %17 = vector.broadcast %cst_8 : f32 to vector<32x32xf32>
    %18 = arith.mulf %17, %14 : vector<32x32xf32>
    %19 = arith.mulf %18, %14 : vector<32x32xf32>
    %20 = arith.mulf %19, %14 : vector<32x32xf32>
    %21 = arith.addf %14, %20 : vector<32x32xf32>
    %cst_9 = arith.constant 0.797884583 : f32
    %22 = vector.broadcast %cst_9 : f32 to vector<32x32xf32>
    %23 = arith.mulf %22, %21 : vector<32x32xf32>
    %24 = math.tanh %23 : vector<32x32xf32>
    %cst_10 = arith.constant 1.000000e+00 : f32
    %25 = vector.broadcast %cst_10 : f32 to vector<32x32xf32>
    %26 = arith.addf %25, %24 : vector<32x32xf32>
    %27 = arith.mulf %16, %26 : vector<32x32xf32>
    %c0_11 = arith.constant 0 : index
    %c0_12 = arith.constant 0 : index
    %28 = vector.load %arg4[%c0_11, %c0_12] : memref<32x96xf32, #tpu.memory_space<vmem>>, vector<32x96xf32>
    %cst_13 = arith.constant dense<0.000000e+00> : vector<32x96xf32>
    %29 = tpu.matmul %27, %28, %cst_13 {dimension_numbers = #tpu.dot_dimension_numbers<[1], [0], [0], [1], [0, 0, 1, 1], [], []>} : vector<32x32xf32>, vector<32x96xf32>, vector<32x96xf32> -> vector<32x96xf32>
    %cst_14 = arith.constant 0.000000e+00 : f32
    %30 = vector.broadcast %cst_14 : f32 to vector<2x32xf32>
    %31 = vector.extract_strided_slice %29 {offsets = [0, 0], sizes = [30, 32], strides = [1, 1]} : vector<32x96xf32> to vector<30x32xf32>
    %32 = tpu.concatenate %30, %31 in 0 : vector<2x32xf32>, vector<30x32xf32> -> vector<32x32xf32>
    %33 = vector.extract_strided_slice %29 {offsets = [0, 32], sizes = [32, 32], strides = [1, 1]} : vector<32x96xf32> to vector<32x32xf32>
    %34 = vector.extract_strided_slice %29 {offsets = [2, 64], sizes = [30, 32], strides = [1, 1]} : vector<32x96xf32> to vector<30x32xf32>
    %35 = tpu.concatenate %34, %30 in 0 : vector<30x32xf32>, vector<2x32xf32> -> vector<32x32xf32>
    %36 = arith.addf %32, %33 : vector<32x32xf32>
    %37 = arith.addf %36, %35 : vector<32x32xf32>
    %c0_15 = arith.constant 0 : index
    %c0_16 = arith.constant 0 : index
    %38 = vector.load %arg5[%c0_15, %c0_16] : memref<1x32xf32, #tpu.memory_space<vmem>>, vector<1x32xf32>
    %39 = vector.broadcast %38 : vector<1x32xf32> to vector<32x32xf32>
    %40 = arith.addf %37, %39 : vector<32x32xf32>
    %cst_17 = arith.constant 5.000000e-01 : f32
    %41 = vector.broadcast %cst_17 : f32 to vector<32x32xf32>
    %42 = arith.mulf %41, %40 : vector<32x32xf32>
    %cst_18 = arith.constant 4.471500e-02 : f32
    %43 = vector.broadcast %cst_18 : f32 to vector<32x32xf32>
    %44 = arith.mulf %43, %40 : vector<32x32xf32>
    %45 = arith.mulf %44, %40 : vector<32x32xf32>
    %46 = arith.mulf %45, %40 : vector<32x32xf32>
    %47 = arith.addf %40, %46 : vector<32x32xf32>
    %cst_19 = arith.constant 0.797884583 : f32
    %48 = vector.broadcast %cst_19 : f32 to vector<32x32xf32>
    %49 = arith.mulf %48, %47 : vector<32x32xf32>
    %50 = math.tanh %49 : vector<32x32xf32>
    %cst_20 = arith.constant 1.000000e+00 : f32
    %51 = vector.broadcast %cst_20 : f32 to vector<32x32xf32>
    %52 = arith.addf %51, %50 : vector<32x32xf32>
    %53 = arith.mulf %42, %52 : vector<32x32xf32>
    %c0_21 = arith.constant 0 : index
    %c0_22 = arith.constant 0 : index
    %54 = vector.load %arg6[%c0_21, %c0_22] : memref<32x96xf32, #tpu.memory_space<vmem>>, vector<32x96xf32>
    %cst_23 = arith.constant dense<0.000000e+00> : vector<32x96xf32>
    %55 = tpu.matmul %53, %54, %cst_23 {dimension_numbers = #tpu.dot_dimension_numbers<[1], [0], [0], [1], [0, 0, 1, 1], [], []>} : vector<32x32xf32>, vector<32x96xf32>, vector<32x96xf32> -> vector<32x96xf32>
    %cst_24 = arith.constant 0.000000e+00 : f32
    %56 = vector.broadcast %cst_24 : f32 to vector<2x32xf32>
    %57 = vector.extract_strided_slice %55 {offsets = [0, 0], sizes = [30, 32], strides = [1, 1]} : vector<32x96xf32> to vector<30x32xf32>
    %58 = tpu.concatenate %56, %57 in 0 : vector<2x32xf32>, vector<30x32xf32> -> vector<32x32xf32>
    %59 = vector.extract_strided_slice %55 {offsets = [0, 32], sizes = [32, 32], strides = [1, 1]} : vector<32x96xf32> to vector<32x32xf32>
    %60 = vector.extract_strided_slice %55 {offsets = [2, 64], sizes = [30, 32], strides = [1, 1]} : vector<32x96xf32> to vector<30x32xf32>
    %61 = tpu.concatenate %60, %56 in 0 : vector<30x32xf32>, vector<2x32xf32> -> vector<32x32xf32>
    %62 = arith.addf %58, %59 : vector<32x32xf32>
    %63 = arith.addf %62, %61 : vector<32x32xf32>
    %c0_25 = arith.constant 0 : index
    %c0_26 = arith.constant 0 : index
    %64 = vector.load %arg7[%c0_25, %c0_26] : memref<1x32xf32, #tpu.memory_space<vmem>>, vector<1x32xf32>
    %65 = vector.broadcast %64 : vector<1x32xf32> to vector<32x32xf32>
    %66 = arith.addf %63, %65 : vector<32x32xf32>
    %cst_27 = arith.constant 5.000000e-01 : f32
    %67 = vector.broadcast %cst_27 : f32 to vector<32x32xf32>
    %68 = arith.mulf %67, %66 : vector<32x32xf32>
    %cst_28 = arith.constant 4.471500e-02 : f32
    %69 = vector.broadcast %cst_28 : f32 to vector<32x32xf32>
    %70 = arith.mulf %69, %66 : vector<32x32xf32>
    %71 = arith.mulf %70, %66 : vector<32x32xf32>
    %72 = arith.mulf %71, %66 : vector<32x32xf32>
    %73 = arith.addf %66, %72 : vector<32x32xf32>
    %cst_29 = arith.constant 0.797884583 : f32
    %74 = vector.broadcast %cst_29 : f32 to vector<32x32xf32>
    %75 = arith.mulf %74, %73 : vector<32x32xf32>
    %76 = math.tanh %75 : vector<32x32xf32>
    %cst_30 = arith.constant 1.000000e+00 : f32
    %77 = vector.broadcast %cst_30 : f32 to vector<32x32xf32>
    %78 = arith.addf %77, %76 : vector<32x32xf32>
    %79 = arith.mulf %68, %78 : vector<32x32xf32>
    %c0_31 = arith.constant 0 : index
    %c0_32 = arith.constant 0 : index
    %80 = vector.load %arg8[%c0_31, %c0_32] : memref<32x96xf32, #tpu.memory_space<vmem>>, vector<32x96xf32>
    %cst_33 = arith.constant dense<0.000000e+00> : vector<32x96xf32>
    %81 = tpu.matmul %79, %80, %cst_33 {dimension_numbers = #tpu.dot_dimension_numbers<[1], [0], [0], [1], [0, 0, 1, 1], [], []>} : vector<32x32xf32>, vector<32x96xf32>, vector<32x96xf32> -> vector<32x96xf32>
    %cst_34 = arith.constant 0.000000e+00 : f32
    %82 = vector.broadcast %cst_34 : f32 to vector<2x32xf32>
    %83 = vector.extract_strided_slice %81 {offsets = [0, 0], sizes = [30, 32], strides = [1, 1]} : vector<32x96xf32> to vector<30x32xf32>
    %84 = tpu.concatenate %82, %83 in 0 : vector<2x32xf32>, vector<30x32xf32> -> vector<32x32xf32>
    %85 = vector.extract_strided_slice %81 {offsets = [0, 32], sizes = [32, 32], strides = [1, 1]} : vector<32x96xf32> to vector<32x32xf32>
    %86 = vector.extract_strided_slice %81 {offsets = [2, 64], sizes = [30, 32], strides = [1, 1]} : vector<32x96xf32> to vector<30x32xf32>
    %87 = tpu.concatenate %86, %82 in 0 : vector<30x32xf32>, vector<2x32xf32> -> vector<32x32xf32>
    %88 = arith.addf %84, %85 : vector<32x32xf32>
    %89 = arith.addf %88, %87 : vector<32x32xf32>
    %c0_35 = arith.constant 0 : index
    %c0_36 = arith.constant 0 : index
    %90 = vector.load %arg9[%c0_35, %c0_36] : memref<1x32xf32, #tpu.memory_space<vmem>>, vector<1x32xf32>
    %91 = vector.broadcast %90 : vector<1x32xf32> to vector<32x32xf32>
    %92 = arith.addf %89, %91 : vector<32x32xf32>
    %cst_37 = arith.constant 5.000000e-01 : f32
    %93 = vector.broadcast %cst_37 : f32 to vector<32x32xf32>
    %94 = arith.mulf %93, %92 : vector<32x32xf32>
    %cst_38 = arith.constant 4.471500e-02 : f32
    %95 = vector.broadcast %cst_38 : f32 to vector<32x32xf32>
    %96 = arith.mulf %95, %92 : vector<32x32xf32>
    %97 = arith.mulf %96, %92 : vector<32x32xf32>
    %98 = arith.mulf %97, %92 : vector<32x32xf32>
    %99 = arith.addf %92, %98 : vector<32x32xf32>
    %cst_39 = arith.constant 0.797884583 : f32
    %100 = vector.broadcast %cst_39 : f32 to vector<32x32xf32>
    %101 = arith.mulf %100, %99 : vector<32x32xf32>
    %102 = math.tanh %101 : vector<32x32xf32>
    %cst_40 = arith.constant 1.000000e+00 : f32
    %103 = vector.broadcast %cst_40 : f32 to vector<32x32xf32>
    %104 = arith.addf %103, %102 : vector<32x32xf32>
    %105 = arith.mulf %94, %104 : vector<32x32xf32>
    %c0_41 = arith.constant 0 : index
    %c0_42 = arith.constant 0 : index
    %106 = vector.load %arg10[%c0_41, %c0_42] : memref<32x128xf32, #tpu.memory_space<vmem>>, vector<32x128xf32>
    %cst_43 = arith.constant dense<0.000000e+00> : vector<32x128xf32>
    %107 = tpu.matmul %105, %106, %cst_43 {dimension_numbers = #tpu.dot_dimension_numbers<[1], [0], [0], [1], [0, 0, 1, 1], [], []>} : vector<32x32xf32>, vector<32x128xf32>, vector<32x128xf32> -> vector<32x128xf32>
    %c0_44 = arith.constant 0 : index
    %c0_45 = arith.constant 0 : index
    %108 = vector.load %arg11[%c0_44, %c0_45] : memref<1x128xf32, #tpu.memory_space<vmem>>, vector<1x128xf32>
    %109 = vector.broadcast %108 : vector<1x128xf32> to vector<32x128xf32>
    %110 = arith.addf %107, %109 : vector<32x128xf32>
    %c0_46 = arith.constant 0 : index
    %c0_47 = arith.constant 0 : index
    %111 = vector.load %arg12[%c0_46, %c0_47] : memref<32x128xf32, #tpu.memory_space<vmem>>, vector<32x128xf32>
    %c0_48 = arith.constant 0 : index
    %c0_49 = arith.constant 0 : index
    %112 = vector.load %arg13[%c0_48, %c0_49] : memref<1x128xf32, #tpu.memory_space<vmem>>, vector<1x128xf32>
    %cst_50 = arith.constant 0.000000e+00 : f32
    %113 = vector.broadcast %cst_50 : f32 to vector<2x32xf32>
    %cst_51 = arith.constant 0.000000e+00 : f32
    %114 = vector.broadcast %cst_51 : f32 to vector<2x32xf32>
    %cst_52 = arith.constant 0.000000e+00 : f32
    %115 = vector.broadcast %cst_52 : f32 to vector<2x32xf32>
    %116 = vector.extract_strided_slice %110 {offsets = [0, 0], sizes = [2, 128], strides = [1, 1]} : vector<32x128xf32> to vector<2x128xf32>
    %117 = vector.extract_strided_slice %110 {offsets = [30, 0], sizes = [2, 128], strides = [1, 1]} : vector<32x128xf32> to vector<2x128xf32>
    %118 = arith.subf %116, %117 : vector<2x128xf32>
    %119 = vector.broadcast %112 : vector<1x128xf32> to vector<2x128xf32>
    %120 = arith.mulf %118, %119 : vector<2x128xf32>
    %121 = arith.addf %117, %120 : vector<2x128xf32>
    %cst_53 = arith.constant dense<0.000000e+00> : vector<2x128xf32>
    %122 = tpu.matmul %113, %111, %cst_53 {dimension_numbers = #tpu.dot_dimension_numbers<[1], [0], [0], [1], [0, 0, 1, 1], [], []>} : vector<2x32xf32>, vector<32x128xf32>, vector<2x128xf32> -> vector<2x128xf32>
    %123 = arith.addf %121, %122 : vector<2x128xf32>
    %124 = vector.extract_strided_slice %123 {offsets = [0, 0], sizes = [2, 96], strides = [1, 1]} : vector<2x128xf32> to vector<2x96xf32>
    %125 = arith.negf %124 : vector<2x96xf32>
    %126 = math.exp %125 : vector<2x96xf32>
    %cst_54 = arith.constant 1.000000e+00 : f32
    %127 = vector.broadcast %cst_54 : f32 to vector<2x96xf32>
    %128 = arith.addf %127, %126 : vector<2x96xf32>
    %129 = arith.divf %127, %128 : vector<2x96xf32>
    %130 = vector.extract_strided_slice %123 {offsets = [0, 96], sizes = [2, 32], strides = [1, 1]} : vector<2x128xf32> to vector<2x32xf32>
    %131 = math.tanh %130 : vector<2x32xf32>
    %132 = vector.extract_strided_slice %129 {offsets = [0, 32], sizes = [2, 32], strides = [1, 1]} : vector<2x96xf32> to vector<2x32xf32>
    %133 = arith.mulf %132, %114 : vector<2x32xf32>
    %134 = vector.extract_strided_slice %129 {offsets = [0, 0], sizes = [2, 32], strides = [1, 1]} : vector<2x96xf32> to vector<2x32xf32>
    %135 = arith.mulf %134, %131 : vector<2x32xf32>
    %136 = arith.addf %133, %135 : vector<2x32xf32>
    %137 = vector.extract_strided_slice %129 {offsets = [0, 64], sizes = [2, 32], strides = [1, 1]} : vector<2x96xf32> to vector<2x32xf32>
    %138 = math.tanh %136 : vector<2x32xf32>
    %139 = arith.mulf %137, %138 : vector<2x32xf32>
    %140 = arith.addf %115, %139 : vector<2x32xf32>
    %141 = vector.extract_strided_slice %110 {offsets = [2, 0], sizes = [2, 128], strides = [1, 1]} : vector<32x128xf32> to vector<2x128xf32>
    %142 = vector.extract_strided_slice %110 {offsets = [28, 0], sizes = [2, 128], strides = [1, 1]} : vector<32x128xf32> to vector<2x128xf32>
    %143 = arith.subf %141, %142 : vector<2x128xf32>
    %144 = vector.broadcast %112 : vector<1x128xf32> to vector<2x128xf32>
    %145 = arith.mulf %143, %144 : vector<2x128xf32>
    %146 = arith.addf %142, %145 : vector<2x128xf32>
    %cst_55 = arith.constant dense<0.000000e+00> : vector<2x128xf32>
    %147 = tpu.matmul %139, %111, %cst_55 {dimension_numbers = #tpu.dot_dimension_numbers<[1], [0], [0], [1], [0, 0, 1, 1], [], []>} : vector<2x32xf32>, vector<32x128xf32>, vector<2x128xf32> -> vector<2x128xf32>
    %148 = arith.addf %146, %147 : vector<2x128xf32>
    %149 = vector.extract_strided_slice %148 {offsets = [0, 0], sizes = [2, 96], strides = [1, 1]} : vector<2x128xf32> to vector<2x96xf32>
    %150 = arith.negf %149 : vector<2x96xf32>
    %151 = math.exp %150 : vector<2x96xf32>
    %cst_56 = arith.constant 1.000000e+00 : f32
    %152 = vector.broadcast %cst_56 : f32 to vector<2x96xf32>
    %153 = arith.addf %152, %151 : vector<2x96xf32>
    %154 = arith.divf %152, %153 : vector<2x96xf32>
    %155 = vector.extract_strided_slice %148 {offsets = [0, 96], sizes = [2, 32], strides = [1, 1]} : vector<2x128xf32> to vector<2x32xf32>
    %156 = math.tanh %155 : vector<2x32xf32>
    %157 = vector.extract_strided_slice %154 {offsets = [0, 32], sizes = [2, 32], strides = [1, 1]} : vector<2x96xf32> to vector<2x32xf32>
    %158 = arith.mulf %157, %136 : vector<2x32xf32>
    %159 = vector.extract_strided_slice %154 {offsets = [0, 0], sizes = [2, 32], strides = [1, 1]} : vector<2x96xf32> to vector<2x32xf32>
    %160 = arith.mulf %159, %156 : vector<2x32xf32>
    %161 = arith.addf %158, %160 : vector<2x32xf32>
    %162 = vector.extract_strided_slice %154 {offsets = [0, 64], sizes = [2, 32], strides = [1, 1]} : vector<2x96xf32> to vector<2x32xf32>
    %163 = math.tanh %161 : vector<2x32xf32>
    %164 = arith.mulf %162, %163 : vector<2x32xf32>
    %165 = arith.addf %140, %164 : vector<2x32xf32>
    %166 = vector.extract_strided_slice %110 {offsets = [4, 0], sizes = [2, 128], strides = [1, 1]} : vector<32x128xf32> to vector<2x128xf32>
    %167 = vector.extract_strided_slice %110 {offsets = [26, 0], sizes = [2, 128], strides = [1, 1]} : vector<32x128xf32> to vector<2x128xf32>
    %168 = arith.subf %166, %167 : vector<2x128xf32>
    %169 = vector.broadcast %112 : vector<1x128xf32> to vector<2x128xf32>
    %170 = arith.mulf %168, %169 : vector<2x128xf32>
    %171 = arith.addf %167, %170 : vector<2x128xf32>
    %cst_57 = arith.constant dense<0.000000e+00> : vector<2x128xf32>
    %172 = tpu.matmul %164, %111, %cst_57 {dimension_numbers = #tpu.dot_dimension_numbers<[1], [0], [0], [1], [0, 0, 1, 1], [], []>} : vector<2x32xf32>, vector<32x128xf32>, vector<2x128xf32> -> vector<2x128xf32>
    %173 = arith.addf %171, %172 : vector<2x128xf32>
    %174 = vector.extract_strided_slice %173 {offsets = [0, 0], sizes = [2, 96], strides = [1, 1]} : vector<2x128xf32> to vector<2x96xf32>
    %175 = arith.negf %174 : vector<2x96xf32>
    %176 = math.exp %175 : vector<2x96xf32>
    %cst_58 = arith.constant 1.000000e+00 : f32
    %177 = vector.broadcast %cst_58 : f32 to vector<2x96xf32>
    %178 = arith.addf %177, %176 : vector<2x96xf32>
    %179 = arith.divf %177, %178 : vector<2x96xf32>
    %180 = vector.extract_strided_slice %173 {offsets = [0, 96], sizes = [2, 32], strides = [1, 1]} : vector<2x128xf32> to vector<2x32xf32>
    %181 = math.tanh %180 : vector<2x32xf32>
    %182 = vector.extract_strided_slice %179 {offsets = [0, 32], sizes = [2, 32], strides = [1, 1]} : vector<2x96xf32> to vector<2x32xf32>
    %183 = arith.mulf %182, %161 : vector<2x32xf32>
    %184 = vector.extract_strided_slice %179 {offsets = [0, 0], sizes = [2, 32], strides = [1, 1]} : vector<2x96xf32> to vector<2x32xf32>
    %185 = arith.mulf %184, %181 : vector<2x32xf32>
    %186 = arith.addf %183, %185 : vector<2x32xf32>
    %187 = vector.extract_strided_slice %179 {offsets = [0, 64], sizes = [2, 32], strides = [1, 1]} : vector<2x96xf32> to vector<2x32xf32>
    %188 = math.tanh %186 : vector<2x32xf32>
    %189 = arith.mulf %187, %188 : vector<2x32xf32>
    %190 = arith.addf %165, %189 : vector<2x32xf32>
    %191 = vector.extract_strided_slice %110 {offsets = [6, 0], sizes = [2, 128], strides = [1, 1]} : vector<32x128xf32> to vector<2x128xf32>
    %192 = vector.extract_strided_slice %110 {offsets = [24, 0], sizes = [2, 128], strides = [1, 1]} : vector<32x128xf32> to vector<2x128xf32>
    %193 = arith.subf %191, %192 : vector<2x128xf32>
    %194 = vector.broadcast %112 : vector<1x128xf32> to vector<2x128xf32>
    %195 = arith.mulf %193, %194 : vector<2x128xf32>
    %196 = arith.addf %192, %195 : vector<2x128xf32>
    %cst_59 = arith.constant dense<0.000000e+00> : vector<2x128xf32>
    %197 = tpu.matmul %189, %111, %cst_59 {dimension_numbers = #tpu.dot_dimension_numbers<[1], [0], [0], [1], [0, 0, 1, 1], [], []>} : vector<2x32xf32>, vector<32x128xf32>, vector<2x128xf32> -> vector<2x128xf32>
    %198 = arith.addf %196, %197 : vector<2x128xf32>
    %199 = vector.extract_strided_slice %198 {offsets = [0, 0], sizes = [2, 96], strides = [1, 1]} : vector<2x128xf32> to vector<2x96xf32>
    %200 = arith.negf %199 : vector<2x96xf32>
    %201 = math.exp %200 : vector<2x96xf32>
    %cst_60 = arith.constant 1.000000e+00 : f32
    %202 = vector.broadcast %cst_60 : f32 to vector<2x96xf32>
    %203 = arith.addf %202, %201 : vector<2x96xf32>
    %204 = arith.divf %202, %203 : vector<2x96xf32>
    %205 = vector.extract_strided_slice %198 {offsets = [0, 96], sizes = [2, 32], strides = [1, 1]} : vector<2x128xf32> to vector<2x32xf32>
    %206 = math.tanh %205 : vector<2x32xf32>
    %207 = vector.extract_strided_slice %204 {offsets = [0, 32], sizes = [2, 32], strides = [1, 1]} : vector<2x96xf32> to vector<2x32xf32>
    %208 = arith.mulf %207, %186 : vector<2x32xf32>
    %209 = vector.extract_strided_slice %204 {offsets = [0, 0], sizes = [2, 32], strides = [1, 1]} : vector<2x96xf32> to vector<2x32xf32>
    %210 = arith.mulf %209, %206 : vector<2x32xf32>
    %211 = arith.addf %208, %210 : vector<2x32xf32>
    %212 = vector.extract_strided_slice %204 {offsets = [0, 64], sizes = [2, 32], strides = [1, 1]} : vector<2x96xf32> to vector<2x32xf32>
    %213 = math.tanh %211 : vector<2x32xf32>
    %214 = arith.mulf %212, %213 : vector<2x32xf32>
    %215 = arith.addf %190, %214 : vector<2x32xf32>
    %216 = vector.extract_strided_slice %110 {offsets = [8, 0], sizes = [2, 128], strides = [1, 1]} : vector<32x128xf32> to vector<2x128xf32>
    %217 = vector.extract_strided_slice %110 {offsets = [22, 0], sizes = [2, 128], strides = [1, 1]} : vector<32x128xf32> to vector<2x128xf32>
    %218 = arith.subf %216, %217 : vector<2x128xf32>
    %219 = vector.broadcast %112 : vector<1x128xf32> to vector<2x128xf32>
    %220 = arith.mulf %218, %219 : vector<2x128xf32>
    %221 = arith.addf %217, %220 : vector<2x128xf32>
    %cst_61 = arith.constant dense<0.000000e+00> : vector<2x128xf32>
    %222 = tpu.matmul %214, %111, %cst_61 {dimension_numbers = #tpu.dot_dimension_numbers<[1], [0], [0], [1], [0, 0, 1, 1], [], []>} : vector<2x32xf32>, vector<32x128xf32>, vector<2x128xf32> -> vector<2x128xf32>
    %223 = arith.addf %221, %222 : vector<2x128xf32>
    %224 = vector.extract_strided_slice %223 {offsets = [0, 0], sizes = [2, 96], strides = [1, 1]} : vector<2x128xf32> to vector<2x96xf32>
    %225 = arith.negf %224 : vector<2x96xf32>
    %226 = math.exp %225 : vector<2x96xf32>
    %cst_62 = arith.constant 1.000000e+00 : f32
    %227 = vector.broadcast %cst_62 : f32 to vector<2x96xf32>
    %228 = arith.addf %227, %226 : vector<2x96xf32>
    %229 = arith.divf %227, %228 : vector<2x96xf32>
    %230 = vector.extract_strided_slice %223 {offsets = [0, 96], sizes = [2, 32], strides = [1, 1]} : vector<2x128xf32> to vector<2x32xf32>
    %231 = math.tanh %230 : vector<2x32xf32>
    %232 = vector.extract_strided_slice %229 {offsets = [0, 32], sizes = [2, 32], strides = [1, 1]} : vector<2x96xf32> to vector<2x32xf32>
    %233 = arith.mulf %232, %211 : vector<2x32xf32>
    %234 = vector.extract_strided_slice %229 {offsets = [0, 0], sizes = [2, 32], strides = [1, 1]} : vector<2x96xf32> to vector<2x32xf32>
    %235 = arith.mulf %234, %231 : vector<2x32xf32>
    %236 = arith.addf %233, %235 : vector<2x32xf32>
    %237 = vector.extract_strided_slice %229 {offsets = [0, 64], sizes = [2, 32], strides = [1, 1]} : vector<2x96xf32> to vector<2x32xf32>
    %238 = math.tanh %236 : vector<2x32xf32>
    %239 = arith.mulf %237, %238 : vector<2x32xf32>
    %240 = arith.addf %215, %239 : vector<2x32xf32>
    %241 = vector.extract_strided_slice %110 {offsets = [10, 0], sizes = [2, 128], strides = [1, 1]} : vector<32x128xf32> to vector<2x128xf32>
    %242 = vector.extract_strided_slice %110 {offsets = [20, 0], sizes = [2, 128], strides = [1, 1]} : vector<32x128xf32> to vector<2x128xf32>
    %243 = arith.subf %241, %242 : vector<2x128xf32>
    %244 = vector.broadcast %112 : vector<1x128xf32> to vector<2x128xf32>
    %245 = arith.mulf %243, %244 : vector<2x128xf32>
    %246 = arith.addf %242, %245 : vector<2x128xf32>
    %cst_63 = arith.constant dense<0.000000e+00> : vector<2x128xf32>
    %247 = tpu.matmul %239, %111, %cst_63 {dimension_numbers = #tpu.dot_dimension_numbers<[1], [0], [0], [1], [0, 0, 1, 1], [], []>} : vector<2x32xf32>, vector<32x128xf32>, vector<2x128xf32> -> vector<2x128xf32>
    %248 = arith.addf %246, %247 : vector<2x128xf32>
    %249 = vector.extract_strided_slice %248 {offsets = [0, 0], sizes = [2, 96], strides = [1, 1]} : vector<2x128xf32> to vector<2x96xf32>
    %250 = arith.negf %249 : vector<2x96xf32>
    %251 = math.exp %250 : vector<2x96xf32>
    %cst_64 = arith.constant 1.000000e+00 : f32
    %252 = vector.broadcast %cst_64 : f32 to vector<2x96xf32>
    %253 = arith.addf %252, %251 : vector<2x96xf32>
    %254 = arith.divf %252, %253 : vector<2x96xf32>
    %255 = vector.extract_strided_slice %248 {offsets = [0, 96], sizes = [2, 32], strides = [1, 1]} : vector<2x128xf32> to vector<2x32xf32>
    %256 = math.tanh %255 : vector<2x32xf32>
    %257 = vector.extract_strided_slice %254 {offsets = [0, 32], sizes = [2, 32], strides = [1, 1]} : vector<2x96xf32> to vector<2x32xf32>
    %258 = arith.mulf %257, %236 : vector<2x32xf32>
    %259 = vector.extract_strided_slice %254 {offsets = [0, 0], sizes = [2, 32], strides = [1, 1]} : vector<2x96xf32> to vector<2x32xf32>
    %260 = arith.mulf %259, %256 : vector<2x32xf32>
    %261 = arith.addf %258, %260 : vector<2x32xf32>
    %262 = vector.extract_strided_slice %254 {offsets = [0, 64], sizes = [2, 32], strides = [1, 1]} : vector<2x96xf32> to vector<2x32xf32>
    %263 = math.tanh %261 : vector<2x32xf32>
    %264 = arith.mulf %262, %263 : vector<2x32xf32>
    %265 = arith.addf %240, %264 : vector<2x32xf32>
    %266 = vector.extract_strided_slice %110 {offsets = [12, 0], sizes = [2, 128], strides = [1, 1]} : vector<32x128xf32> to vector<2x128xf32>
    %267 = vector.extract_strided_slice %110 {offsets = [18, 0], sizes = [2, 128], strides = [1, 1]} : vector<32x128xf32> to vector<2x128xf32>
    %268 = arith.subf %266, %267 : vector<2x128xf32>
    %269 = vector.broadcast %112 : vector<1x128xf32> to vector<2x128xf32>
    %270 = arith.mulf %268, %269 : vector<2x128xf32>
    %271 = arith.addf %267, %270 : vector<2x128xf32>
    %cst_65 = arith.constant dense<0.000000e+00> : vector<2x128xf32>
    %272 = tpu.matmul %264, %111, %cst_65 {dimension_numbers = #tpu.dot_dimension_numbers<[1], [0], [0], [1], [0, 0, 1, 1], [], []>} : vector<2x32xf32>, vector<32x128xf32>, vector<2x128xf32> -> vector<2x128xf32>
    %273 = arith.addf %271, %272 : vector<2x128xf32>
    %274 = vector.extract_strided_slice %273 {offsets = [0, 0], sizes = [2, 96], strides = [1, 1]} : vector<2x128xf32> to vector<2x96xf32>
    %275 = arith.negf %274 : vector<2x96xf32>
    %276 = math.exp %275 : vector<2x96xf32>
    %cst_66 = arith.constant 1.000000e+00 : f32
    %277 = vector.broadcast %cst_66 : f32 to vector<2x96xf32>
    %278 = arith.addf %277, %276 : vector<2x96xf32>
    %279 = arith.divf %277, %278 : vector<2x96xf32>
    %280 = vector.extract_strided_slice %273 {offsets = [0, 96], sizes = [2, 32], strides = [1, 1]} : vector<2x128xf32> to vector<2x32xf32>
    %281 = math.tanh %280 : vector<2x32xf32>
    %282 = vector.extract_strided_slice %279 {offsets = [0, 32], sizes = [2, 32], strides = [1, 1]} : vector<2x96xf32> to vector<2x32xf32>
    %283 = arith.mulf %282, %261 : vector<2x32xf32>
    %284 = vector.extract_strided_slice %279 {offsets = [0, 0], sizes = [2, 32], strides = [1, 1]} : vector<2x96xf32> to vector<2x32xf32>
    %285 = arith.mulf %284, %281 : vector<2x32xf32>
    %286 = arith.addf %283, %285 : vector<2x32xf32>
    %287 = vector.extract_strided_slice %279 {offsets = [0, 64], sizes = [2, 32], strides = [1, 1]} : vector<2x96xf32> to vector<2x32xf32>
    %288 = math.tanh %286 : vector<2x32xf32>
    %289 = arith.mulf %287, %288 : vector<2x32xf32>
    %290 = arith.addf %265, %289 : vector<2x32xf32>
    %291 = vector.extract_strided_slice %110 {offsets = [14, 0], sizes = [2, 128], strides = [1, 1]} : vector<32x128xf32> to vector<2x128xf32>
    %292 = vector.extract_strided_slice %110 {offsets = [16, 0], sizes = [2, 128], strides = [1, 1]} : vector<32x128xf32> to vector<2x128xf32>
    %293 = arith.subf %291, %292 : vector<2x128xf32>
    %294 = vector.broadcast %112 : vector<1x128xf32> to vector<2x128xf32>
    %295 = arith.mulf %293, %294 : vector<2x128xf32>
    %296 = arith.addf %292, %295 : vector<2x128xf32>
    %cst_67 = arith.constant dense<0.000000e+00> : vector<2x128xf32>
    %297 = tpu.matmul %289, %111, %cst_67 {dimension_numbers = #tpu.dot_dimension_numbers<[1], [0], [0], [1], [0, 0, 1, 1], [], []>} : vector<2x32xf32>, vector<32x128xf32>, vector<2x128xf32> -> vector<2x128xf32>
    %298 = arith.addf %296, %297 : vector<2x128xf32>
    %299 = vector.extract_strided_slice %298 {offsets = [0, 0], sizes = [2, 96], strides = [1, 1]} : vector<2x128xf32> to vector<2x96xf32>
    %300 = arith.negf %299 : vector<2x96xf32>
    %301 = math.exp %300 : vector<2x96xf32>
    %cst_68 = arith.constant 1.000000e+00 : f32
    %302 = vector.broadcast %cst_68 : f32 to vector<2x96xf32>
    %303 = arith.addf %302, %301 : vector<2x96xf32>
    %304 = arith.divf %302, %303 : vector<2x96xf32>
    %305 = vector.extract_strided_slice %298 {offsets = [0, 96], sizes = [2, 32], strides = [1, 1]} : vector<2x128xf32> to vector<2x32xf32>
    %306 = math.tanh %305 : vector<2x32xf32>
    %307 = vector.extract_strided_slice %304 {offsets = [0, 32], sizes = [2, 32], strides = [1, 1]} : vector<2x96xf32> to vector<2x32xf32>
    %308 = arith.mulf %307, %286 : vector<2x32xf32>
    %309 = vector.extract_strided_slice %304 {offsets = [0, 0], sizes = [2, 32], strides = [1, 1]} : vector<2x96xf32> to vector<2x32xf32>
    %310 = arith.mulf %309, %306 : vector<2x32xf32>
    %311 = arith.addf %308, %310 : vector<2x32xf32>
    %312 = vector.extract_strided_slice %304 {offsets = [0, 64], sizes = [2, 32], strides = [1, 1]} : vector<2x96xf32> to vector<2x32xf32>
    %313 = math.tanh %311 : vector<2x32xf32>
    %314 = arith.mulf %312, %313 : vector<2x32xf32>
    %315 = arith.addf %290, %314 : vector<2x32xf32>
    %316 = vector.extract_strided_slice %110 {offsets = [16, 0], sizes = [2, 128], strides = [1, 1]} : vector<32x128xf32> to vector<2x128xf32>
    %317 = vector.extract_strided_slice %110 {offsets = [14, 0], sizes = [2, 128], strides = [1, 1]} : vector<32x128xf32> to vector<2x128xf32>
    %318 = arith.subf %316, %317 : vector<2x128xf32>
    %319 = vector.broadcast %112 : vector<1x128xf32> to vector<2x128xf32>
    %320 = arith.mulf %318, %319 : vector<2x128xf32>
    %321 = arith.addf %317, %320 : vector<2x128xf32>
    %cst_69 = arith.constant dense<0.000000e+00> : vector<2x128xf32>
    %322 = tpu.matmul %314, %111, %cst_69 {dimension_numbers = #tpu.dot_dimension_numbers<[1], [0], [0], [1], [0, 0, 1, 1], [], []>} : vector<2x32xf32>, vector<32x128xf32>, vector<2x128xf32> -> vector<2x128xf32>
    %323 = arith.addf %321, %322 : vector<2x128xf32>
    %324 = vector.extract_strided_slice %323 {offsets = [0, 0], sizes = [2, 96], strides = [1, 1]} : vector<2x128xf32> to vector<2x96xf32>
    %325 = arith.negf %324 : vector<2x96xf32>
    %326 = math.exp %325 : vector<2x96xf32>
    %cst_70 = arith.constant 1.000000e+00 : f32
    %327 = vector.broadcast %cst_70 : f32 to vector<2x96xf32>
    %328 = arith.addf %327, %326 : vector<2x96xf32>
    %329 = arith.divf %327, %328 : vector<2x96xf32>
    %330 = vector.extract_strided_slice %323 {offsets = [0, 96], sizes = [2, 32], strides = [1, 1]} : vector<2x128xf32> to vector<2x32xf32>
    %331 = math.tanh %330 : vector<2x32xf32>
    %332 = vector.extract_strided_slice %329 {offsets = [0, 32], sizes = [2, 32], strides = [1, 1]} : vector<2x96xf32> to vector<2x32xf32>
    %333 = arith.mulf %332, %311 : vector<2x32xf32>
    %334 = vector.extract_strided_slice %329 {offsets = [0, 0], sizes = [2, 32], strides = [1, 1]} : vector<2x96xf32> to vector<2x32xf32>
    %335 = arith.mulf %334, %331 : vector<2x32xf32>
    %336 = arith.addf %333, %335 : vector<2x32xf32>
    %337 = vector.extract_strided_slice %329 {offsets = [0, 64], sizes = [2, 32], strides = [1, 1]} : vector<2x96xf32> to vector<2x32xf32>
    %338 = math.tanh %336 : vector<2x32xf32>
    %339 = arith.mulf %337, %338 : vector<2x32xf32>
    %340 = arith.addf %315, %339 : vector<2x32xf32>
    %341 = vector.extract_strided_slice %110 {offsets = [18, 0], sizes = [2, 128], strides = [1, 1]} : vector<32x128xf32> to vector<2x128xf32>
    %342 = vector.extract_strided_slice %110 {offsets = [12, 0], sizes = [2, 128], strides = [1, 1]} : vector<32x128xf32> to vector<2x128xf32>
    %343 = arith.subf %341, %342 : vector<2x128xf32>
    %344 = vector.broadcast %112 : vector<1x128xf32> to vector<2x128xf32>
    %345 = arith.mulf %343, %344 : vector<2x128xf32>
    %346 = arith.addf %342, %345 : vector<2x128xf32>
    %cst_71 = arith.constant dense<0.000000e+00> : vector<2x128xf32>
    %347 = tpu.matmul %339, %111, %cst_71 {dimension_numbers = #tpu.dot_dimension_numbers<[1], [0], [0], [1], [0, 0, 1, 1], [], []>} : vector<2x32xf32>, vector<32x128xf32>, vector<2x128xf32> -> vector<2x128xf32>
    %348 = arith.addf %346, %347 : vector<2x128xf32>
    %349 = vector.extract_strided_slice %348 {offsets = [0, 0], sizes = [2, 96], strides = [1, 1]} : vector<2x128xf32> to vector<2x96xf32>
    %350 = arith.negf %349 : vector<2x96xf32>
    %351 = math.exp %350 : vector<2x96xf32>
    %cst_72 = arith.constant 1.000000e+00 : f32
    %352 = vector.broadcast %cst_72 : f32 to vector<2x96xf32>
    %353 = arith.addf %352, %351 : vector<2x96xf32>
    %354 = arith.divf %352, %353 : vector<2x96xf32>
    %355 = vector.extract_strided_slice %348 {offsets = [0, 96], sizes = [2, 32], strides = [1, 1]} : vector<2x128xf32> to vector<2x32xf32>
    %356 = math.tanh %355 : vector<2x32xf32>
    %357 = vector.extract_strided_slice %354 {offsets = [0, 32], sizes = [2, 32], strides = [1, 1]} : vector<2x96xf32> to vector<2x32xf32>
    %358 = arith.mulf %357, %336 : vector<2x32xf32>
    %359 = vector.extract_strided_slice %354 {offsets = [0, 0], sizes = [2, 32], strides = [1, 1]} : vector<2x96xf32> to vector<2x32xf32>
    %360 = arith.mulf %359, %356 : vector<2x32xf32>
    %361 = arith.addf %358, %360 : vector<2x32xf32>
    %362 = vector.extract_strided_slice %354 {offsets = [0, 64], sizes = [2, 32], strides = [1, 1]} : vector<2x96xf32> to vector<2x32xf32>
    %363 = math.tanh %361 : vector<2x32xf32>
    %364 = arith.mulf %362, %363 : vector<2x32xf32>
    %365 = arith.addf %340, %364 : vector<2x32xf32>
    %366 = vector.extract_strided_slice %110 {offsets = [20, 0], sizes = [2, 128], strides = [1, 1]} : vector<32x128xf32> to vector<2x128xf32>
    %367 = vector.extract_strided_slice %110 {offsets = [10, 0], sizes = [2, 128], strides = [1, 1]} : vector<32x128xf32> to vector<2x128xf32>
    %368 = arith.subf %366, %367 : vector<2x128xf32>
    %369 = vector.broadcast %112 : vector<1x128xf32> to vector<2x128xf32>
    %370 = arith.mulf %368, %369 : vector<2x128xf32>
    %371 = arith.addf %367, %370 : vector<2x128xf32>
    %cst_73 = arith.constant dense<0.000000e+00> : vector<2x128xf32>
    %372 = tpu.matmul %364, %111, %cst_73 {dimension_numbers = #tpu.dot_dimension_numbers<[1], [0], [0], [1], [0, 0, 1, 1], [], []>} : vector<2x32xf32>, vector<32x128xf32>, vector<2x128xf32> -> vector<2x128xf32>
    %373 = arith.addf %371, %372 : vector<2x128xf32>
    %374 = vector.extract_strided_slice %373 {offsets = [0, 0], sizes = [2, 96], strides = [1, 1]} : vector<2x128xf32> to vector<2x96xf32>
    %375 = arith.negf %374 : vector<2x96xf32>
    %376 = math.exp %375 : vector<2x96xf32>
    %cst_74 = arith.constant 1.000000e+00 : f32
    %377 = vector.broadcast %cst_74 : f32 to vector<2x96xf32>
    %378 = arith.addf %377, %376 : vector<2x96xf32>
    %379 = arith.divf %377, %378 : vector<2x96xf32>
    %380 = vector.extract_strided_slice %373 {offsets = [0, 96], sizes = [2, 32], strides = [1, 1]} : vector<2x128xf32> to vector<2x32xf32>
    %381 = math.tanh %380 : vector<2x32xf32>
    %382 = vector.extract_strided_slice %379 {offsets = [0, 32], sizes = [2, 32], strides = [1, 1]} : vector<2x96xf32> to vector<2x32xf32>
    %383 = arith.mulf %382, %361 : vector<2x32xf32>
    %384 = vector.extract_strided_slice %379 {offsets = [0, 0], sizes = [2, 32], strides = [1, 1]} : vector<2x96xf32> to vector<2x32xf32>
    %385 = arith.mulf %384, %381 : vector<2x32xf32>
    %386 = arith.addf %383, %385 : vector<2x32xf32>
    %387 = vector.extract_strided_slice %379 {offsets = [0, 64], sizes = [2, 32], strides = [1, 1]} : vector<2x96xf32> to vector<2x32xf32>
    %388 = math.tanh %386 : vector<2x32xf32>
    %389 = arith.mulf %387, %388 : vector<2x32xf32>
    %390 = arith.addf %365, %389 : vector<2x32xf32>
    %391 = vector.extract_strided_slice %110 {offsets = [22, 0], sizes = [2, 128], strides = [1, 1]} : vector<32x128xf32> to vector<2x128xf32>
    %392 = vector.extract_strided_slice %110 {offsets = [8, 0], sizes = [2, 128], strides = [1, 1]} : vector<32x128xf32> to vector<2x128xf32>
    %393 = arith.subf %391, %392 : vector<2x128xf32>
    %394 = vector.broadcast %112 : vector<1x128xf32> to vector<2x128xf32>
    %395 = arith.mulf %393, %394 : vector<2x128xf32>
    %396 = arith.addf %392, %395 : vector<2x128xf32>
    %cst_75 = arith.constant dense<0.000000e+00> : vector<2x128xf32>
    %397 = tpu.matmul %389, %111, %cst_75 {dimension_numbers = #tpu.dot_dimension_numbers<[1], [0], [0], [1], [0, 0, 1, 1], [], []>} : vector<2x32xf32>, vector<32x128xf32>, vector<2x128xf32> -> vector<2x128xf32>
    %398 = arith.addf %396, %397 : vector<2x128xf32>
    %399 = vector.extract_strided_slice %398 {offsets = [0, 0], sizes = [2, 96], strides = [1, 1]} : vector<2x128xf32> to vector<2x96xf32>
    %400 = arith.negf %399 : vector<2x96xf32>
    %401 = math.exp %400 : vector<2x96xf32>
    %cst_76 = arith.constant 1.000000e+00 : f32
    %402 = vector.broadcast %cst_76 : f32 to vector<2x96xf32>
    %403 = arith.addf %402, %401 : vector<2x96xf32>
    %404 = arith.divf %402, %403 : vector<2x96xf32>
    %405 = vector.extract_strided_slice %398 {offsets = [0, 96], sizes = [2, 32], strides = [1, 1]} : vector<2x128xf32> to vector<2x32xf32>
    %406 = math.tanh %405 : vector<2x32xf32>
    %407 = vector.extract_strided_slice %404 {offsets = [0, 32], sizes = [2, 32], strides = [1, 1]} : vector<2x96xf32> to vector<2x32xf32>
    %408 = arith.mulf %407, %386 : vector<2x32xf32>
    %409 = vector.extract_strided_slice %404 {offsets = [0, 0], sizes = [2, 32], strides = [1, 1]} : vector<2x96xf32> to vector<2x32xf32>
    %410 = arith.mulf %409, %406 : vector<2x32xf32>
    %411 = arith.addf %408, %410 : vector<2x32xf32>
    %412 = vector.extract_strided_slice %404 {offsets = [0, 64], sizes = [2, 32], strides = [1, 1]} : vector<2x96xf32> to vector<2x32xf32>
    %413 = math.tanh %411 : vector<2x32xf32>
    %414 = arith.mulf %412, %413 : vector<2x32xf32>
    %415 = arith.addf %390, %414 : vector<2x32xf32>
    %416 = vector.extract_strided_slice %110 {offsets = [24, 0], sizes = [2, 128], strides = [1, 1]} : vector<32x128xf32> to vector<2x128xf32>
    %417 = vector.extract_strided_slice %110 {offsets = [6, 0], sizes = [2, 128], strides = [1, 1]} : vector<32x128xf32> to vector<2x128xf32>
    %418 = arith.subf %416, %417 : vector<2x128xf32>
    %419 = vector.broadcast %112 : vector<1x128xf32> to vector<2x128xf32>
    %420 = arith.mulf %418, %419 : vector<2x128xf32>
    %421 = arith.addf %417, %420 : vector<2x128xf32>
    %cst_77 = arith.constant dense<0.000000e+00> : vector<2x128xf32>
    %422 = tpu.matmul %414, %111, %cst_77 {dimension_numbers = #tpu.dot_dimension_numbers<[1], [0], [0], [1], [0, 0, 1, 1], [], []>} : vector<2x32xf32>, vector<32x128xf32>, vector<2x128xf32> -> vector<2x128xf32>
    %423 = arith.addf %421, %422 : vector<2x128xf32>
    %424 = vector.extract_strided_slice %423 {offsets = [0, 0], sizes = [2, 96], strides = [1, 1]} : vector<2x128xf32> to vector<2x96xf32>
    %425 = arith.negf %424 : vector<2x96xf32>
    %426 = math.exp %425 : vector<2x96xf32>
    %cst_78 = arith.constant 1.000000e+00 : f32
    %427 = vector.broadcast %cst_78 : f32 to vector<2x96xf32>
    %428 = arith.addf %427, %426 : vector<2x96xf32>
    %429 = arith.divf %427, %428 : vector<2x96xf32>
    %430 = vector.extract_strided_slice %423 {offsets = [0, 96], sizes = [2, 32], strides = [1, 1]} : vector<2x128xf32> to vector<2x32xf32>
    %431 = math.tanh %430 : vector<2x32xf32>
    %432 = vector.extract_strided_slice %429 {offsets = [0, 32], sizes = [2, 32], strides = [1, 1]} : vector<2x96xf32> to vector<2x32xf32>
    %433 = arith.mulf %432, %411 : vector<2x32xf32>
    %434 = vector.extract_strided_slice %429 {offsets = [0, 0], sizes = [2, 32], strides = [1, 1]} : vector<2x96xf32> to vector<2x32xf32>
    %435 = arith.mulf %434, %431 : vector<2x32xf32>
    %436 = arith.addf %433, %435 : vector<2x32xf32>
    %437 = vector.extract_strided_slice %429 {offsets = [0, 64], sizes = [2, 32], strides = [1, 1]} : vector<2x96xf32> to vector<2x32xf32>
    %438 = math.tanh %436 : vector<2x32xf32>
    %439 = arith.mulf %437, %438 : vector<2x32xf32>
    %440 = arith.addf %415, %439 : vector<2x32xf32>
    %441 = vector.extract_strided_slice %110 {offsets = [26, 0], sizes = [2, 128], strides = [1, 1]} : vector<32x128xf32> to vector<2x128xf32>
    %442 = vector.extract_strided_slice %110 {offsets = [4, 0], sizes = [2, 128], strides = [1, 1]} : vector<32x128xf32> to vector<2x128xf32>
    %443 = arith.subf %441, %442 : vector<2x128xf32>
    %444 = vector.broadcast %112 : vector<1x128xf32> to vector<2x128xf32>
    %445 = arith.mulf %443, %444 : vector<2x128xf32>
    %446 = arith.addf %442, %445 : vector<2x128xf32>
    %cst_79 = arith.constant dense<0.000000e+00> : vector<2x128xf32>
    %447 = tpu.matmul %439, %111, %cst_79 {dimension_numbers = #tpu.dot_dimension_numbers<[1], [0], [0], [1], [0, 0, 1, 1], [], []>} : vector<2x32xf32>, vector<32x128xf32>, vector<2x128xf32> -> vector<2x128xf32>
    %448 = arith.addf %446, %447 : vector<2x128xf32>
    %449 = vector.extract_strided_slice %448 {offsets = [0, 0], sizes = [2, 96], strides = [1, 1]} : vector<2x128xf32> to vector<2x96xf32>
    %450 = arith.negf %449 : vector<2x96xf32>
    %451 = math.exp %450 : vector<2x96xf32>
    %cst_80 = arith.constant 1.000000e+00 : f32
    %452 = vector.broadcast %cst_80 : f32 to vector<2x96xf32>
    %453 = arith.addf %452, %451 : vector<2x96xf32>
    %454 = arith.divf %452, %453 : vector<2x96xf32>
    %455 = vector.extract_strided_slice %448 {offsets = [0, 96], sizes = [2, 32], strides = [1, 1]} : vector<2x128xf32> to vector<2x32xf32>
    %456 = math.tanh %455 : vector<2x32xf32>
    %457 = vector.extract_strided_slice %454 {offsets = [0, 32], sizes = [2, 32], strides = [1, 1]} : vector<2x96xf32> to vector<2x32xf32>
    %458 = arith.mulf %457, %436 : vector<2x32xf32>
    %459 = vector.extract_strided_slice %454 {offsets = [0, 0], sizes = [2, 32], strides = [1, 1]} : vector<2x96xf32> to vector<2x32xf32>
    %460 = arith.mulf %459, %456 : vector<2x32xf32>
    %461 = arith.addf %458, %460 : vector<2x32xf32>
    %462 = vector.extract_strided_slice %454 {offsets = [0, 64], sizes = [2, 32], strides = [1, 1]} : vector<2x96xf32> to vector<2x32xf32>
    %463 = math.tanh %461 : vector<2x32xf32>
    %464 = arith.mulf %462, %463 : vector<2x32xf32>
    %465 = arith.addf %440, %464 : vector<2x32xf32>
    %466 = vector.extract_strided_slice %110 {offsets = [28, 0], sizes = [2, 128], strides = [1, 1]} : vector<32x128xf32> to vector<2x128xf32>
    %467 = vector.extract_strided_slice %110 {offsets = [2, 0], sizes = [2, 128], strides = [1, 1]} : vector<32x128xf32> to vector<2x128xf32>
    %468 = arith.subf %466, %467 : vector<2x128xf32>
    %469 = vector.broadcast %112 : vector<1x128xf32> to vector<2x128xf32>
    %470 = arith.mulf %468, %469 : vector<2x128xf32>
    %471 = arith.addf %467, %470 : vector<2x128xf32>
    %cst_81 = arith.constant dense<0.000000e+00> : vector<2x128xf32>
    %472 = tpu.matmul %464, %111, %cst_81 {dimension_numbers = #tpu.dot_dimension_numbers<[1], [0], [0], [1], [0, 0, 1, 1], [], []>} : vector<2x32xf32>, vector<32x128xf32>, vector<2x128xf32> -> vector<2x128xf32>
    %473 = arith.addf %471, %472 : vector<2x128xf32>
    %474 = vector.extract_strided_slice %473 {offsets = [0, 0], sizes = [2, 96], strides = [1, 1]} : vector<2x128xf32> to vector<2x96xf32>
    %475 = arith.negf %474 : vector<2x96xf32>
    %476 = math.exp %475 : vector<2x96xf32>
    %cst_82 = arith.constant 1.000000e+00 : f32
    %477 = vector.broadcast %cst_82 : f32 to vector<2x96xf32>
    %478 = arith.addf %477, %476 : vector<2x96xf32>
    %479 = arith.divf %477, %478 : vector<2x96xf32>
    %480 = vector.extract_strided_slice %473 {offsets = [0, 96], sizes = [2, 32], strides = [1, 1]} : vector<2x128xf32> to vector<2x32xf32>
    %481 = math.tanh %480 : vector<2x32xf32>
    %482 = vector.extract_strided_slice %479 {offsets = [0, 32], sizes = [2, 32], strides = [1, 1]} : vector<2x96xf32> to vector<2x32xf32>
    %483 = arith.mulf %482, %461 : vector<2x32xf32>
    %484 = vector.extract_strided_slice %479 {offsets = [0, 0], sizes = [2, 32], strides = [1, 1]} : vector<2x96xf32> to vector<2x32xf32>
    %485 = arith.mulf %484, %481 : vector<2x32xf32>
    %486 = arith.addf %483, %485 : vector<2x32xf32>
    %487 = vector.extract_strided_slice %479 {offsets = [0, 64], sizes = [2, 32], strides = [1, 1]} : vector<2x96xf32> to vector<2x32xf32>
    %488 = math.tanh %486 : vector<2x32xf32>
    %489 = arith.mulf %487, %488 : vector<2x32xf32>
    %490 = arith.addf %465, %489 : vector<2x32xf32>
    %491 = vector.extract_strided_slice %110 {offsets = [30, 0], sizes = [2, 128], strides = [1, 1]} : vector<32x128xf32> to vector<2x128xf32>
    %492 = vector.extract_strided_slice %110 {offsets = [0, 0], sizes = [2, 128], strides = [1, 1]} : vector<32x128xf32> to vector<2x128xf32>
    %493 = arith.subf %491, %492 : vector<2x128xf32>
    %494 = vector.broadcast %112 : vector<1x128xf32> to vector<2x128xf32>
    %495 = arith.mulf %493, %494 : vector<2x128xf32>
    %496 = arith.addf %492, %495 : vector<2x128xf32>
    %cst_83 = arith.constant dense<0.000000e+00> : vector<2x128xf32>
    %497 = tpu.matmul %489, %111, %cst_83 {dimension_numbers = #tpu.dot_dimension_numbers<[1], [0], [0], [1], [0, 0, 1, 1], [], []>} : vector<2x32xf32>, vector<32x128xf32>, vector<2x128xf32> -> vector<2x128xf32>
    %498 = arith.addf %496, %497 : vector<2x128xf32>
    %499 = vector.extract_strided_slice %498 {offsets = [0, 0], sizes = [2, 96], strides = [1, 1]} : vector<2x128xf32> to vector<2x96xf32>
    %500 = arith.negf %499 : vector<2x96xf32>
    %501 = math.exp %500 : vector<2x96xf32>
    %cst_84 = arith.constant 1.000000e+00 : f32
    %502 = vector.broadcast %cst_84 : f32 to vector<2x96xf32>
    %503 = arith.addf %502, %501 : vector<2x96xf32>
    %504 = arith.divf %502, %503 : vector<2x96xf32>
    %505 = vector.extract_strided_slice %498 {offsets = [0, 96], sizes = [2, 32], strides = [1, 1]} : vector<2x128xf32> to vector<2x32xf32>
    %506 = math.tanh %505 : vector<2x32xf32>
    %507 = vector.extract_strided_slice %504 {offsets = [0, 32], sizes = [2, 32], strides = [1, 1]} : vector<2x96xf32> to vector<2x32xf32>
    %508 = arith.mulf %507, %486 : vector<2x32xf32>
    %509 = vector.extract_strided_slice %504 {offsets = [0, 0], sizes = [2, 32], strides = [1, 1]} : vector<2x96xf32> to vector<2x32xf32>
    %510 = arith.mulf %509, %506 : vector<2x32xf32>
    %511 = arith.addf %508, %510 : vector<2x32xf32>
    %512 = vector.extract_strided_slice %504 {offsets = [0, 64], sizes = [2, 32], strides = [1, 1]} : vector<2x96xf32> to vector<2x32xf32>
    %513 = math.tanh %511 : vector<2x32xf32>
    %514 = arith.mulf %512, %513 : vector<2x32xf32>
    %515 = arith.addf %490, %514 : vector<2x32xf32>
    %cst_85 = arith.constant 6.250000e-02 : f32
    %516 = vector.broadcast %cst_85 : f32 to vector<2x32xf32>
    %517 = arith.mulf %515, %516 : vector<2x32xf32>
    %c0_86 = arith.constant 0 : index
    %c0_87 = arith.constant 0 : index
    %518 = vector.load %arg14[%c0_86, %c0_87] : memref<32x4xf32, #tpu.memory_space<vmem>>, vector<32x4xf32>
    %cst_88 = arith.constant dense<0.000000e+00> : vector<2x4xf32>
    %519 = tpu.matmul %517, %518, %cst_88 {dimension_numbers = #tpu.dot_dimension_numbers<[1], [0], [0], [1], [0, 0, 1, 1], [], []>} : vector<2x32xf32>, vector<32x4xf32>, vector<2x4xf32> -> vector<2x4xf32>
    %c0_89 = arith.constant 0 : index
    %c0_90 = arith.constant 0 : index
    %520 = vector.load %arg15[%c0_89, %c0_90] : memref<1x4xf32, #tpu.memory_space<vmem>>, vector<1x4xf32>
    %521 = vector.broadcast %520 : vector<1x4xf32> to vector<2x4xf32>
    %522 = arith.addf %519, %521 : vector<2x4xf32>
    %c0_91 = arith.constant 0 : index
    %c0_92 = arith.constant 0 : index
    %523 = vector.load %arg16[%c0_91, %c0_92] : memref<2x4xf32, #tpu.memory_space<vmem>>, vector<2x4xf32>
    tpu.vector_store %arg16[%c0_91, %c0_92], %522 {strides = array<i32>} : memref<2x4xf32, #tpu.memory_space<vmem>>, vector<2x4xf32>,
    return
  }
  func.func @transform_0(%arg0: i32) -> (i32, i32, i32) {
    %c0_i32 = arith.constant 0 : i32
    %c0_i32_0 = arith.constant 0 : i32
    %c0_i32_1 = arith.constant 0 : i32
    return %arg0, %c0_i32, %c0_i32_0 : i32, i32, i32
  }
  func.func @transform_1(%arg0: i32) -> (i32, i32) {
    %c0_i32 = arith.constant 0 : i32
    %c0_i32_0 = arith.constant 0 : i32
    %c0_i32_1 = arith.constant 0 : i32
    return %c0_i32, %c0_i32_0 : i32, i32
  }
  func.func @transform_2(%arg0: i32) -> (i32, i32) {
    %c0_i32 = arith.constant 0 : i32
    %c0_i32_0 = arith.constant 0 : i32
    %c0_i32_1 = arith.constant 0 : i32
    return %c0_i32, %c0_i32_0 : i32, i32
  }
  func.func @transform_3(%arg0: i32) -> (i32, i32) {
    %c0_i32 = arith.constant 0 : i32
    %c0_i32_0 = arith.constant 0 : i32
    %c0_i32_1 = arith.constant 0 : i32
    return %c0_i32, %c0_i32_0 : i32, i32
  }
  func.func @transform_4(%arg0: i32) -> (i32, i32) {
    %c0_i32 = arith.constant 0 : i32
    %c0_i32_0 = arith.constant 0 : i32
    %c0_i32_1 = arith.constant 0 : i32
    return %c0_i32, %c0_i32_0 : i32, i32
  }
  func.func @transform_5(%arg0: i32) -> (i32, i32) {
    %c0_i32 = arith.constant 0 : i32
    %c0_i32_0 = arith.constant 0 : i32
    %c0_i32_1 = arith.constant 0 : i32
    return %c0_i32, %c0_i32_0 : i32, i32
  }
  func.func @transform_6(%arg0: i32) -> (i32, i32) {
    %c0_i32 = arith.constant 0 : i32
    %c0_i32_0 = arith.constant 0 : i32
    %c0_i32_1 = arith.constant 0 : i32
    return %c0_i32, %c0_i32_0 : i32, i32
  }
  func.func @transform_7(%arg0: i32) -> (i32, i32) {
    %c0_i32 = arith.constant 0 : i32
    %c0_i32_0 = arith.constant 0 : i32
    %c0_i32_1 = arith.constant 0 : i32
    return %c0_i32, %c0_i32_0 : i32, i32
  }
  func.func @transform_8(%arg0: i32) -> (i32, i32) {
    %c0_i32 = arith.constant 0 : i32
    %c0_i32_0 = arith.constant 0 : i32
    %c0_i32_1 = arith.constant 0 : i32
    return %c0_i32, %c0_i32_0 : i32, i32
  }
  func.func @transform_9(%arg0: i32) -> (i32, i32) {
    %c0_i32 = arith.constant 0 : i32
    %c0_i32_0 = arith.constant 0 : i32
    %c0_i32_1 = arith.constant 0 : i32
    return %c0_i32, %c0_i32_0 : i32, i32
  }
  func.func @transform_10(%arg0: i32) -> (i32, i32) {
    %c0_i32 = arith.constant 0 : i32
    %c0_i32_0 = arith.constant 0 : i32
    %c0_i32_1 = arith.constant 0 : i32
    return %c0_i32, %c0_i32_0 : i32, i32
  }
  func.func @transform_11(%arg0: i32) -> (i32, i32) {
    %c0_i32 = arith.constant 0 : i32
    %c0_i32_0 = arith.constant 0 : i32
    %c0_i32_1 = arith.constant 0 : i32
    return %c0_i32, %c0_i32_0 : i32, i32
  }
  func.func @transform_12(%arg0: i32) -> (i32, i32) {
    %c0_i32 = arith.constant 0 : i32
    %c0_i32_0 = arith.constant 0 : i32
    %c0_i32_1 = arith.constant 0 : i32
    return %c0_i32, %c0_i32_0 : i32, i32
  }
  func.func @transform_13(%arg0: i32) -> (i32, i32) {
    %c0_i32 = arith.constant 0 : i32
    %c0_i32_0 = arith.constant 0 : i32
    %c0_i32_1 = arith.constant 0 : i32
    return %c0_i32, %c0_i32_0 : i32, i32
  }
  func.func @transform_14(%arg0: i32) -> (i32, i32) {
    %c0_i32 = arith.constant 0 : i32
    %c0_i32_0 = arith.constant 0 : i32
    %c0_i32_1 = arith.constant 0 : i32
    return %c0_i32, %c0_i32_0 : i32, i32
  }
  func.func @transform_15(%arg0: i32) -> (i32, i32) {
    %c0_i32 = arith.constant 0 : i32
    %c0_i32_0 = arith.constant 0 : i32
    return %arg0, %c0_i32 : i32, i32
  }
}

</mosaic_0001>

<llo_original>
// kernel: tpu_custom_call.1
$region0: #{tpu_custom_call.1}
  #allocation0 [shape = 'u32[]', space=smem, size = 0x4, offset = 0x4, fixed_abs, tag = 'smem constant byte address 0x4 - core index']
  #allocation1 [shape = 'u32[144,128]{1,0:T(1,128)}', space=vmem, size = 0x12000, scoped, tag = 'internal scratch']
  %s0 = inlined_call_operand.vmem [shape: f32[1,32,14], index: 0, kind: input, shape index: {}]
  %s1 = inlined_call_operand.hbm [shape: f32[14,96], index: 1, kind: input, shape index: {}]
  %s2 = inlined_call_operand.hbm [shape: f32[1,32], index: 2, kind: input, shape index: {}]
  %s3 = inlined_call_operand.vmem [shape: f32[32,96], index: 3, kind: input, shape index: {}]
  %s4 = inlined_call_operand.hbm [shape: f32[1,32], index: 4, kind: input, shape index: {}]
  %s5 = inlined_call_operand.vmem [shape: f32[32,96], index: 5, kind: input, shape index: {}]
  %s6 = inlined_call_operand.vmem [shape: f32[1,32], index: 6, kind: input, shape index: {}]
  %s7 = inlined_call_operand.vmem [shape: f32[32,96], index: 7, kind: input, shape index: {}]
  %s8 = inlined_call_operand.vmem [shape: f32[1,32], index: 8, kind: input, shape index: {}]
  %s9 = inlined_call_operand.hbm [shape: f32[32,128], index: 9, kind: input, shape index: {}]
  %s10 = inlined_call_operand.vmem [shape: f32[1,128], index: 10, kind: input, shape index: {}]
  %s11 = inlined_call_operand.hbm [shape: f32[32,128], index: 11, kind: input, shape index: {}]
  %s12 = inlined_call_operand.vmem [shape: f32[1,128], index: 12, kind: input, shape index: {}]
  %s13 = inlined_call_operand.vmem [shape: f32[32,4], index: 13, kind: input, shape index: {}]
  %s14 = inlined_call_operand.vmem [shape: f32[1,4], index: 14, kind: input, shape index: {}]
  %s15 = inlined_call_operand.hbm [shape: f32[2,4], index: 15, kind: output, shape index: {}]
  %s16 = sld [smem:[#allocation0]]
  $region90: #{tpu_custom_call.1} parent=0
    _
  %s18 = ssub.s32 1, %s16
  %s19 = scalar_select 0, %s18, %s16
  $region1: #{tpu_custom_call.1} parent=0
    #allocation2 [shape = 'u8[8192]{0}', space=vmem, size = 0x2000, scoped, tag = 'input window, operand 1, single buffered']
    #allocation3 [shape = 's32[1]{0}', space=sflag, size = 0x4, scoped, tag = 'scoped memory for tpu_custom_call.1']
    #allocation4 [shape = 's32[1]{0}', space=sflag, size = 0x4, scoped, tag = 'scoped memory for tpu_custom_call.1']
    #allocation5 [shape = 'u8[512]{0}', space=vmem, size = 0x400, scoped, tag = 'input window, operand 2, single buffered']
    #allocation6 [shape = 's32[1]{0}', space=sflag, size = 0x4, scoped, tag = 'scoped memory for tpu_custom_call.1']
    #allocation7 [shape = 'u8[512]{0}', space=vmem, size = 0x400, scoped, tag = 'input window, operand 4, single buffered']
    #allocation8 [shape = 'u8[16384]{0}', space=vmem, size = 0x4000, scoped, tag = 'input window, operand 9, single buffered']
    #allocation9 [shape = 's32[1]{0}', space=sflag, size = 0x4, scoped, tag = 'scoped memory for tpu_custom_call.1']
    #allocation10 [shape = 'u8[16384]{0}', space=vmem, size = 0x4000, scoped, tag = 'input window, operand 11, single buffered']
    #allocation11 [shape = 'u8[1024]{0}', space=vmem, size = 0x400, scoped, tag = 'output window, operand 0, single buffered']
    %20 = vsyncpa [#allocation3], 0
    %21 = vsyncpa [#allocation6], 0
    %22 = vsyncpa [#allocation9], 0
    %23 = vsyncpa [#allocation4], 0
    // Predicated region
    $region2: #{tpu_custom_call.1} parent=1 // pred_check
      _
    $region3: #{tpu_custom_call.1} parent=1 // pred_check_branch
      %25 = sbr.rel (0) target = $region5
    $region4: #{tpu_custom_call.1} parent=1 // pred_region
      _
    $region5: #{tpu_custom_call.1} parent=1 // pred_fallthru
      _
    // Predicated region
    $region6: #{tpu_custom_call.1} parent=1 // pred_check
      _
    $region7: #{tpu_custom_call.1} parent=1 // pred_check_branch
      %27 = sbr.rel (0) target = $region9
    $region8: #{tpu_custom_call.1} parent=1 // pred_region
      %s29 = ssub.s32 256, 256
      %30 = vsyncadd [#allocation3], %s29
      %s31 = sshll.u32 [#allocation2], 4
      %s32 = int_to_ptr.vmem [resolvable:$true] %s31
      %37 = dma.hbm_to_vmem [thread:$0]  %s1, 256, %s32, [#allocation3], 128, 128, 8
    $region9: #{tpu_custom_call.1} parent=1 // pred_fallthru
      _
    // Predicated region
    $region10: #{tpu_custom_call.1} parent=1 // pred_check
      _
    $region11: #{tpu_custom_call.1} parent=1 // pred_check_branch
      %39 = sbr.rel (0) target = $region13
    $region12: #{tpu_custom_call.1} parent=1 // pred_region
      %s41 = ssub.s32 16, 16
      %42 = vsyncadd [#allocation6], %s41
      %s44 = sshll.u32 [#allocation5], 4
      %s45 = int_to_ptr.vmem [resolvable:$true] %s44
      %47 = dma.hbm_to_vmem [thread:$0]  %s2, 16, %s45, [#allocation6]
    $region13: #{tpu_custom_call.1} parent=1 // pred_fallthru
      _
    // Predicated region
    $region14: #{tpu_custom_call.1} parent=1 // pred_check
      _
    $region15: #{tpu_custom_call.1} parent=1 // pred_check_branch
      %49 = sbr.rel (0) target = $region17
    $region16: #{tpu_custom_call.1} parent=1 // pred_region
      _
    $region17: #{tpu_custom_call.1} parent=1 // pred_fallthru
      _
    // Predicated region
    $region18: #{tpu_custom_call.1} parent=1 // pred_check
      _
    $region19: #{tpu_custom_call.1} parent=1 // pred_check_branch
      %51 = sbr.rel (0) target = $region21
    $region20: #{tpu_custom_call.1} parent=1 // pred_region
      %s53 = ssub.s32 16, 16
      %54 = vsyncadd [#allocation6], %s53
      %s56 = sshll.u32 [#allocation7], 4
      %s57 = int_to_ptr.vmem [resolvable:$true] %s56
      %59 = dma.hbm_to_vmem [thread:$0]  %s4, 16, %s57, [#allocation6]
    $region21: #{tpu_custom_call.1} parent=1 // pred_fallthru
      _
    // Predicated region
    $region22: #{tpu_custom_call.1} parent=1 // pred_check
      _
    $region23: #{tpu_custom_call.1} parent=1 // pred_check_branch
      %61 = sbr.rel (0) target = $region25
    $region24: #{tpu_custom_call.1} parent=1 // pred_region
      _
    $region25: #{tpu_custom_call.1} parent=1 // pred_fallthru
      _
    // Predicated region
    $region26: #{tpu_custom_call.1} parent=1 // pred_check
      _
    $region27: #{tpu_custom_call.1} parent=1 // pred_check_branch
      %63 = sbr.rel (0) target = $region29
    $region28: #{tpu_custom_call.1} parent=1 // pred_region
      _
    $region29: #{tpu_custom_call.1} parent=1 // pred_fallthru
      _
    // Predicated region
    $region30: #{tpu_custom_call.1} parent=1 // pred_check
      _
    $region31: #{tpu_custom_call.1} parent=1 // pred_check_branch
      %65 = sbr.rel (0) target = $region33
    $region32: #{tpu_custom_call.1} parent=1 // pred_region
      _
    $region33: #{tpu_custom_call.1} parent=1 // pred_fallthru
      _
    // Predicated region
    $region34: #{tpu_custom_call.1} parent=1 // pred_check
      _
    $region35: #{tpu_custom_call.1} parent=1 // pred_check_branch
      %67 = sbr.rel (0) target = $region37
    $region36: #{tpu_custom_call.1} parent=1 // pred_region
      _
    $region37: #{tpu_custom_call.1} parent=1 // pred_fallthru
      _
    // Predicated region
    $region38: #{tpu_custom_call.1} parent=1 // pred_check
      _
    $region39: #{tpu_custom_call.1} parent=1 // pred_check_branch
      %69 = sbr.rel (0) target = $region41
    $region40: #{tpu_custom_call.1} parent=1 // pred_region
      %s71 = ssub.s32 512, 512
      %72 = vsyncadd [#allocation9], %s71
      %s73 = sshll.u32 [#allocation8], 4
      %s74 = int_to_ptr.vmem [resolvable:$true] %s73
      %79 = dma.hbm_to_vmem [thread:$0]  %s9, 512, %s74, [#allocation9], 128, 128, 8
    $region41: #{tpu_custom_call.1} parent=1 // pred_fallthru
      _
    // Predicated region
    $region42: #{tpu_custom_call.1} parent=1 // pred_check
      _
    $region43: #{tpu_custom_call.1} parent=1 // pred_check_branch
      %81 = sbr.rel (0) target = $region45
    $region44: #{tpu_custom_call.1} parent=1 // pred_region
      _
    $region45: #{tpu_custom_call.1} parent=1 // pred_fallthru
      _
    // Predicated region
    $region46: #{tpu_custom_call.1} parent=1 // pred_check
      _
    $region47: #{tpu_custom_call.1} parent=1 // pred_check_branch
      %83 = sbr.rel (0) target = $region49
    $region48: #{tpu_custom_call.1} parent=1 // pred_region
      %s85 = ssub.s32 512, 512
      %86 = vsyncadd [#allocation9], %s85
      %s87 = sshll.u32 [#allocation10], 4
      %s88 = int_to_ptr.vmem [resolvable:$true] %s87
      %93 = dma.hbm_to_vmem [thread:$0]  %s11, 512, %s88, [#allocation9], 128, 128, 8
    $region49: #{tpu_custom_call.1} parent=1 // pred_fallthru
      _
    // Predicated region
    $region50: #{tpu_custom_call.1} parent=1 // pred_check
      _
    $region51: #{tpu_custom_call.1} parent=1 // pred_check_branch
      %95 = sbr.rel (0) target = $region53
    $region52: #{tpu_custom_call.1} parent=1 // pred_region
      _
    $region53: #{tpu_custom_call.1} parent=1 // pred_fallthru
      _
    // Predicated region
    $region54: #{tpu_custom_call.1} parent=1 // pred_check
      _
    $region55: #{tpu_custom_call.1} parent=1 // pred_check_branch
      %97 = sbr.rel (0) target = $region57
    $region56: #{tpu_custom_call.1} parent=1 // pred_region
      _
    $region57: #{tpu_custom_call.1} parent=1 // pred_fallthru
      _
    // Predicated region
    $region58: #{tpu_custom_call.1} parent=1 // pred_check
      _
    $region59: #{tpu_custom_call.1} parent=1 // pred_check_branch
      %99 = sbr.rel (0) target = $region61
    $region60: #{tpu_custom_call.1} parent=1 // pred_region
      _
    $region61: #{tpu_custom_call.1} parent=1 // pred_fallthru
      _
    // Predicated region
    $region62: #{tpu_custom_call.1} parent=1 // pred_check
      _
    $region63: #{tpu_custom_call.1} parent=1 // pred_check_branch
      %101 = sbr.rel (0) target = $region65
    $region64: #{tpu_custom_call.1} parent=1 // pred_region
      %102 = dma.done [#allocation3], 256
    $region65: #{tpu_custom_call.1} parent=1 // pred_fallthru
      _
    // Predicated region
    $region66: #{tpu_custom_call.1} parent=1 // pred_check
      _
    $region67: #{tpu_custom_call.1} parent=1 // pred_check_branch
      %104 = sbr.rel (0) target = $region69
    $region68: #{tpu_custom_call.1} parent=1 // pred_region
      %105 = dma.done [#allocation6], 16
    $region69: #{tpu_custom_call.1} parent=1 // pred_fallthru
      _
    // Predicated region
    $region70: #{tpu_custom_call.1} parent=1 // pred_check
      _
    $region71: #{tpu_custom_call.1} parent=1 // pred_check_branch
      %107 = sbr.rel (0) target = $region73
    $region72: #{tpu_custom_call.1} parent=1 // pred_region
      %108 = dma.done [#allocation6], 16
    $region73: #{tpu_custom_call.1} parent=1 // pred_fallthru
      _
    // Predicated region
    $region74: #{tpu_custom_call.1} parent=1 // pred_check
      _
    $region75: #{tpu_custom_call.1} parent=1 // pred_check_branch
      %110 = sbr.rel (0) target = $region77
    $region76: #{tpu_custom_call.1} parent=1 // pred_region
      %111 = dma.done [#allocation9], 512
    $region77: #{tpu_custom_call.1} parent=1 // pred_fallthru
      _
    // Predicated region
    $region78: #{tpu_custom_call.1} parent=1 // pred_check
      _
    $region79: #{tpu_custom_call.1} parent=1 // pred_check_branch
      %113 = sbr.rel (0) target = $region81
    $region80: #{tpu_custom_call.1} parent=1 // pred_region
      %114 = dma.done [#allocation9], 512
    $region81: #{tpu_custom_call.1} parent=1 // pred_fallthru
      _
    %v115 = vld [vmem:[%s0] sm:$0xff]
    %v116 = vld [vmem:[%s0 + $0x8] sm:$0xff]
    %v117 = vld [vmem:[%s0 + $0x10] sm:$0xff]
    %v118 = vld [vmem:[%s0 + $0x18] sm:$0xff]
    %v119 = vld [vmem:[#allocation2] sm:$0xff]
    %v120 = vld [vmem:[#allocation2 + $0x8] sm:$0x3f]
    %vm121 = vcmask 113664
    %v123 = vsel %vm121, %v115, 0
    %v126 = vsel %vm121, %v116, 0
    %v129 = vsel %vm121, %v117, 0
    %v132 = vsel %vm121, %v118, 0
    %vm134 = vcmask 1045504
    %v136 = vsel %vm134, %v120, 0
    %138 = vmatprep.subr.mxu0 0.0
    %139 = vmatpush1.msra.mxu0 %v119
    %140 = vmatprep.subr.mxu0 0.0
    %141 = vmatpush1.msra.mxu0 %v136
    %142 = vmatprep.subr.mxu0 0.0
    %143 = vmatpush1.msra.mxu0 0.0
    %144 = vmatprep.subr.mxu0 0.0
    %145 = vmatpush1.msra.mxu0 0.0
    %146 = vmatprep.subr.mxu0 0.0
    %147 = vmatpush1.msra.mxu0 0.0
    %148 = vmatprep.subr.mxu0 0.0
    %149 = vmatpush1.msra.mxu0 0.0
    %150 = vmatprep.subr.mxu0 0.0
    %151 = vmatpush1.msra.mxu0 0.0
    %152 = vmatprep.subr.mxu0 0.0
    %153 = vmatpush1.msra.mxu0 0.0
    %154 = vmatprep.subr.mxu0 0.0
    %155 = vmatpush1.msra.mxu0 0.0
    %156 = vmatprep.subr.mxu0 0.0
    %157 = vmatpush1.msra.mxu0 0.0
    %158 = vmatprep.subr.mxu0 0.0
    %159 = vmatpush1.msra.mxu0 0.0
    %160 = vmatprep.subr.mxu0 0.0
    %161 = vmatpush1.msra.mxu0 0.0
    %162 = vmatprep.subr.mxu0 0.0
    %163 = vmatpush1.msra.mxu0 0.0
    %164 = vmatprep.subr.mxu0 0.0
    %165 = vmatpush1.msra.mxu0 0.0
    %166 = vmatprep.subr.mxu0 0.0
    %167 = vmatpush1.msra.mxu0 0.0
    %168 = vmatprep.subr.mxu0 0.0
    %169 = vmatpush1.msra.mxu0 0.0
    %170 = vmatprep.subr.mxu0 0.0
    %171 = vmatpush1.msra.mxu0 0.0
    %172 = vmatprep.subr.mxu0 0.0
    %173 = vmatpush1.msra.mxu0 0.0
    %174 = vmatprep.subr.mxu0 0.0
    %175 = vmatpush1.msra.mxu0 0.0
    %176 = vmatprep.subr.mxu0 0.0
    %177 = vmatpush1.msra.mxu0 0.0
    %178 = vmatprep.subr.mxu0 0.0
    %179 = vmatpush1.msra.mxu0 0.0
    %180 = vmatprep.subr.mxu0 0.0
    %181 = vmatpush1.msra.mxu0 0.0
    %182 = vmatprep.subr.mxu0 0.0
    %183 = vmatpush1.msra.mxu0 0.0
    %184 = vmatprep.subr.mxu0 0.0
    %185 = vmatpush1.msra.mxu0 0.0
    %186 = vmatprep.subr.mxu0 0.0
    %187 = vmatpush1.msra.mxu0 0.0
    %188 = vmatprep.subr.mxu0 0.0
    %189 = vmatpush1.msra.mxu0 0.0
    %190 = vmatprep.subr.mxu0 0.0
    %191 = vmatpush1.msra.mxu0 0.0
    %192 = vmatprep.subr.mxu0 0.0
    %193 = vmatpush1.msra.mxu0 0.0
    %194 = vmatprep.subr.mxu0 0.0
    %195 = vmatpush1.msra.mxu0 0.0
    %196 = vmatprep.subr.mxu0 0.0
    %197 = vmatpush1.msra.mxu0 0.0
    %198 = vmatprep.subr.mxu0 0.0
    %199 = vmatpush1.msra.mxu0 0.0
    %200 = vmatprep.subr.mxu0 0.0
    %201 = vmatpush1.msra.mxu0 0.0
    %202 = vmatprep.mubr.f32.mxu0 0.0
    %203 = vmatmul.mubr.f32.gmra.mrb[0].mxu0 %v123
    %v204 = vpop.f32.mrb[0].mxu0
    %v205 = vadd.f32 0.0, %v204
    %v206 = vpop.f32.mrb[0].mxu0
    %207 = vmatprep.mubr.f32.mxu0 0.0
    %208 = vmatmul.mubr.f32.gmra.mrb[0].mxu0 %v126
    %v209 = vpop.f32.mrb[0].mxu0
    %v210 = vadd.f32 0.0, %v209
    %v211 = vpop.f32.mrb[0].mxu0
    %212 = vmatprep.mubr.f32.mxu0 0.0
    %213 = vmatmul.mubr.f32.gmra.mrb[0].mxu0 %v129
    %v214 = vpop.f32.mrb[0].mxu0
    %v215 = vadd.f32 0.0, %v214
    %v216 = vpop.f32.mrb[0].mxu0
    %217 = vmatprep.mubr.f32.mxu0 0.0
    %218 = vmatmul.mubr.f32.gmra.mrb[0].mxu0 %v132
    %v219 = vpop.f32.mrb[0].mxu0
    %v220 = vadd.f32 0.0, %v219
    %v221 = vpop.f32.mrb[0].mxu0
    %222 = vdwg.mxu0
    %vm227 = vcmask 1041408
    %v228 = vrot.slane %v205, 6
    %v229 = vrot.slane %v210, 6
    %v230 = vsel %vm227, %v228, %v229
    %v231 = vrot.slane %v215, 6
    %v232 = vsel %vm227, %v229, %v231
    %v233 = vrot.slane %v220, 6
    %v234 = vsel %vm227, %v231, %v233
    %v239 = vsel %vm227, 0.0, %v228
    %v240 = vrot.slane %v205, 2
    %v241 = vrot.slane %v210, 2
    %v242 = vsel %vm134, %v240, %v241
    %v243 = vrot.slane %v215, 2
    %v244 = vsel %vm134, %v241, %v243
    %v245 = vrot.slane %v220, 2
    %v246 = vsel %vm134, %v243, %v245
    %v248 = vsel %vm134, %v245, 0.0
    %249 = vrot.lane.b32.xlu0 %v205, 96
    %v250 = vpop.permute.xlu0 %249
    %251 = vrot.lane.b32.xlu0 %v210, 96
    %v252 = vpop.permute.xlu0 %251
    %253 = vrot.lane.b32.xlu0 %v215, 96
    %v254 = vpop.permute.xlu0 %253
    %255 = vrot.lane.b32.xlu0 %v220, 96
    %v256 = vpop.permute.xlu0 %255
    %v261 = vadd.f32 %v239, %v250
    %v262 = vadd.f32 %v230, %v252
    %v263 = vadd.f32 %v232, %v254
    %v264 = vadd.f32 %v234, %v256
    %266 = vrot.lane.b32.xlu0 %v242, 64
    %v267 = vpop.permute.xlu0 %266
    %268 = vrot.lane.b32.xlu0 %v244, 64
    %v269 = vpop.permute.xlu0 %268
    %270 = vrot.lane.b32.xlu0 %v246, 64
    %v271 = vpop.permute.xlu0 %270
    %272 = vrot.lane.b32.xlu0 %v248, 64
    %v273 = vpop.permute.xlu0 %272
    %v278 = vadd.f32 %v261, %v267
    %v279 = vadd.f32 %v262, %v269
    %v280 = vadd.f32 %v263, %v271
    %v281 = vadd.f32 %v264, %v273
    %v282 = vld [vmem:[#allocation5] sm:$0x1]
    %v284 = vlaneseq
    %v285 = vshrl.u32 %v284, 7
    %v286 = vsub.s32 0, %v285
    %v287 = vrot.slane %v282, %v286
    %v289 = vadd.f32 %v278, %v287
    %v290 = vadd.f32 %v279, %v287
    %v291 = vadd.f32 %v280, %v287
    %v292 = vadd.f32 %v281, %v287
    %v293 = vmul.f32 %v289, 0.5
    %v294 = vmul.f32 %v290, 0.5
    %v295 = vmul.f32 %v291, 0.5
    %v296 = vmul.f32 %v292, 0.5
    %v297 = vmul.f32 %v289, 0.044715
    %v298 = vmul.f32 %v290, 0.044715
    %v299 = vmul.f32 %v291, 0.044715
    %v300 = vmul.f32 %v292, 0.044715
    %v301 = vmul.f32 %v297, %v289
    %v302 = vmul.f32 %v298, %v290
    %v303 = vmul.f32 %v299, %v291
    %v304 = vmul.f32 %v300, %v292
    %v305 = vmul.f32 %v301, %v289
    %v306 = vmul.f32 %v302, %v290
    %v307 = vmul.f32 %v303, %v291
    %v308 = vmul.f32 %v304, %v292
    %v309 = vadd.f32 %v289, %v305
    %v310 = vadd.f32 %v290, %v306
    %v311 = vadd.f32 %v291, %v307
    %v312 = vadd.f32 %v292, %v308
    %v313 = vmul.f32 %v309, 0.7978846
    %v314 = vmul.f32 %v310, 0.7978846
    %v315 = vmul.f32 %v311, 0.7978846
    %v316 = vmul.f32 %v312, 0.7978846
    %v317 = vtanh.pop %v313
    %v318 = vtanh.pop %v314
    %v319 = vtanh.pop %v315
    %v320 = vtanh.pop %v316
    %v321 = vadd.f32 %v317, 1.0
    %v322 = vadd.f32 %v318, 1.0
    %v323 = vadd.f32 %v319, 1.0
    %v324 = vadd.f32 %v320, 1.0
    %v325 = vmul.f32 %v293, %v321
    %v326 = vmul.f32 %v294, %v322
    %v327 = vmul.f32 %v295, %v323
    %v328 = vmul.f32 %v296, %v324
    %v329 = vld [vmem:[%s3] sm:$0xff]
    %v330 = vld [vmem:[%s3 + $0x8] sm:$0xff]
    %v331 = vld [vmem:[%s3 + $0x10] sm:$0xff]
    %v332 = vld [vmem:[%s3 + $0x18] sm:$0xff]
    %vm333 = vcmask 261120
    %v335 = vsel %vm333, %v325, 0
    %v338 = vsel %vm333, %v326, 0
    %v341 = vsel %vm333, %v327, 0
    %v344 = vsel %vm333, %v328, 0
    %346 = vmatprep.subr.mxu0 0.0
    %347 = vmatpush1.msra.mxu0 %v329
    %348 = vmatprep.subr.mxu0 0.0
    %349 = vmatpush1.msra.mxu0 %v330
    %350 = vmatprep.subr.mxu0 0.0
    %351 = vmatpush1.msra.mxu0 %v331
    %352 = vmatprep.subr.mxu0 0.0
    %353 = vmatpush1.msra.mxu0 %v332
    %354 = vmatprep.subr.mxu0 0.0
    %355 = vmatpush1.msra.mxu0 0.0
    %356 = vmatprep.subr.mxu0 0.0
    %357 = vmatpush1.msra.mxu0 0.0
    %358 = vmatprep.subr.mxu0 0.0
    %359 = vmatpush1.msra.mxu0 0.0
    %360 = vmatprep.subr.mxu0 0.0
    %361 = vmatpush1.msra.mxu0 0.0
    %362 = vmatprep.subr.mxu0 0.0
    %363 = vmatpush1.msra.mxu0 0.0
    %364 = vmatprep.subr.mxu0 0.0
    %365 = vmatpush1.msra.mxu0 0.0
    %366 = vmatprep.subr.mxu0 0.0
    %367 = vmatpush1.msra.mxu0 0.0
    %368 = vmatprep.subr.mxu0 0.0
    %369 = vmatpush1.msra.mxu0 0.0
    %370 = vmatprep.subr.mxu0 0.0
    %371 = vmatpush1.msra.mxu0 0.0
    %372 = vmatprep.subr.mxu0 0.0
    %373 = vmatpush1.msra.mxu0 0.0
    %374 = vmatprep.subr.mxu0 0.0
    %375 = vmatpush1.msra.mxu0 0.0
    %376 = vmatprep.subr.mxu0 0.0
    %377 = vmatpush1.msra.mxu0 0.0
    %378 = vmatprep.subr.mxu0 0.0
    %379 = vmatpush1.msra.mxu0 0.0
    %380 = vmatprep.subr.mxu0 0.0
    %381 = vmatpush1.msra.mxu0 0.0
    %382 = vmatprep.subr.mxu0 0.0
    %383 = vmatpush1.msra.mxu0 0.0
    %384 = vmatprep.subr.mxu0 0.0
    %385 = vmatpush1.msra.mxu0 0.0
    %386 = vmatprep.subr.mxu0 0.0
    %387 = vmatpush1.msra.mxu0 0.0
    %388 = vmatprep.subr.mxu0 0.0
    %389 = vmatpush1.msra.mxu0 0.0
    %390 = vmatprep.subr.mxu0 0.0
    %391 = vmatpush1.msra.mxu0 0.0
    %392 = vmatprep.subr.mxu0 0.0
    %393 = vmatpush1.msra.mxu0 0.0
    %394 = vmatprep.subr.mxu0 0.0
    %395 = vmatpush1.msra.mxu0 0.0
    %396 = vmatprep.subr.mxu0 0.0
    %397 = vmatpush1.msra.mxu0 0.0
    %398 = vmatprep.subr.mxu0 0.0
    %399 = vmatpush1.msra.mxu0 0.0
    %400 = vmatprep.subr.mxu0 0.0
    %401 = vmatpush1.msra.mxu0 0.0
    %402 = vmatprep.subr.mxu0 0.0
    %403 = vmatpush1.msra.mxu0 0.0
    %404 = vmatprep.subr.mxu0 0.0
    %405 = vmatpush1.msra.mxu0 0.0
    %406 = vmatprep.subr.mxu0 0.0
    %407 = vmatpush1.msra.mxu0 0.0
    %408 = vmatprep.subr.mxu0 0.0
    %409 = vmatpush1.msra.mxu0 0.0
    %410 = vmatprep.mubr.f32.mxu0 0.0
    %411 = vmatmul.mubr.f32.gmra.mrb[0].mxu0 %v335
    %v412 = vpop.f32.mrb[0].mxu0
    %v413 = vadd.f32 0.0, %v412
    %v414 = vpop.f32.mrb[0].mxu0
    %415 = vmatprep.mubr.f32.mxu0 0.0
    %416 = vmatmul.mubr.f32.gmra.mrb[0].mxu0 %v338
    %v417 = vpop.f32.mrb[0].mxu0
    %v418 = vadd.f32 0.0, %v417
    %v419 = vpop.f32.mrb[0].mxu0
    %420 = vmatprep.mubr.f32.mxu0 0.0
    %421 = vmatmul.mubr.f32.gmra.mrb[0].mxu0 %v341
    %v422 = vpop.f32.mrb[0].mxu0
    %v423 = vadd.f32 0.0, %v422
    %v424 = vpop.f32.mrb[0].mxu0
    %425 = vmatprep.mubr.f32.mxu0 0.0
    %426 = vmatmul.mubr.f32.gmra.mrb[0].mxu0 %v344
    %v427 = vpop.f32.mrb[0].mxu0
    %v428 = vadd.f32 0.0, %v427
    %v429 = vpop.f32.mrb[0].mxu0
    %430 = vdwg.mxu0
    %v435 = vrot.slane %v413, 6
    %v436 = vrot.slane %v418, 6
    %v437 = vsel %vm227, %v435, %v436
    %v438 = vrot.slane %v423, 6
    %v439 = vsel %vm227, %v436, %v438
    %v440 = vrot.slane %v428, 6
    %v441 = vsel %vm227, %v438, %v440
    %v446 = vsel %vm227, 0.0, %v435
    %v447 = vrot.slane %v413, 2
    %v448 = vrot.slane %v418, 2
    %v449 = vsel %vm134, %v447, %v448
    %v450 = vrot.slane %v423, 2
    %v451 = vsel %vm134, %v448, %v450
    %v452 = vrot.slane %v428, 2
    %v453 = vsel %vm134, %v450, %v452
    %v455 = vsel %vm134, %v452, 0.0
    %456 = vrot.lane.b32.xlu0 %v413, 96
    %v457 = vpop.permute.xlu0 %456
    %458 = vrot.lane.b32.xlu0 %v418, 96
    %v459 = vpop.permute.xlu0 %458
    %460 = vrot.lane.b32.xlu0 %v423, 96
    %v461 = vpop.permute.xlu0 %460
    %462 = vrot.lane.b32.xlu0 %v428, 96
    %v463 = vpop.permute.xlu0 %462
    %v468 = vadd.f32 %v446, %v457
    %v469 = vadd.f32 %v437, %v459
    %v470 = vadd.f32 %v439, %v461
    %v471 = vadd.f32 %v441, %v463
    %473 = vrot.lane.b32.xlu0 %v449, 64
    %v474 = vpop.permute.xlu0 %473
    %475 = vrot.lane.b32.xlu0 %v451, 64
    %v476 = vpop.permute.xlu0 %475
    %477 = vrot.lane.b32.xlu0 %v453, 64
    %v478 = vpop.permute.xlu0 %477
    %479 = vrot.lane.b32.xlu0 %v455, 64
    %v480 = vpop.permute.xlu0 %479
    %v485 = vadd.f32 %v468, %v474
    %v486 = vadd.f32 %v469, %v476
    %v487 = vadd.f32 %v470, %v478
    %v488 = vadd.f32 %v471, %v480
    %v489 = vld [vmem:[#allocation7] sm:$0x1]
    %v491 = vlaneseq
    %v492 = vshrl.u32 %v491, 7
    %v493 = vsub.s32 0, %v492
    %v494 = vrot.slane %v489, %v493
    %v496 = vadd.f32 %v485, %v494
    %v497 = vadd.f32 %v486, %v494
    %v498 = vadd.f32 %v487, %v494
    %v499 = vadd.f32 %v488, %v494
    %v500 = vmul.f32 %v496, 0.5
    %v501 = vmul.f32 %v497, 0.5
    %v502 = vmul.f32 %v498, 0.5
    %v503 = vmul.f32 %v499, 0.5
    %v504 = vmul.f32 %v496, 0.044715
    %v505 = vmul.f32 %v497, 0.044715
    %v506 = vmul.f32 %v498, 0.044715
    %v507 = vmul.f32 %v499, 0.044715
    %v508 = vmul.f32 %v504, %v496
    %v509 = vmul.f32 %v505, %v497
    %v510 = vmul.f32 %v506, %v498
    %v511 = vmul.f32 %v507, %v499
    %v512 = vmul.f32 %v508, %v496
    %v513 = vmul.f32 %v509, %v497
    %v514 = vmul.f32 %v510, %v498
    %v515 = vmul.f32 %v511, %v499
    %v516 = vadd.f32 %v496, %v512
    %v517 = vadd.f32 %v497, %v513
    %v518 = vadd.f32 %v498, %v514
    %v519 = vadd.f32 %v499, %v515
    %v520 = vmul.f32 %v516, 0.7978846
    %v521 = vmul.f32 %v517, 0.7978846
    %v522 = vmul.f32 %v518, 0.7978846
    %v523 = vmul.f32 %v519, 0.7978846
    %v524 = vtanh.pop %v520
    %v525 = vtanh.pop %v521
    %v526 = vtanh.pop %v522
    %v527 = vtanh.pop %v523
    %v528 = vadd.f32 %v524, 1.0
    %v529 = vadd.f32 %v525, 1.0
    %v530 = vadd.f32 %v526, 1.0
    %v531 = vadd.f32 %v527, 1.0
    %v532 = vmul.f32 %v500, %v528
    %v533 = vmul.f32 %v501, %v529
    %v534 = vmul.f32 %v502, %v530
    %v535 = vmul.f32 %v503, %v531
    %v536 = vld [vmem:[%s5] sm:$0xff]
    %v537 = vld [vmem:[%s5 + $0x8] sm:$0xff]
    %v538 = vld [vmem:[%s5 + $0x10] sm:$0xff]
    %v539 = vld [vmem:[%s5 + $0x18] sm:$0xff]
    %v541 = vsel %vm333, %v532, 0
    %v544 = vsel %vm333, %v533, 0
    %v547 = vsel %vm333, %v534, 0
    %v550 = vsel %vm333, %v535, 0
    %552 = vmatprep.subr.mxu0 0.0
    %553 = vmatpush1.msra.mxu0 %v536
    %554 = vmatprep.subr.mxu0 0.0
    %555 = vmatpush1.msra.mxu0 %v537
    %556 = vmatprep.subr.mxu0 0.0
    %557 = vmatpush1.msra.mxu0 %v538
    %558 = vmatprep.subr.mxu0 0.0
    %559 = vmatpush1.msra.mxu0 %v539
    %560 = vmatprep.subr.mxu0 0.0
    %561 = vmatpush1.msra.mxu0 0.0
    %562 = vmatprep.subr.mxu0 0.0
    %563 = vmatpush1.msra.mxu0 0.0
    %564 = vmatprep.subr.mxu0 0.0
    %565 = vmatpush1.msra.mxu0 0.0
    %566 = vmatprep.subr.mxu0 0.0
    %567 = vmatpush1.msra.mxu0 0.0
    %568 = vmatprep.subr.mxu0 0.0
    %569 = vmatpush1.msra.mxu0 0.0
    %570 = vmatprep.subr.mxu0 0.0
    %571 = vmatpush1.msra.mxu0 0.0
    %572 = vmatprep.subr.mxu0 0.0
    %573 = vmatpush1.msra.mxu0 0.0
    %574 = vmatprep.subr.mxu0 0.0
    %575 = vmatpush1.msra.mxu0 0.0
    %576 = vmatprep.subr.mxu0 0.0
    %577 = vmatpush1.msra.mxu0 0.0
    %578 = vmatprep.subr.mxu0 0.0
    %579 = vmatpush1.msra.mxu0 0.0
    %580 = vmatprep.subr.mxu0 0.0
    %581 = vmatpush1.msra.mxu0 0.0
    %582 = vmatprep.subr.mxu0 0.0
    %583 = vmatpush1.msra.mxu0 0.0
    %584 = vmatprep.subr.mxu0 0.0
    %585 = vmatpush1.msra.mxu0 0.0
    %586 = vmatprep.subr.mxu0 0.0
    %587 = vmatpush1.msra.mxu0 0.0
    %588 = vmatprep.subr.mxu0 0.0
    %589 = vmatpush1.msra.mxu0 0.0
    %590 = vmatprep.subr.mxu0 0.0
    %591 = vmatpush1.msra.mxu0 0.0
    %592 = vmatprep.subr.mxu0 0.0
    %593 = vmatpush1.msra.mxu0 0.0
    %594 = vmatprep.subr.mxu0 0.0
    %595 = vmatpush1.msra.mxu0 0.0
    %596 = vmatprep.subr.mxu0 0.0
    %597 = vmatpush1.msra.mxu0 0.0
    %598 = vmatprep.subr.mxu0 0.0
    %599 = vmatpush1.msra.mxu0 0.0
    %600 = vmatprep.subr.mxu0 0.0
    %601 = vmatpush1.msra.mxu0 0.0
    %602 = vmatprep.subr.mxu0 0.0
    %603 = vmatpush1.msra.mxu0 0.0
    %604 = vmatprep.subr.mxu0 0.0
    %605 = vmatpush1.msra.mxu0 0.0
    %606 = vmatprep.subr.mxu0 0.0
    %607 = vmatpush1.msra.mxu0 0.0
    %608 = vmatprep.subr.mxu0 0.0
    %609 = vmatpush1.msra.mxu0 0.0
    %610 = vmatprep.subr.mxu0 0.0
    %611 = vmatpush1.msra.mxu0 0.0
    %612 = vmatprep.subr.mxu0 0.0
    %613 = vmatpush1.msra.mxu0 0.0
    %614 = vmatprep.subr.mxu0 0.0
    %615 = vmatpush1.msra.mxu0 0.0
    %616 = vmatprep.mubr.f32.mxu0 0.0
    %617 = vmatmul.mubr.f32.gmra.mrb[0].mxu0 %v541
    %v618 = vpop.f32.mrb[0].mxu0
    %v619 = vadd.f32 0.0, %v618
    %v620 = vpop.f32.mrb[0].mxu0
    %621 = vmatprep.mubr.f32.mxu0 0.0
    %622 = vmatmul.mubr.f32.gmra.mrb[0].mxu0 %v544
    %v623 = vpop.f32.mrb[0].mxu0
    %v624 = vadd.f32 0.0, %v623
    %v625 = vpop.f32.mrb[0].mxu0
    %626 = vmatprep.mubr.f32.mxu0 0.0
    %627 = vmatmul.mubr.f32.gmra.mrb[0].mxu0 %v547
    %v628 = vpop.f32.mrb[0].mxu0
    %v629 = vadd.f32 0.0, %v628
    %v630 = vpop.f32.mrb[0].mxu0
    %631 = vmatprep.mubr.f32.mxu0 0.0
    %632 = vmatmul.mubr.f32.gmra.mrb[0].mxu0 %v550
    %v633 = vpop.f32.mrb[0].mxu0
    %v634 = vadd.f32 0.0, %v633
    %v635 = vpop.f32.mrb[0].mxu0
    %636 = vdwg.mxu0
    %v641 = vrot.slane %v619, 6
    %v642 = vrot.slane %v624, 6
    %v643 = vsel %vm227, %v641, %v642
    %v644 = vrot.slane %v629, 6
    %v645 = vsel %vm227, %v642, %v644
    %v646 = vrot.slane %v634, 6
    %v647 = vsel %vm227, %v644, %v646
    %v652 = vsel %vm227, 0.0, %v641
    %v653 = vrot.slane %v619, 2
    %v654 = vrot.slane %v624, 2
    %v655 = vsel %vm134, %v653, %v654
    %v656 = vrot.slane %v629, 2
    %v657 = vsel %vm134, %v654, %v656
    %v658 = vrot.slane %v634, 2
    %v659 = vsel %vm134, %v656, %v658
    %v661 = vsel %vm134, %v658, 0.0
    %662 = vrot.lane.b32.xlu0 %v619, 96
    %v663 = vpop.permute.xlu0 %662
    %664 = vrot.lane.b32.xlu0 %v624, 96
    %v665 = vpop.permute.xlu0 %664
    %666 = vrot.lane.b32.xlu0 %v629, 96
    %v667 = vpop.permute.xlu0 %666
    %668 = vrot.lane.b32.xlu0 %v634, 96
    %v669 = vpop.permute.xlu0 %668
    %v674 = vadd.f32 %v652, %v663
    %v675 = vadd.f32 %v643, %v665
    %v676 = vadd.f32 %v645, %v667
    %v677 = vadd.f32 %v647, %v669
    %679 = vrot.lane.b32.xlu0 %v655, 64
    %v680 = vpop.permute.xlu0 %679
    %681 = vrot.lane.b32.xlu0 %v657, 64
    %v682 = vpop.permute.xlu0 %681
    %683 = vrot.lane.b32.xlu0 %v659, 64
    %v684 = vpop.permute.xlu0 %683
    %685 = vrot.lane.b32.xlu0 %v661, 64
    %v686 = vpop.permute.xlu0 %685
    %v691 = vadd.f32 %v674, %v680
    %v692 = vadd.f32 %v675, %v682
    %v693 = vadd.f32 %v676, %v684
    %v694 = vadd.f32 %v677, %v686
    %v695 = vld [vmem:[%s6] sm:$0x1]
    %v697 = vlaneseq
    %v698 = vshrl.u32 %v697, 7
    %v699 = vsub.s32 0, %v698
    %v700 = vrot.slane %v695, %v699
    %v702 = vadd.f32 %v691, %v700
    %v703 = vadd.f32 %v692, %v700
    %v704 = vadd.f32 %v693, %v700
    %v705 = vadd.f32 %v694, %v700
    %v706 = vmul.f32 %v702, 0.5
    %v707 = vmul.f32 %v703, 0.5
    %v708 = vmul.f32 %v704, 0.5
    %v709 = vmul.f32 %v705, 0.5
    %v710 = vmul.f32 %v702, 0.044715
    %v711 = vmul.f32 %v703, 0.044715
    %v712 = vmul.f32 %v704, 0.044715
    %v713 = vmul.f32 %v705, 0.044715
    %v714 = vmul.f32 %v710, %v702
    %v715 = vmul.f32 %v711, %v703
    %v716 = vmul.f32 %v712, %v704
    %v717 = vmul.f32 %v713, %v705
    %v718 = vmul.f32 %v714, %v702
    %v719 = vmul.f32 %v715, %v703
    %v720 = vmul.f32 %v716, %v704
    %v721 = vmul.f32 %v717, %v705
    %v722 = vadd.f32 %v702, %v718
    %v723 = vadd.f32 %v703, %v719
    %v724 = vadd.f32 %v704, %v720
    %v725 = vadd.f32 %v705, %v721
    %v726 = vmul.f32 %v722, 0.7978846
    %v727 = vmul.f32 %v723, 0.7978846
    %v728 = vmul.f32 %v724, 0.7978846
    %v729 = vmul.f32 %v725, 0.7978846
    %v730 = vtanh.pop %v726
    %v731 = vtanh.pop %v727
    %v732 = vtanh.pop %v728
    %v733 = vtanh.pop %v729
    %v734 = vadd.f32 %v730, 1.0
    %v735 = vadd.f32 %v731, 1.0
    %v736 = vadd.f32 %v732, 1.0
    %v737 = vadd.f32 %v733, 1.0
    %v738 = vmul.f32 %v706, %v734
    %v739 = vmul.f32 %v707, %v735
    %v740 = vmul.f32 %v708, %v736
    %v741 = vmul.f32 %v709, %v737
    %v742 = vld [vmem:[%s7] sm:$0xff]
    %v743 = vld [vmem:[%s7 + $0x8] sm:$0xff]
    %v744 = vld [vmem:[%s7 + $0x10] sm:$0xff]
    %v745 = vld [vmem:[%s7 + $0x18] sm:$0xff]
    %v747 = vsel %vm333, %v738, 0
    %v750 = vsel %vm333, %v739, 0
    %v753 = vsel %vm333, %v740, 0
    %v756 = vsel %vm333, %v741, 0
    %758 = vmatprep.subr.mxu0 0.0
    %759 = vmatpush1.msra.mxu0 %v742
    %760 = vmatprep.subr.mxu0 0.0
    %761 = vmatpush1.msra.mxu0 %v743
    %762 = vmatprep.subr.mxu0 0.0
    %763 = vmatpush1.msra.mxu0 %v744
    %764 = vmatprep.subr.mxu0 0.0
    %765 = vmatpush1.msra.mxu0 %v745
    %766 = vmatprep.subr.mxu0 0.0
    %767 = vmatpush1.msra.mxu0 0.0
    %768 = vmatprep.subr.mxu0 0.0
    %769 = vmatpush1.msra.mxu0 0.0
    %770 = vmatprep.subr.mxu0 0.0
    %771 = vmatpush1.msra.mxu0 0.0
    %772 = vmatprep.subr.mxu0 0.0
    %773 = vmatpush1.msra.mxu0 0.0
    %774 = vmatprep.subr.mxu0 0.0
    %775 = vmatpush1.msra.mxu0 0.0
    %776 = vmatprep.subr.mxu0 0.0
    %777 = vmatpush1.msra.mxu0 0.0
    %778 = vmatprep.subr.mxu0 0.0
    %779 = vmatpush1.msra.mxu0 0.0
    %780 = vmatprep.subr.mxu0 0.0
    %781 = vmatpush1.msra.mxu0 0.0
    %782 = vmatprep.subr.mxu0 0.0
    %783 = vmatpush1.msra.mxu0 0.0
    %784 = vmatprep.subr.mxu0 0.0
    %785 = vmatpush1.msra.mxu0 0.0
    %786 = vmatprep.subr.mxu0 0.0
    %787 = vmatpush1.msra.mxu0 0.0
    %788 = vmatprep.subr.mxu0 0.0
    %789 = vmatpush1.msra.mxu0 0.0
    %790 = vmatprep.subr.mxu0 0.0
    %791 = vmatpush1.msra.mxu0 0.0
    %792 = vmatprep.subr.mxu0 0.0
    %793 = vmatpush1.msra.mxu0 0.0
    %794 = vmatprep.subr.mxu0 0.0
    %795 = vmatpush1.msra.mxu0 0.0
    %796 = vmatprep.subr.mxu0 0.0
    %797 = vmatpush1.msra.mxu0 0.0
    %798 = vmatprep.subr.mxu0 0.0
    %799 = vmatpush1.msra.mxu0 0.0
    %800 = vmatprep.subr.mxu0 0.0
    %801 = vmatpush1.msra.mxu0 0.0
    %802 = vmatprep.subr.mxu0 0.0
    %803 = vmatpush1.msra.mxu0 0.0
    %804 = vmatprep.subr.mxu0 0.0
    %805 = vmatpush1.msra.mxu0 0.0
    %806 = vmatprep.subr.mxu0 0.0
    %807 = vmatpush1.msra.mxu0 0.0
    %808 = vmatprep.subr.mxu0 0.0
    %809 = vmatpush1.msra.mxu0 0.0
    %810 = vmatprep.subr.mxu0 0.0
    %811 = vmatpush1.msra.mxu0 0.0
    %812 = vmatprep.subr.mxu0 0.0
    %813 = vmatpush1.msra.mxu0 0.0
    %814 = vmatprep.subr.mxu0 0.0
    %815 = vmatpush1.msra.mxu0 0.0
    %816 = vmatprep.subr.mxu0 0.0
    %817 = vmatpush1.msra.mxu0 0.0
    %818 = vmatprep.subr.mxu0 0.0
    %819 = vmatpush1.msra.mxu0 0.0
    %820 = vmatprep.subr.mxu0 0.0
    %821 = vmatpush1.msra.mxu0 0.0
    %822 = vmatprep.mubr.f32.mxu0 0.0
    %823 = vmatmul.mubr.f32.gmra.mrb[0].mxu0 %v747
    %v824 = vpop.f32.mrb[0].mxu0
    %v825 = vadd.f32 0.0, %v824
    %v826 = vpop.f32.mrb[0].mxu0
    %827 = vmatprep.mubr.f32.mxu0 0.0
    %828 = vmatmul.mubr.f32.gmra.mrb[0].mxu0 %v750
    %v829 = vpop.f32.mrb[0].mxu0
    %v830 = vadd.f32 0.0, %v829
    %v831 = vpop.f32.mrb[0].mxu0
    %832 = vmatprep.mubr.f32.mxu0 0.0
    %833 = vmatmul.mubr.f32.gmra.mrb[0].mxu0 %v753
    %v834 = vpop.f32.mrb[0].mxu0
    %v835 = vadd.f32 0.0, %v834
    %v836 = vpop.f32.mrb[0].mxu0
    %837 = vmatprep.mubr.f32.mxu0 0.0
    %838 = vmatmul.mubr.f32.gmra.mrb[0].mxu0 %v756
    %v839 = vpop.f32.mrb[0].mxu0
    %v840 = vadd.f32 0.0, %v839
    %v841 = vpop.f32.mrb[0].mxu0
    %842 = vdwg.mxu0
    %v847 = vrot.slane %v825, 6
    %v848 = vrot.slane %v830, 6
    %v849 = vsel %vm227, %v847, %v848
    %v850 = vrot.slane %v835, 6
    %v851 = vsel %vm227, %v848, %v850
    %v852 = vrot.slane %v840, 6
    %v853 = vsel %vm227, %v850, %v852
    %v858 = vsel %vm227, 0.0, %v847
    %v859 = vrot.slane %v825, 2
    %v860 = vrot.slane %v830, 2
    %v861 = vsel %vm134, %v859, %v860
    %v862 = vrot.slane %v835, 2
    %v863 = vsel %vm134, %v860, %v862
    %v864 = vrot.slane %v840, 2
    %v865 = vsel %vm134, %v862, %v864
    %v867 = vsel %vm134, %v864, 0.0
    %868 = vrot.lane.b32.xlu0 %v825, 96
    %v869 = vpop.permute.xlu0 %868
    %870 = vrot.lane.b32.xlu0 %v830, 96
    %v871 = vpop.permute.xlu0 %870
    %872 = vrot.lane.b32.xlu0 %v835, 96
    %v873 = vpop.permute.xlu0 %872
    %874 = vrot.lane.b32.xlu0 %v840, 96
    %v875 = vpop.permute.xlu0 %874
    %v880 = vadd.f32 %v858, %v869
    %v881 = vadd.f32 %v849, %v871
    %v882 = vadd.f32 %v851, %v873
    %v883 = vadd.f32 %v853, %v875
    %885 = vrot.lane.b32.xlu0 %v861, 64
    %v886 = vpop.permute.xlu0 %885
    %887 = vrot.lane.b32.xlu0 %v863, 64
    %v888 = vpop.permute.xlu0 %887
    %889 = vrot.lane.b32.xlu0 %v865, 64
    %v890 = vpop.permute.xlu0 %889
    %891 = vrot.lane.b32.xlu0 %v867, 64
    %v892 = vpop.permute.xlu0 %891
    %v897 = vadd.f32 %v880, %v886
    %v898 = vadd.f32 %v881, %v888
    %v899 = vadd.f32 %v882, %v890
    %v900 = vadd.f32 %v883, %v892
    %v901 = vld [vmem:[%s8] sm:$0x1]
    %v903 = vlaneseq
    %v904 = vshrl.u32 %v903, 7
    %v905 = vsub.s32 0, %v904
    %v906 = vrot.slane %v901, %v905
    %v908 = vadd.f32 %v897, %v906
    %v909 = vadd.f32 %v898, %v906
    %v910 = vadd.f32 %v899, %v906
    %v911 = vadd.f32 %v900, %v906
    %v912 = vmul.f32 %v908, 0.5
    %v913 = vmul.f32 %v909, 0.5
    %v914 = vmul.f32 %v910, 0.5
    %v915 = vmul.f32 %v911, 0.5
    %v916 = vmul.f32 %v908, 0.044715
    %v917 = vmul.f32 %v909, 0.044715
    %v918 = vmul.f32 %v910, 0.044715
    %v919 = vmul.f32 %v911, 0.044715
    %v920 = vmul.f32 %v916, %v908
    %v921 = vmul.f32 %v917, %v909
    %v922 = vmul.f32 %v918, %v910
    %v923 = vmul.f32 %v919, %v911
    %v924 = vmul.f32 %v920, %v908
    %v925 = vmul.f32 %v921, %v909
    %v926 = vmul.f32 %v922, %v910
    %v927 = vmul.f32 %v923, %v911
    %v928 = vadd.f32 %v908, %v924
    %v929 = vadd.f32 %v909, %v925
    %v930 = vadd.f32 %v910, %v926
    %v931 = vadd.f32 %v911, %v927
    %v932 = vmul.f32 %v928, 0.7978846
    %v933 = vmul.f32 %v929, 0.7978846
    %v934 = vmul.f32 %v930, 0.7978846
    %v935 = vmul.f32 %v931, 0.7978846
    %v936 = vtanh.pop %v932
    %v937 = vtanh.pop %v933
    %v938 = vtanh.pop %v934
    %v939 = vtanh.pop %v935
    %v940 = vadd.f32 %v936, 1.0
    %v941 = vadd.f32 %v937, 1.0
    %v942 = vadd.f32 %v938, 1.0
    %v943 = vadd.f32 %v939, 1.0
    %v944 = vmul.f32 %v912, %v940
    %v945 = vmul.f32 %v913, %v941
    %v946 = vmul.f32 %v914, %v942
    %v947 = vmul.f32 %v915, %v943
    %v948 = vld [vmem:[#allocation8] sm:$0xff]
    %v949 = vld [vmem:[#allocation8 + $0x8] sm:$0xff]
    %v950 = vld [vmem:[#allocation8 + $0x10] sm:$0xff]
    %v951 = vld [vmem:[#allocation8 + $0x18] sm:$0xff]
    %v952 = vld [vmem:[%s10] sm:$0x1]
    %v954 = vlaneseq
    %v955 = vshrl.u32 %v954, 7
    %v956 = vsub.s32 0, %v955
    %v957 = vrot.slane %v952, %v956
    %v960 = vsel %vm333, %v944, 0
    %v963 = vsel %vm333, %v945, 0
    %v966 = vsel %vm333, %v946, 0
    %v969 = vsel %vm333, %v947, 0
    %971 = vmatprep.subr.mxu0 0.0
    %972 = vmatpush1.msra.mxu0 %v948
    %973 = vmatprep.subr.mxu0 0.0
    %974 = vmatpush1.msra.mxu0 %v949
    %975 = vmatprep.subr.mxu0 0.0
    %976 = vmatpush1.msra.mxu0 %v950
    %977 = vmatprep.subr.mxu0 0.0
    %978 = vmatpush1.msra.mxu0 %v951
    %979 = vmatprep.subr.mxu0 0.0
    %980 = vmatpush1.msra.mxu0 0.0
    %981 = vmatprep.subr.mxu0 0.0
    %982 = vmatpush1.msra.mxu0 0.0
    %983 = vmatprep.subr.mxu0 0.0
    %984 = vmatpush1.msra.mxu0 0.0
    %985 = vmatprep.subr.mxu0 0.0
    %986 = vmatpush1.msra.mxu0 0.0
    %987 = vmatprep.subr.mxu0 0.0
    %988 = vmatpush1.msra.mxu0 0.0
    %989 = vmatprep.subr.mxu0 0.0
    %990 = vmatpush1.msra.mxu0 0.0
    %991 = vmatprep.subr.mxu0 0.0
    %992 = vmatpush1.msra.mxu0 0.0
    %993 = vmatprep.subr.mxu0 0.0
    %994 = vmatpush1.msra.mxu0 0.0
    %995 = vmatprep.subr.mxu0 0.0
    %996 = vmatpush1.msra.mxu0 0.0
    %997 = vmatprep.subr.mxu0 0.0
    %998 = vmatpush1.msra.mxu0 0.0
    %999 = vmatprep.subr.mxu0 0.0
    %1000 = vmatpush1.msra.mxu0 0.0
    %1001 = vmatprep.subr.mxu0 0.0
    %1002 = vmatpush1.msra.mxu0 0.0
    %1003 = vmatprep.subr.mxu0 0.0
    %1004 = vmatpush1.msra.mxu0 0.0
    %1005 = vmatprep.subr.mxu0 0.0
    %1006 = vmatpush1.msra.mxu0 0.0
    %1007 = vmatprep.subr.mxu0 0.0
    %1008 = vmatpush1.msra.mxu0 0.0
    %1009 = vmatprep.subr.mxu0 0.0
    %1010 = vmatpush1.msra.mxu0 0.0
    %1011 = vmatprep.subr.mxu0 0.0
    %1012 = vmatpush1.msra.mxu0 0.0
    %1013 = vmatprep.subr.mxu0 0.0
    %1014 = vmatpush1.msra.mxu0 0.0
    %1015 = vmatprep.subr.mxu0 0.0
    %1016 = vmatpush1.msra.mxu0 0.0
    %1017 = vmatprep.subr.mxu0 0.0
    %1018 = vmatpush1.msra.mxu0 0.0
    %1019 = vmatprep.subr.mxu0 0.0
    %1020 = vmatpush1.msra.mxu0 0.0
    %1021 = vmatprep.subr.mxu0 0.0
    %1022 = vmatpush1.msra.mxu0 0.0
    %1023 = vmatprep.subr.mxu0 0.0
    %1024 = vmatpush1.msra.mxu0 0.0
    %1025 = vmatprep.subr.mxu0 0.0
    %1026 = vmatpush1.msra.mxu0 0.0
    %1027 = vmatprep.subr.mxu0 0.0
    %1028 = vmatpush1.msra.mxu0 0.0
    %1029 = vmatprep.subr.mxu0 0.0
    %1030 = vmatpush1.msra.mxu0 0.0
    %1031 = vmatprep.subr.mxu0 0.0
    %1032 = vmatpush1.msra.mxu0 0.0
    %1033 = vmatprep.subr.mxu0 0.0
    %1034 = vmatpush1.msra.mxu0 0.0
    %1035 = vmatprep.mubr.f32.mxu0 0.0
    %1036 = vmatmul.mubr.f32.gmra.mrb[0].mxu0 %v960
    %v1037 = vpop.f32.mrb[0].mxu0
    %v1038 = vadd.f32 %v957, %v1037
    %v1039 = vpop.f32.mrb[0].mxu0
    %1040 = vmatprep.mubr.f32.mxu0 0.0
    %1041 = vmatmul.mubr.f32.gmra.mrb[0].mxu0 %v963
    %v1042 = vpop.f32.mrb[0].mxu0
    %v1043 = vadd.f32 %v957, %v1042
    %v1044 = vpop.f32.mrb[0].mxu0
    %1045 = vmatprep.mubr.f32.mxu0 0.0
    %1046 = vmatmul.mubr.f32.gmra.mrb[0].mxu0 %v966
    %v1047 = vpop.f32.mrb[0].mxu0
    %v1048 = vadd.f32 %v957, %v1047
    %v1049 = vpop.f32.mrb[0].mxu0
    %1050 = vmatprep.mubr.f32.mxu0 0.0
    %1051 = vmatmul.mubr.f32.gmra.mrb[0].mxu0 %v969
    %v1052 = vpop.f32.mrb[0].mxu0
    %v1053 = vadd.f32 %v957, %v1052
    %v1054 = vpop.f32.mrb[0].mxu0
    %1055 = vdwg.mxu0
    %v1056 = vld [vmem:[#allocation10] sm:$0xff]
    %v1057 = vld [vmem:[#allocation10 + $0x8] sm:$0xff]
    %v1058 = vld [vmem:[#allocation10 + $0x10] sm:$0xff]
    %v1059 = vld [vmem:[#allocation10 + $0x18] sm:$0xff]
    %v1060 = vld [vmem:[%s12] sm:$0x1]
    %v1062 = vrot.slane %v1053, 6
    %v1064 = vsub.f32 %v1038, %v1062
    %v1066 = vlaneseq
    %v1067 = vshrl.u32 %v1066, 7
    %v1068 = vsub.s32 0, %v1067
    %v1069 = vrot.slane %v1060, %v1068
    %v1071 = vmul.f32 %v1064, %v1069
    %v1073 = vrot.slane %v1071, 2
    %v1075 = vadd.f32 %v1053, %v1073
    %v1077 = vsel %vm333, 0.0, 0
    %1079 = vmatprep.subr.mxu0 0.0
    %1080 = vmatpush1.msra.mxu0 %v1056
    %1081 = vmatprep.subr.mxu0 0.0
    %1082 = vmatpush1.msra.mxu0 %v1057
    %1083 = vmatprep.subr.mxu0 0.0
    %1084 = vmatpush1.msra.mxu0 %v1058
    %1085 = vmatprep.subr.mxu0 0.0
    %1086 = vmatpush1.msra.mxu0 %v1059
    %1087 = vmatprep.subr.mxu0 0.0
    %1088 = vmatpush1.msra.mxu0 0.0
    %1089 = vmatprep.subr.mxu0 0.0
    %1090 = vmatpush1.msra.mxu0 0.0
    %1091 = vmatprep.subr.mxu0 0.0
    %1092 = vmatpush1.msra.mxu0 0.0
    %1093 = vmatprep.subr.mxu0 0.0
    %1094 = vmatpush1.msra.mxu0 0.0
    %1095 = vmatprep.subr.mxu0 0.0
    %1096 = vmatpush1.msra.mxu0 0.0
    %1097 = vmatprep.subr.mxu0 0.0
    %1098 = vmatpush1.msra.mxu0 0.0
    %1099 = vmatprep.subr.mxu0 0.0
    %1100 = vmatpush1.msra.mxu0 0.0
    %1101 = vmatprep.subr.mxu0 0.0
    %1102 = vmatpush1.msra.mxu0 0.0
    %1103 = vmatprep.subr.mxu0 0.0
    %1104 = vmatpush1.msra.mxu0 0.0
    %1105 = vmatprep.subr.mxu0 0.0
    %1106 = vmatpush1.msra.mxu0 0.0
    %1107 = vmatprep.subr.mxu0 0.0
    %1108 = vmatpush1.msra.mxu0 0.0
    %1109 = vmatprep.subr.mxu0 0.0
    %1110 = vmatpush1.msra.mxu0 0.0
    %1111 = vmatprep.subr.mxu0 0.0
    %1112 = vmatpush1.msra.mxu0 0.0
    %1113 = vmatprep.subr.mxu0 0.0
    %1114 = vmatpush1.msra.mxu0 0.0
    %1115 = vmatprep.subr.mxu0 0.0
    %1116 = vmatpush1.msra.mxu0 0.0
    %1117 = vmatprep.subr.mxu0 0.0
    %1118 = vmatpush1.msra.mxu0 0.0
    %1119 = vmatprep.subr.mxu0 0.0
    %1120 = vmatpush1.msra.mxu0 0.0
    %1121 = vmatprep.subr.mxu0 0.0
    %1122 = vmatpush1.msra.mxu0 0.0
    %1123 = vmatprep.subr.mxu0 0.0
    %1124 = vmatpush1.msra.mxu0 0.0
    %1125 = vmatprep.subr.mxu0 0.0
    %1126 = vmatpush1.msra.mxu0 0.0
    %1127 = vmatprep.subr.mxu0 0.0
    %1128 = vmatpush1.msra.mxu0 0.0
    %1129 = vmatprep.subr.mxu0 0.0
    %1130 = vmatpush1.msra.mxu0 0.0
    %1131 = vmatprep.subr.mxu0 0.0
    %1132 = vmatpush1.msra.mxu0 0.0
    %1133 = vmatprep.subr.mxu0 0.0
    %1134 = vmatpush1.msra.mxu0 0.0
    %1135 = vmatprep.subr.mxu0 0.0
    %1136 = vmatpush1.msra.mxu0 0.0
    %1137 = vmatprep.subr.mxu0 0.0
    %1138 = vmatpush1.msra.mxu0 0.0
    %1139 = vmatprep.subr.mxu0 0.0
    %1140 = vmatpush1.msra.mxu0 0.0
    %1141 = vmatprep.subr.mxu0 0.0
    %1142 = vmatpush1.msra.mxu0 0.0
    %1143 = vmatprep.mubr.f32.mxu0 0.0
    %1144 = vmatmul.mubr.f32.gmra.mrb[0].mxu0 %v1077
    %v1145 = vpop.f32.mrb[0].mxu0
    %v1146 = vadd.f32 0.0, %v1145
    %v1147 = vpop.f32.mrb[0].mxu0
    %1148 = vdwg.mxu0
    %v1150 = vrot.slane %v1146, 2
    %v1152 = vadd.f32 %v1075, %v1150
    %v1153 = vxor.u32 %v1152, 2147483648
    %v1154 = vmul.f32 %v1153, 1.442695
    %v1155 = vpow.pop %v1154
    %v1156 = vadd.f32 %v1155, 1.0
    %v1157 = vrcp.pop %v1156
    %v1158 = vmul.f32 1.0, %v1157
    %v1159 = vtanh.pop %v1152
    %v1160 = vmul.f32 %v1158, 0.0
    %1162 = vrot.lane.b32.xlu0 %v1159, 32
    %v1163 = vpop.permute.xlu0 %1162
    %v1165 = vmul.f32 %v1158, %v1163
    %1167 = vrot.lane.b32.xlu0 %v1165, 32
    %v1168 = vpop.permute.xlu0 %1167
    %v1170 = vadd.f32 %v1160, %v1168
    %v1171 = vtanh.pop %v1170
    %1173 = vrot.lane.b32.xlu0 %v1171, 32
    %v1174 = vpop.permute.xlu0 %1173
    %v1176 = vmul.f32 %v1158, %v1174
    %v1177 = vadd.f32 %v1176, 0.0
    %v1178 = vrot.slane %v1053, 2
    %v1180 = vsub.f32 %v1038, %v1178
    %v1181 = vmul.f32 %v1180, %v1069
    %v1183 = vrot.slane %v1181, 6
    %v1185 = vadd.f32 %v1053, %v1183
    %v1187 = vrot.slane %v1176, 6
    %1188 = vrot.lane.b32.xlu0 %v1187, 64
    %v1189 = vpop.permute.xlu0 %1188
    %v1190 = vsel %vm333, %v1189, 0
    %1192 = vmatprep.subr.mxu0 0.0
    %1193 = vmatpush1.msra.mxu0 %v1056
    %1194 = vmatprep.subr.mxu0 0.0
    %1195 = vmatpush1.msra.mxu0 %v1057
    %1196 = vmatprep.subr.mxu0 0.0
    %1197 = vmatpush1.msra.mxu0 %v1058
    %1198 = vmatprep.subr.mxu0 0.0
    %1199 = vmatpush1.msra.mxu0 %v1059
    %1200 = vmatprep.subr.mxu0 0.0
    %1201 = vmatpush1.msra.mxu0 0.0
    %1202 = vmatprep.subr.mxu0 0.0
    %1203 = vmatpush1.msra.mxu0 0.0
    %1204 = vmatprep.subr.mxu0 0.0
    %1205 = vmatpush1.msra.mxu0 0.0
    %1206 = vmatprep.subr.mxu0 0.0
    %1207 = vmatpush1.msra.mxu0 0.0
    %1208 = vmatprep.subr.mxu0 0.0
    %1209 = vmatpush1.msra.mxu0 0.0
    %1210 = vmatprep.subr.mxu0 0.0
    %1211 = vmatpush1.msra.mxu0 0.0
    %1212 = vmatprep.subr.mxu0 0.0
    %1213 = vmatpush1.msra.mxu0 0.0
    %1214 = vmatprep.subr.mxu0 0.0
    %1215 = vmatpush1.msra.mxu0 0.0
    %1216 = vmatprep.subr.mxu0 0.0
    %1217 = vmatpush1.msra.mxu0 0.0
    %1218 = vmatprep.subr.mxu0 0.0
    %1219 = vmatpush1.msra.mxu0 0.0
    %1220 = vmatprep.subr.mxu0 0.0
    %1221 = vmatpush1.msra.mxu0 0.0
    %1222 = vmatprep.subr.mxu0 0.0
    %1223 = vmatpush1.msra.mxu0 0.0
    %1224 = vmatprep.subr.mxu0 0.0
    %1225 = vmatpush1.msra.mxu0 0.0
    %1226 = vmatprep.subr.mxu0 0.0
    %1227 = vmatpush1.msra.mxu0 0.0
    %1228 = vmatprep.subr.mxu0 0.0
    %1229 = vmatpush1.msra.mxu0 0.0
    %1230 = vmatprep.subr.mxu0 0.0
    %1231 = vmatpush1.msra.mxu0 0.0
    %1232 = vmatprep.subr.mxu0 0.0
    %1233 = vmatpush1.msra.mxu0 0.0
    %1234 = vmatprep.subr.mxu0 0.0
    %1235 = vmatpush1.msra.mxu0 0.0
    %1236 = vmatprep.subr.mxu0 0.0
    %1237 = vmatpush1.msra.mxu0 0.0
    %1238 = vmatprep.subr.mxu0 0.0
    %1239 = vmatpush1.msra.mxu0 0.0
    %1240 = vmatprep.subr.mxu0 0.0
    %1241 = vmatpush1.msra.mxu0 0.0
    %1242 = vmatprep.subr.mxu0 0.0
    %1243 = vmatpush1.msra.mxu0 0.0
    %1244 = vmatprep.subr.mxu0 0.0
    %1245 = vmatpush1.msra.mxu0 0.0
    %1246 = vmatprep.subr.mxu0 0.0
    %1247 = vmatpush1.msra.mxu0 0.0
    %1248 = vmatprep.subr.mxu0 0.0
    %1249 = vmatpush1.msra.mxu0 0.0
    %1250 = vmatprep.subr.mxu0 0.0
    %1251 = vmatpush1.msra.mxu0 0.0
    %1252 = vmatprep.subr.mxu0 0.0
    %1253 = vmatpush1.msra.mxu0 0.0
    %1254 = vmatprep.subr.mxu0 0.0
    %1255 = vmatpush1.msra.mxu0 0.0
    %1256 = vmatprep.mubr.f32.mxu0 0.0
    %1257 = vmatmul.mubr.f32.gmra.mrb[0].mxu0 %v1190
    %v1258 = vpop.f32.mrb[0].mxu0
    %v1259 = vadd.f32 0.0, %v1258
    %v1260 = vpop.f32.mrb[0].mxu0
    %1261 = vdwg.mxu0
    %v1263 = vrot.slane %v1259, 4
    %v1265 = vadd.f32 %v1185, %v1263
    %v1266 = vxor.u32 %v1265, 2147483648
    %v1267 = vmul.f32 %v1266, 1.442695
    %v1268 = vpow.pop %v1267
    %v1269 = vadd.f32 %v1268, 1.0
    %v1270 = vrcp.pop %v1269
    %v1271 = vmul.f32 1.0, %v1270
    %v1272 = vtanh.pop %v1265
    %v1274 = vrot.slane %v1170, 2
    %v1276 = vmul.f32 %v1271, %v1274
    %1278 = vrot.lane.b32.xlu0 %v1272, 32
    %v1279 = vpop.permute.xlu0 %1278
    %v1281 = vmul.f32 %v1271, %v1279
    %1283 = vrot.lane.b32.xlu0 %v1281, 32
    %v1284 = vpop.permute.xlu0 %1283
    %v1286 = vadd.f32 %v1276, %v1284
    %v1287 = vtanh.pop %v1286
    %1289 = vrot.lane.b32.xlu0 %v1287, 32
    %v1290 = vpop.permute.xlu0 %1289
    %v1292 = vmul.f32 %v1271, %v1290
    %v1294 = vrot.slane %v1292, 6
    %v1296 = vadd.f32 %v1177, %v1294
    %v1297 = vrot.slane %v1292, 4
    %1298 = vrot.lane.b32.xlu0 %v1297, 64
    %v1299 = vpop.permute.xlu0 %1298
    %v1300 = vsel %vm333, %v1299, 0
    %1302 = vmatprep.subr.mxu0 0.0
    %1303 = vmatpush1.msra.mxu0 %v1056
    %1304 = vmatprep.subr.mxu0 0.0
    %1305 = vmatpush1.msra.mxu0 %v1057
    %1306 = vmatprep.subr.mxu0 0.0
    %1307 = vmatpush1.msra.mxu0 %v1058
    %1308 = vmatprep.subr.mxu0 0.0
    %1309 = vmatpush1.msra.mxu0 %v1059
    %1310 = vmatprep.subr.mxu0 0.0
    %1311 = vmatpush1.msra.mxu0 0.0
    %1312 = vmatprep.subr.mxu0 0.0
    %1313 = vmatpush1.msra.mxu0 0.0
    %1314 = vmatprep.subr.mxu0 0.0
    %1315 = vmatpush1.msra.mxu0 0.0
    %1316 = vmatprep.subr.mxu0 0.0
    %1317 = vmatpush1.msra.mxu0 0.0
    %1318 = vmatprep.subr.mxu0 0.0
    %1319 = vmatpush1.msra.mxu0 0.0
    %1320 = vmatprep.subr.mxu0 0.0
    %1321 = vmatpush1.msra.mxu0 0.0
    %1322 = vmatprep.subr.mxu0 0.0
    %1323 = vmatpush1.msra.mxu0 0.0
    %1324 = vmatprep.subr.mxu0 0.0
    %1325 = vmatpush1.msra.mxu0 0.0
    %1326 = vmatprep.subr.mxu0 0.0
    %1327 = vmatpush1.msra.mxu0 0.0
    %1328 = vmatprep.subr.mxu0 0.0
    %1329 = vmatpush1.msra.mxu0 0.0
    %1330 = vmatprep.subr.mxu0 0.0
    %1331 = vmatpush1.msra.mxu0 0.0
    %1332 = vmatprep.subr.mxu0 0.0
    %1333 = vmatpush1.msra.mxu0 0.0
    %1334 = vmatprep.subr.mxu0 0.0
    %1335 = vmatpush1.msra.mxu0 0.0
    %1336 = vmatprep.subr.mxu0 0.0
    %1337 = vmatpush1.msra.mxu0 0.0
    %1338 = vmatprep.subr.mxu0 0.0
    %1339 = vmatpush1.msra.mxu0 0.0
    %1340 = vmatprep.subr.mxu0 0.0
    %1341 = vmatpush1.msra.mxu0 0.0
    %1342 = vmatprep.subr.mxu0 0.0
    %1343 = vmatpush1.msra.mxu0 0.0
    %1344 = vmatprep.subr.mxu0 0.0
    %1345 = vmatpush1.msra.mxu0 0.0
    %1346 = vmatprep.subr.mxu0 0.0
    %1347 = vmatpush1.msra.mxu0 0.0
    %1348 = vmatprep.subr.mxu0 0.0
    %1349 = vmatpush1.msra.mxu0 0.0
    %1350 = vmatprep.subr.mxu0 0.0
    %1351 = vmatpush1.msra.mxu0 0.0
    %1352 = vmatprep.subr.mxu0 0.0
    %1353 = vmatpush1.msra.mxu0 0.0
    %1354 = vmatprep.subr.mxu0 0.0
    %1355 = vmatpush1.msra.mxu0 0.0
    %1356 = vmatprep.subr.mxu0 0.0
    %1357 = vmatpush1.msra.mxu0 0.0
    %1358 = vmatprep.subr.mxu0 0.0
    %1359 = vmatpush1.msra.mxu0 0.0
    %1360 = vmatprep.subr.mxu0 0.0
    %1361 = vmatpush1.msra.mxu0 0.0
    %1362 = vmatprep.subr.mxu0 0.0
    %1363 = vmatpush1.msra.mxu0 0.0
    %1364 = vmatprep.subr.mxu0 0.0
    %1365 = vmatpush1.msra.mxu0 0.0
    %1366 = vmatprep.mubr.f32.mxu0 0.0
    %1367 = vmatmul.mubr.f32.gmra.mrb[0].mxu0 %v1300
    %v1368 = vpop.f32.mrb[0].mxu0
    %v1369 = vadd.f32 0.0, %v1368
    %v1370 = vpop.f32.mrb[0].mxu0
    %1371 = vdwg.mxu0
    %v1373 = vrot.slane %v1369, 6
    %v1375 = vadd.f32 %v1075, %v1373
    %v1376 = vxor.u32 %v1375, 2147483648
    %v1377 = vmul.f32 %v1376, 1.442695
    %v1378 = vpow.pop %v1377
    %v1379 = vadd.f32 %v1378, 1.0
    %v1380 = vrcp.pop %v1379
    %v1381 = vmul.f32 1.0, %v1380
    %v1382 = vtanh.pop %v1375
    %v1384 = vrot.slane %v1286, 2
    %v1386 = vmul.f32 %v1381, %v1384
    %1388 = vrot.lane.b32.xlu0 %v1382, 32
    %v1389 = vpop.permute.xlu0 %1388
    %v1391 = vmul.f32 %v1381, %v1389
    %1393 = vrot.lane.b32.xlu0 %v1391, 32
    %v1394 = vpop.permute.xlu0 %1393
    %v1396 = vadd.f32 %v1386, %v1394
    %v1397 = vtanh.pop %v1396
    %1399 = vrot.lane.b32.xlu0 %v1397, 32
    %v1400 = vpop.permute.xlu0 %1399
    %v1402 = vmul.f32 %v1381, %v1400
    %v1404 = vrot.slane %v1402, 4
    %v1406 = vadd.f32 %v1296, %v1404
    %v1407 = vrot.slane %v1402, 2
    %1408 = vrot.lane.b32.xlu0 %v1407, 64
    %v1409 = vpop.permute.xlu0 %1408
    %v1410 = vsel %vm333, %v1409, 0
    %1412 = vmatprep.subr.mxu0 0.0
    %1413 = vmatpush1.msra.mxu0 %v1056
    %1414 = vmatprep.subr.mxu0 0.0
    %1415 = vmatpush1.msra.mxu0 %v1057
    %1416 = vmatprep.subr.mxu0 0.0
    %1417 = vmatpush1.msra.mxu0 %v1058
    %1418 = vmatprep.subr.mxu0 0.0
    %1419 = vmatpush1.msra.mxu0 %v1059
    %1420 = vmatprep.subr.mxu0 0.0
    %1421 = vmatpush1.msra.mxu0 0.0
    %1422 = vmatprep.subr.mxu0 0.0
    %1423 = vmatpush1.msra.mxu0 0.0
    %1424 = vmatprep.subr.mxu0 0.0
    %1425 = vmatpush1.msra.mxu0 0.0
    %1426 = vmatprep.subr.mxu0 0.0
    %1427 = vmatpush1.msra.mxu0 0.0
    %1428 = vmatprep.subr.mxu0 0.0
    %1429 = vmatpush1.msra.mxu0 0.0
    %1430 = vmatprep.subr.mxu0 0.0
    %1431 = vmatpush1.msra.mxu0 0.0
    %1432 = vmatprep.subr.mxu0 0.0
    %1433 = vmatpush1.msra.mxu0 0.0
    %1434 = vmatprep.subr.mxu0 0.0
    %1435 = vmatpush1.msra.mxu0 0.0
    %1436 = vmatprep.subr.mxu0 0.0
    %1437 = vmatpush1.msra.mxu0 0.0
    %1438 = vmatprep.subr.mxu0 0.0
    %1439 = vmatpush1.msra.mxu0 0.0
    %1440 = vmatprep.subr.mxu0 0.0
    %1441 = vmatpush1.msra.mxu0 0.0
    %1442 = vmatprep.subr.mxu0 0.0
    %1443 = vmatpush1.msra.mxu0 0.0
    %1444 = vmatprep.subr.mxu0 0.0
    %1445 = vmatpush1.msra.mxu0 0.0
    %1446 = vmatprep.subr.mxu0 0.0
    %1447 = vmatpush1.msra.mxu0 0.0
    %1448 = vmatprep.subr.mxu0 0.0
    %1449 = vmatpush1.msra.mxu0 0.0
    %1450 = vmatprep.subr.mxu0 0.0
    %1451 = vmatpush1.msra.mxu0 0.0
    %1452 = vmatprep.subr.mxu0 0.0
    %1453 = vmatpush1.msra.mxu0 0.0
    %1454 = vmatprep.subr.mxu0 0.0
    %1455 = vmatpush1.msra.mxu0 0.0
    %1456 = vmatprep.subr.mxu0 0.0
    %1457 = vmatpush1.msra.mxu0 0.0
    %1458 = vmatprep.subr.mxu0 0.0
    %1459 = vmatpush1.msra.mxu0 0.0
    %1460 = vmatprep.subr.mxu0 0.0
    %1461 = vmatpush1.msra.mxu0 0.0
    %1462 = vmatprep.subr.mxu0 0.0
    %1463 = vmatpush1.msra.mxu0 0.0
    %1464 = vmatprep.subr.mxu0 0.0
    %1465 = vmatpush1.msra.mxu0 0.0
    %1466 = vmatprep.subr.mxu0 0.0
    %1467 = vmatpush1.msra.mxu0 0.0
    %1468 = vmatprep.subr.mxu0 0.0
    %1469 = vmatpush1.msra.mxu0 0.0
    %1470 = vmatprep.subr.mxu0 0.0
    %1471 = vmatpush1.msra.mxu0 0.0
    %1472 = vmatprep.subr.mxu0 0.0
    %1473 = vmatpush1.msra.mxu0 0.0
    %1474 = vmatprep.subr.mxu0 0.0
    %1475 = vmatpush1.msra.mxu0 0.0
    %1476 = vmatprep.mubr.f32.mxu0 0.0
    %1477 = vmatmul.mubr.f32.gmra.mrb[0].mxu0 %v1410
    %v1478 = vpop.f32.mrb[0].mxu0
    %v1479 = vadd.f32 0.0, %v1478
    %v1480 = vpop.f32.mrb[0].mxu0
    %1481 = vdwg.mxu0
    %v1482 = vadd.f32 %v1185, %v1479
    %v1483 = vxor.u32 %v1482, 2147483648
    %v1484 = vmul.f32 %v1483, 1.442695
    %v1485 = vpow.pop %v1484
    %v1486 = vadd.f32 %v1485, 1.0
    %v1487 = vrcp.pop %v1486
    %v1488 = vmul.f32 1.0, %v1487
    %v1489 = vtanh.pop %v1482
    %v1491 = vrot.slane %v1396, 2
    %v1493 = vmul.f32 %v1488, %v1491
    %1495 = vrot.lane.b32.xlu0 %v1489, 32
    %v1496 = vpop.permute.xlu0 %1495
    %v1498 = vmul.f32 %v1488, %v1496
    %1500 = vrot.lane.b32.xlu0 %v1498, 32
    %v1501 = vpop.permute.xlu0 %1500
    %v1503 = vadd.f32 %v1493, %v1501
    %v1504 = vtanh.pop %v1503
    %1506 = vrot.lane.b32.xlu0 %v1504, 32
    %v1507 = vpop.permute.xlu0 %1506
    %v1509 = vmul.f32 %v1488, %v1507
    %v1511 = vrot.slane %v1509, 2
    %v1513 = vadd.f32 %v1406, %v1511
    %v1515 = vrot.slane %v1048, 6
    %v1517 = vsub.f32 %v1043, %v1515
    %v1518 = vmul.f32 %v1517, %v1069
    %v1520 = vrot.slane %v1518, 2
    %v1522 = vadd.f32 %v1048, %v1520
    %1523 = vrot.lane.b32.xlu0 %v1509, 64
    %v1524 = vpop.permute.xlu0 %1523
    %v1525 = vsel %vm333, %v1524, 0
    %1527 = vmatprep.subr.mxu0 0.0
    %1528 = vmatpush1.msra.mxu0 %v1056
    %1529 = vmatprep.subr.mxu0 0.0
    %1530 = vmatpush1.msra.mxu0 %v1057
    %1531 = vmatprep.subr.mxu0 0.0
    %1532 = vmatpush1.msra.mxu0 %v1058
    %1533 = vmatprep.subr.mxu0 0.0
    %1534 = vmatpush1.msra.mxu0 %v1059
    %1535 = vmatprep.subr.mxu0 0.0
    %1536 = vmatpush1.msra.mxu0 0.0
    %1537 = vmatprep.subr.mxu0 0.0
    %1538 = vmatpush1.msra.mxu0 0.0
    %1539 = vmatprep.subr.mxu0 0.0
    %1540 = vmatpush1.msra.mxu0 0.0
    %1541 = vmatprep.subr.mxu0 0.0
    %1542 = vmatpush1.msra.mxu0 0.0
    %1543 = vmatprep.subr.mxu0 0.0
    %1544 = vmatpush1.msra.mxu0 0.0
    %1545 = vmatprep.subr.mxu0 0.0
    %1546 = vmatpush1.msra.mxu0 0.0
    %1547 = vmatprep.subr.mxu0 0.0
    %1548 = vmatpush1.msra.mxu0 0.0
    %1549 = vmatprep.subr.mxu0 0.0
    %1550 = vmatpush1.msra.mxu0 0.0
    %1551 = vmatprep.subr.mxu0 0.0
    %1552 = vmatpush1.msra.mxu0 0.0
    %1553 = vmatprep.subr.mxu0 0.0
    %1554 = vmatpush1.msra.mxu0 0.0
    %1555 = vmatprep.subr.mxu0 0.0
    %1556 = vmatpush1.msra.mxu0 0.0
    %1557 = vmatprep.subr.mxu0 0.0
    %1558 = vmatpush1.msra.mxu0 0.0
    %1559 = vmatprep.subr.mxu0 0.0
    %1560 = vmatpush1.msra.mxu0 0.0
    %1561 = vmatprep.subr.mxu0 0.0
    %1562 = vmatpush1.msra.mxu0 0.0
    %1563 = vmatprep.subr.mxu0 0.0
    %1564 = vmatpush1.msra.mxu0 0.0
    %1565 = vmatprep.subr.mxu0 0.0
    %1566 = vmatpush1.msra.mxu0 0.0
    %1567 = vmatprep.subr.mxu0 0.0
    %1568 = vmatpush1.msra.mxu0 0.0
    %1569 = vmatprep.subr.mxu0 0.0
    %1570 = vmatpush1.msra.mxu0 0.0
    %1571 = vmatprep.subr.mxu0 0.0
    %1572 = vmatpush1.msra.mxu0 0.0
    %1573 = vmatprep.subr.mxu0 0.0
    %1574 = vmatpush1.msra.mxu0 0.0
    %1575 = vmatprep.subr.mxu0 0.0
    %1576 = vmatpush1.msra.mxu0 0.0
    %1577 = vmatprep.subr.mxu0 0.0
    %1578 = vmatpush1.msra.mxu0 0.0
    %1579 = vmatprep.subr.mxu0 0.0
    %1580 = vmatpush1.msra.mxu0 0.0
    %1581 = vmatprep.subr.mxu0 0.0
    %1582 = vmatpush1.msra.mxu0 0.0
    %1583 = vmatprep.subr.mxu0 0.0
    %1584 = vmatpush1.msra.mxu0 0.0
    %1585 = vmatprep.subr.mxu0 0.0
    %1586 = vmatpush1.msra.mxu0 0.0
    %1587 = vmatprep.subr.mxu0 0.0
    %1588 = vmatpush1.msra.mxu0 0.0
    %1589 = vmatprep.subr.mxu0 0.0
    %1590 = vmatpush1.msra.mxu0 0.0
    %1591 = vmatprep.mubr.f32.mxu0 0.0
    %1592 = vmatmul.mubr.f32.gmra.mrb[0].mxu0 %v1525
    %v1593 = vpop.f32.mrb[0].mxu0
    %v1594 = vadd.f32 0.0, %v1593
    %v1595 = vpop.f32.mrb[0].mxu0
    %1596 = vdwg.mxu0
    %v1598 = vrot.slane %v1594, 2
    %v1600 = vadd.f32 %v1522, %v1598
    %v1601 = vxor.u32 %v1600, 2147483648
    %v1602 = vmul.f32 %v1601, 1.442695
    %v1603 = vpow.pop %v1602
    %v1604 = vadd.f32 %v1603, 1.0
    %v1605 = vrcp.pop %v1604
    %v1606 = vmul.f32 1.0, %v1605
    %v1607 = vtanh.pop %v1600
    %v1609 = vrot.slane %v1503, 2
    %v1611 = vmul.f32 %v1606, %v1609
    %1613 = vrot.lane.b32.xlu0 %v1607, 32
    %v1614 = vpop.permute.xlu0 %1613
    %v1616 = vmul.f32 %v1606, %v1614
    %1618 = vrot.lane.b32.xlu0 %v1616, 32
    %v1619 = vpop.permute.xlu0 %1618
    %v1621 = vadd.f32 %v1611, %v1619
    %v1622 = vtanh.pop %v1621
    %1624 = vrot.lane.b32.xlu0 %v1622, 32
    %v1625 = vpop.permute.xlu0 %1624
    %v1627 = vmul.f32 %v1606, %v1625
    %v1628 = vadd.f32 %v1513, %v1627
    %v1629 = vrot.slane %v1048, 2
    %v1631 = vsub.f32 %v1043, %v1629
    %v1632 = vmul.f32 %v1631, %v1069
    %v1634 = vrot.slane %v1632, 6
    %v1636 = vadd.f32 %v1048, %v1634
    %v1638 = vrot.slane %v1627, 6
    %1639 = vrot.lane.b32.xlu0 %v1638, 64
    %v1640 = vpop.permute.xlu0 %1639
    %v1641 = vsel %vm333, %v1640, 0
    %1643 = vmatprep.subr.mxu0 0.0
    %1644 = vmatpush1.msra.mxu0 %v1056
    %1645 = vmatprep.subr.mxu0 0.0
    %1646 = vmatpush1.msra.mxu0 %v1057
    %1647 = vmatprep.subr.mxu0 0.0
    %1648 = vmatpush1.msra.mxu0 %v1058
    %1649 = vmatprep.subr.mxu0 0.0
    %1650 = vmatpush1.msra.mxu0 %v1059
    %1651 = vmatprep.subr.mxu0 0.0
    %1652 = vmatpush1.msra.mxu0 0.0
    %1653 = vmatprep.subr.mxu0 0.0
    %1654 = vmatpush1.msra.mxu0 0.0
    %1655 = vmatprep.subr.mxu0 0.0
    %1656 = vmatpush1.msra.mxu0 0.0
    %1657 = vmatprep.subr.mxu0 0.0
    %1658 = vmatpush1.msra.mxu0 0.0
    %1659 = vmatprep.subr.mxu0 0.0
    %1660 = vmatpush1.msra.mxu0 0.0
    %1661 = vmatprep.subr.mxu0 0.0
    %1662 = vmatpush1.msra.mxu0 0.0
    %1663 = vmatprep.subr.mxu0 0.0
    %1664 = vmatpush1.msra.mxu0 0.0
    %1665 = vmatprep.subr.mxu0 0.0
    %1666 = vmatpush1.msra.mxu0 0.0
    %1667 = vmatprep.subr.mxu0 0.0
    %1668 = vmatpush1.msra.mxu0 0.0
    %1669 = vmatprep.subr.mxu0 0.0
    %1670 = vmatpush1.msra.mxu0 0.0
    %1671 = vmatprep.subr.mxu0 0.0
    %1672 = vmatpush1.msra.mxu0 0.0
    %1673 = vmatprep.subr.mxu0 0.0
    %1674 = vmatpush1.msra.mxu0 0.0
    %1675 = vmatprep.subr.mxu0 0.0
    %1676 = vmatpush1.msra.mxu0 0.0
    %1677 = vmatprep.subr.mxu0 0.0
    %1678 = vmatpush1.msra.mxu0 0.0
    %1679 = vmatprep.subr.mxu0 0.0
    %1680 = vmatpush1.msra.mxu0 0.0
    %1681 = vmatprep.subr.mxu0 0.0
    %1682 = vmatpush1.msra.mxu0 0.0
    %1683 = vmatprep.subr.mxu0 0.0
    %1684 = vmatpush1.msra.mxu0 0.0
    %1685 = vmatprep.subr.mxu0 0.0
    %1686 = vmatpush1.msra.mxu0 0.0
    %1687 = vmatprep.subr.mxu0 0.0
    %1688 = vmatpush1.msra.mxu0 0.0
    %1689 = vmatprep.subr.mxu0 0.0
    %1690 = vmatpush1.msra.mxu0 0.0
    %1691 = vmatprep.subr.mxu0 0.0
    %1692 = vmatpush1.msra.mxu0 0.0
    %1693 = vmatprep.subr.mxu0 0.0
    %1694 = vmatpush1.msra.mxu0 0.0
    %1695 = vmatprep.subr.mxu0 0.0
    %1696 = vmatpush1.msra.mxu0 0.0
    %1697 = vmatprep.subr.mxu0 0.0
    %1698 = vmatpush1.msra.mxu0 0.0
    %1699 = vmatprep.subr.mxu0 0.0
    %1700 = vmatpush1.msra.mxu0 0.0
    %1701 = vmatprep.subr.mxu0 0.0
    %1702 = vmatpush1.msra.mxu0 0.0
    %1703 = vmatprep.subr.mxu0 0.0
    %1704 = vmatpush1.msra.mxu0 0.0
    %1705 = vmatprep.subr.mxu0 0.0
    %1706 = vmatpush1.msra.mxu0 0.0
    %1707 = vmatprep.mubr.f32.mxu0 0.0
    %1708 = vmatmul.mubr.f32.gmra.mrb[0].mxu0 %v1641
    %v1709 = vpop.f32.mrb[0].mxu0
    %v1710 = vadd.f32 0.0, %v1709
    %v1711 = vpop.f32.mrb[0].mxu0
    %1712 = vdwg.mxu0
    %v1714 = vrot.slane %v1710, 4
    %v1716 = vadd.f32 %v1636, %v1714
    %v1717 = vxor.u32 %v1716, 2147483648
    %v1718 = vmul.f32 %v1717, 1.442695
    %v1719 = vpow.pop %v1718
    %v1720 = vadd.f32 %v1719, 1.0
    %v1721 = vrcp.pop %v1720
    %v1722 = vmul.f32 1.0, %v1721
    %v1723 = vtanh.pop %v1716
    %v1725 = vrot.slane %v1621, 2
    %v1727 = vmul.f32 %v1722, %v1725
    %1729 = vrot.lane.b32.xlu0 %v1723, 32
    %v1730 = vpop.permute.xlu0 %1729
    %v1732 = vmul.f32 %v1722, %v1730
    %1734 = vrot.lane.b32.xlu0 %v1732, 32
    %v1735 = vpop.permute.xlu0 %1734
    %v1737 = vadd.f32 %v1727, %v1735
    %v1738 = vtanh.pop %v1737
    %1740 = vrot.lane.b32.xlu0 %v1738, 32
    %v1741 = vpop.permute.xlu0 %1740
    %v1743 = vmul.f32 %v1722, %v1741
    %v1745 = vrot.slane %v1743, 6
    %v1747 = vadd.f32 %v1628, %v1745
    %v1748 = vrot.slane %v1743, 4
    %1749 = vrot.lane.b32.xlu0 %v1748, 64
    %v1750 = vpop.permute.xlu0 %1749
    %v1751 = vsel %vm333, %v1750, 0
    %1753 = vmatprep.subr.mxu0 0.0
    %1754 = vmatpush1.msra.mxu0 %v1056
    %1755 = vmatprep.subr.mxu0 0.0
    %1756 = vmatpush1.msra.mxu0 %v1057
    %1757 = vmatprep.subr.mxu0 0.0
    %1758 = vmatpush1.msra.mxu0 %v1058
    %1759 = vmatprep.subr.mxu0 0.0
    %1760 = vmatpush1.msra.mxu0 %v1059
    %1761 = vmatprep.subr.mxu0 0.0
    %1762 = vmatpush1.msra.mxu0 0.0
    %1763 = vmatprep.subr.mxu0 0.0
    %1764 = vmatpush1.msra.mxu0 0.0
    %1765 = vmatprep.subr.mxu0 0.0
    %1766 = vmatpush1.msra.mxu0 0.0
    %1767 = vmatprep.subr.mxu0 0.0
    %1768 = vmatpush1.msra.mxu0 0.0
    %1769 = vmatprep.subr.mxu0 0.0
    %1770 = vmatpush1.msra.mxu0 0.0
    %1771 = vmatprep.subr.mxu0 0.0
    %1772 = vmatpush1.msra.mxu0 0.0
    %1773 = vmatprep.subr.mxu0 0.0
    %1774 = vmatpush1.msra.mxu0 0.0
    %1775 = vmatprep.subr.mxu0 0.0
    %1776 = vmatpush1.msra.mxu0 0.0
    %1777 = vmatprep.subr.mxu0 0.0
    %1778 = vmatpush1.msra.mxu0 0.0
    %1779 = vmatprep.subr.mxu0 0.0
    %1780 = vmatpush1.msra.mxu0 0.0
    %1781 = vmatprep.subr.mxu0 0.0
    %1782 = vmatpush1.msra.mxu0 0.0
    %1783 = vmatprep.subr.mxu0 0.0
    %1784 = vmatpush1.msra.mxu0 0.0
    %1785 = vmatprep.subr.mxu0 0.0
    %1786 = vmatpush1.msra.mxu0 0.0
    %1787 = vmatprep.subr.mxu0 0.0
    %1788 = vmatpush1.msra.mxu0 0.0
    %1789 = vmatprep.subr.mxu0 0.0
    %1790 = vmatpush1.msra.mxu0 0.0
    %1791 = vmatprep.subr.mxu0 0.0
    %1792 = vmatpush1.msra.mxu0 0.0
    %1793 = vmatprep.subr.mxu0 0.0
    %1794 = vmatpush1.msra.mxu0 0.0
    %1795 = vmatprep.subr.mxu0 0.0
    %1796 = vmatpush1.msra.mxu0 0.0
    %1797 = vmatprep.subr.mxu0 0.0
    %1798 = vmatpush1.msra.mxu0 0.0
    %1799 = vmatprep.subr.mxu0 0.0
    %1800 = vmatpush1.msra.mxu0 0.0
    %1801 = vmatprep.subr.mxu0 0.0
    %1802 = vmatpush1.msra.mxu0 0.0
    %1803 = vmatprep.subr.mxu0 0.0
    %1804 = vmatpush1.msra.mxu0 0.0
    %1805 = vmatprep.subr.mxu0 0.0
    %1806 = vmatpush1.msra.mxu0 0.0
    %1807 = vmatprep.subr.mxu0 0.0
    %1808 = vmatpush1.msra.mxu0 0.0
    %1809 = vmatprep.subr.mxu0 0.0
    %1810 = vmatpush1.msra.mxu0 0.0
    %1811 = vmatprep.subr.mxu0 0.0
    %1812 = vmatpush1.msra.mxu0 0.0
    %1813 = vmatprep.subr.mxu0 0.0
    %1814 = vmatpush1.msra.mxu0 0.0
    %1815 = vmatprep.subr.mxu0 0.0
    %1816 = vmatpush1.msra.mxu0 0.0
    %1817 = vmatprep.mubr.f32.mxu0 0.0
    %1818 = vmatmul.mubr.f32.gmra.mrb[0].mxu0 %v1751
    %v1819 = vpop.f32.mrb[0].mxu0
    %v1820 = vadd.f32 0.0, %v1819
    %v1821 = vpop.f32.mrb[0].mxu0
    %1822 = vdwg.mxu0
    %v1824 = vrot.slane %v1820, 6
    %v1826 = vadd.f32 %v1522, %v1824
    %v1827 = vxor.u32 %v1826, 2147483648
    %v1828 = vmul.f32 %v1827, 1.442695
    %v1829 = vpow.pop %v1828
    %v1830 = vadd.f32 %v1829, 1.0
    %v1831 = vrcp.pop %v1830
    %v1832 = vmul.f32 1.0, %v1831
    %v1833 = vtanh.pop %v1826
    %v1835 = vrot.slane %v1737, 2
    %v1837 = vmul.f32 %v1832, %v1835
    %1839 = vrot.lane.b32.xlu0 %v1833, 32
    %v1840 = vpop.permute.xlu0 %1839
    %v1842 = vmul.f32 %v1832, %v1840
    %1844 = vrot.lane.b32.xlu0 %v1842, 32
    %v1845 = vpop.permute.xlu0 %1844
    %v1847 = vadd.f32 %v1837, %v1845
    %v1848 = vtanh.pop %v1847
    %1850 = vrot.lane.b32.xlu0 %v1848, 32
    %v1851 = vpop.permute.xlu0 %1850
    %v1853 = vmul.f32 %v1832, %v1851
    %v1855 = vrot.slane %v1853, 4
    %v1857 = vadd.f32 %v1747, %v1855
    %v1858 = vrot.slane %v1853, 2
    %1859 = vrot.lane.b32.xlu0 %v1858, 64
    %v1860 = vpop.permute.xlu0 %1859
    %v1861 = vsel %vm333, %v1860, 0
    %1863 = vmatprep.subr.mxu0 0.0
    %1864 = vmatpush1.msra.mxu0 %v1056
    %1865 = vmatprep.subr.mxu0 0.0
    %1866 = vmatpush1.msra.mxu0 %v1057
    %1867 = vmatprep.subr.mxu0 0.0
    %1868 = vmatpush1.msra.mxu0 %v1058
    %1869 = vmatprep.subr.mxu0 0.0
    %1870 = vmatpush1.msra.mxu0 %v1059
    %1871 = vmatprep.subr.mxu0 0.0
    %1872 = vmatpush1.msra.mxu0 0.0
    %1873 = vmatprep.subr.mxu0 0.0
    %1874 = vmatpush1.msra.mxu0 0.0
    %1875 = vmatprep.subr.mxu0 0.0
    %1876 = vmatpush1.msra.mxu0 0.0
    %1877 = vmatprep.subr.mxu0 0.0
    %1878 = vmatpush1.msra.mxu0 0.0
    %1879 = vmatprep.subr.mxu0 0.0
    %1880 = vmatpush1.msra.mxu0 0.0
    %1881 = vmatprep.subr.mxu0 0.0
    %1882 = vmatpush1.msra.mxu0 0.0
    %1883 = vmatprep.subr.mxu0 0.0
    %1884 = vmatpush1.msra.mxu0 0.0
    %1885 = vmatprep.subr.mxu0 0.0
    %1886 = vmatpush1.msra.mxu0 0.0
    %1887 = vmatprep.subr.mxu0 0.0
    %1888 = vmatpush1.msra.mxu0 0.0
    %1889 = vmatprep.subr.mxu0 0.0
    %1890 = vmatpush1.msra.mxu0 0.0
    %1891 = vmatprep.subr.mxu0 0.0
    %1892 = vmatpush1.msra.mxu0 0.0
    %1893 = vmatprep.subr.mxu0 0.0
    %1894 = vmatpush1.msra.mxu0 0.0
    %1895 = vmatprep.subr.mxu0 0.0
    %1896 = vmatpush1.msra.mxu0 0.0
    %1897 = vmatprep.subr.mxu0 0.0
    %1898 = vmatpush1.msra.mxu0 0.0
    %1899 = vmatprep.subr.mxu0 0.0
    %1900 = vmatpush1.msra.mxu0 0.0
    %1901 = vmatprep.subr.mxu0 0.0
    %1902 = vmatpush1.msra.mxu0 0.0
    %1903 = vmatprep.subr.mxu0 0.0
    %1904 = vmatpush1.msra.mxu0 0.0
    %1905 = vmatprep.subr.mxu0 0.0
    %1906 = vmatpush1.msra.mxu0 0.0
    %1907 = vmatprep.subr.mxu0 0.0
    %1908 = vmatpush1.msra.mxu0 0.0
    %1909 = vmatprep.subr.mxu0 0.0
    %1910 = vmatpush1.msra.mxu0 0.0
    %1911 = vmatprep.subr.mxu0 0.0
    %1912 = vmatpush1.msra.mxu0 0.0
    %1913 = vmatprep.subr.mxu0 0.0
    %1914 = vmatpush1.msra.mxu0 0.0
    %1915 = vmatprep.subr.mxu0 0.0
    %1916 = vmatpush1.msra.mxu0 0.0
    %1917 = vmatprep.subr.mxu0 0.0
    %1918 = vmatpush1.msra.mxu0 0.0
    %1919 = vmatprep.subr.mxu0 0.0
    %1920 = vmatpush1.msra.mxu0 0.0
    %1921 = vmatprep.subr.mxu0 0.0
    %1922 = vmatpush1.msra.mxu0 0.0
    %1923 = vmatprep.subr.mxu0 0.0
    %1924 = vmatpush1.msra.mxu0 0.0
    %1925 = vmatprep.subr.mxu0 0.0
    %1926 = vmatpush1.msra.mxu0 0.0
    %1927 = vmatprep.mubr.f32.mxu0 0.0
    %1928 = vmatmul.mubr.f32.gmra.mrb[0].mxu0 %v1861
    %v1929 = vpop.f32.mrb[0].mxu0
    %v1930 = vadd.f32 0.0, %v1929
    %v1931 = vpop.f32.mrb[0].mxu0
    %1932 = vdwg.mxu0
    %v1933 = vadd.f32 %v1636, %v1930
    %v1934 = vxor.u32 %v1933, 2147483648
    %v1935 = vmul.f32 %v1934, 1.442695
    %v1936 = vpow.pop %v1935
    %v1937 = vadd.f32 %v1936, 1.0
    %v1938 = vrcp.pop %v1937
    %v1939 = vmul.f32 1.0, %v1938
    %v1940 = vtanh.pop %v1933
    %v1942 = vrot.slane %v1847, 2
    %v1944 = vmul.f32 %v1939, %v1942
    %1946 = vrot.lane.b32.xlu0 %v1940, 32
    %v1947 = vpop.permute.xlu0 %1946
    %v1949 = vmul.f32 %v1939, %v1947
    %1951 = vrot.lane.b32.xlu0 %v1949, 32
    %v1952 = vpop.permute.xlu0 %1951
    %v1954 = vadd.f32 %v1944, %v1952
    %v1955 = vtanh.pop %v1954
    %1957 = vrot.lane.b32.xlu0 %v1955, 32
    %v1958 = vpop.permute.xlu0 %1957
    %v1960 = vmul.f32 %v1939, %v1958
    %v1962 = vrot.slane %v1960, 2
    %v1964 = vadd.f32 %v1857, %v1962
    %v1966 = vrot.slane %v1043, 6
    %v1968 = vsub.f32 %v1048, %v1966
    %v1969 = vmul.f32 %v1968, %v1069
    %v1971 = vrot.slane %v1969, 2
    %v1973 = vadd.f32 %v1043, %v1971
    %1974 = vrot.lane.b32.xlu0 %v1960, 64
    %v1975 = vpop.permute.xlu0 %1974
    %v1976 = vsel %vm333, %v1975, 0
    %1978 = vmatprep.subr.mxu0 0.0
    %1979 = vmatpush1.msra.mxu0 %v1056
    %1980 = vmatprep.subr.mxu0 0.0
    %1981 = vmatpush1.msra.mxu0 %v1057
    %1982 = vmatprep.subr.mxu0 0.0
    %1983 = vmatpush1.msra.mxu0 %v1058
    %1984 = vmatprep.subr.mxu0 0.0
    %1985 = vmatpush1.msra.mxu0 %v1059
    %1986 = vmatprep.subr.mxu0 0.0
    %1987 = vmatpush1.msra.mxu0 0.0
    %1988 = vmatprep.subr.mxu0 0.0
    %1989 = vmatpush1.msra.mxu0 0.0
    %1990 = vmatprep.subr.mxu0 0.0
    %1991 = vmatpush1.msra.mxu0 0.0
    %1992 = vmatprep.subr.mxu0 0.0
    %1993 = vmatpush1.msra.mxu0 0.0
    %1994 = vmatprep.subr.mxu0 0.0
    %1995 = vmatpush1.msra.mxu0 0.0
    %1996 = vmatprep.subr.mxu0 0.0
    %1997 = vmatpush1.msra.mxu0 0.0
    %1998 = vmatprep.subr.mxu0 0.0
    %1999 = vmatpush1.msra.mxu0 0.0
    %2000 = vmatprep.subr.mxu0 0.0
    %2001 = vmatpush1.msra.mxu0 0.0
    %2002 = vmatprep.subr.mxu0 0.0
    %2003 = vmatpush1.msra.mxu0 0.0
    %2004 = vmatprep.subr.mxu0 0.0
    %2005 = vmatpush1.msra.mxu0 0.0
    %2006 = vmatprep.subr.mxu0 0.0
    %2007 = vmatpush1.msra.mxu0 0.0
    %2008 = vmatprep.subr.mxu0 0.0
    %2009 = vmatpush1.msra.mxu0 0.0
    %2010 = vmatprep.subr.mxu0 0.0
    %2011 = vmatpush1.msra.mxu0 0.0
    %2012 = vmatprep.subr.mxu0 0.0
    %2013 = vmatpush1.msra.mxu0 0.0
    %2014 = vmatprep.subr.mxu0 0.0
    %2015 = vmatpush1.msra.mxu0 0.0
    %2016 = vmatprep.subr.mxu0 0.0
    %2017 = vmatpush1.msra.mxu0 0.0
    %2018 = vmatprep.subr.mxu0 0.0
    %2019 = vmatpush1.msra.mxu0 0.0
    %2020 = vmatprep.subr.mxu0 0.0
    %2021 = vmatpush1.msra.mxu0 0.0
    %2022 = vmatprep.subr.mxu0 0.0
    %2023 = vmatpush1.msra.mxu0 0.0
    %2024 = vmatprep.subr.mxu0 0.0
    %2025 = vmatpush1.msra.mxu0 0.0
    %2026 = vmatprep.subr.mxu0 0.0
    %2027 = vmatpush1.msra.mxu0 0.0
    %2028 = vmatprep.subr.mxu0 0.0
    %2029 = vmatpush1.msra.mxu0 0.0
    %2030 = vmatprep.subr.mxu0 0.0
    %2031 = vmatpush1.msra.mxu0 0.0
    %2032 = vmatprep.subr.mxu0 0.0
    %2033 = vmatpush1.msra.mxu0 0.0
    %2034 = vmatprep.subr.mxu0 0.0
    %2035 = vmatpush1.msra.mxu0 0.0
    %2036 = vmatprep.subr.mxu0 0.0
    %2037 = vmatpush1.msra.mxu0 0.0
    %2038 = vmatprep.subr.mxu0 0.0
    %2039 = vmatpush1.msra.mxu0 0.0
    %2040 = vmatprep.subr.mxu0 0.0
    %2041 = vmatpush1.msra.mxu0 0.0
    %2042 = vmatprep.mubr.f32.mxu0 0.0
    %2043 = vmatmul.mubr.f32.gmra.mrb[0].mxu0 %v1976
    %v2044 = vpop.f32.mrb[0].mxu0
    %v2045 = vadd.f32 0.0, %v2044
    %v2046 = vpop.f32.mrb[0].mxu0
    %2047 = vdwg.mxu0
    %v2049 = vrot.slane %v2045, 2
    %v2051 = vadd.f32 %v1973, %v2049
    %v2052 = vxor.u32 %v2051, 2147483648
    %v2053 = vmul.f32 %v2052, 1.442695
    %v2054 = vpow.pop %v2053
    %v2055 = vadd.f32 %v2054, 1.0
    %v2056 = vrcp.pop %v2055
    %v2057 = vmul.f32 1.0, %v2056
    %v2058 = vtanh.pop %v2051
    %v2060 = vrot.slane %v1954, 2
    %v2062 = vmul.f32 %v2057, %v2060
    %2064 = vrot.lane.b32.xlu0 %v2058, 32
    %v2065 = vpop.permute.xlu0 %2064
    %v2067 = vmul.f32 %v2057, %v2065
    %2069 = vrot.lane.b32.xlu0 %v2067, 32
    %v2070 = vpop.permute.xlu0 %2069
    %v2072 = vadd.f32 %v2062, %v2070
    %v2073 = vtanh.pop %v2072
    %2075 = vrot.lane.b32.xlu0 %v2073, 32
    %v2076 = vpop.permute.xlu0 %2075
    %v2078 = vmul.f32 %v2057, %v2076
    %v2079 = vadd.f32 %v1964, %v2078
    %v2080 = vrot.slane %v1043, 2
    %v2082 = vsub.f32 %v1048, %v2080
    %v2083 = vmul.f32 %v2082, %v1069
    %v2085 = vrot.slane %v2083, 6
    %v2087 = vadd.f32 %v1043, %v2085
    %v2089 = vrot.slane %v2078, 6
    %2090 = vrot.lane.b32.xlu0 %v2089, 64
    %v2091 = vpop.permute.xlu0 %2090
    %v2092 = vsel %vm333, %v2091, 0
    %2094 = vmatprep.subr.mxu0 0.0
    %2095 = vmatpush1.msra.mxu0 %v1056
    %2096 = vmatprep.subr.mxu0 0.0
    %2097 = vmatpush1.msra.mxu0 %v1057
    %2098 = vmatprep.subr.mxu0 0.0
    %2099 = vmatpush1.msra.mxu0 %v1058
    %2100 = vmatprep.subr.mxu0 0.0
    %2101 = vmatpush1.msra.mxu0 %v1059
    %2102 = vmatprep.subr.mxu0 0.0
    %2103 = vmatpush1.msra.mxu0 0.0
    %2104 = vmatprep.subr.mxu0 0.0
    %2105 = vmatpush1.msra.mxu0 0.0
    %2106 = vmatprep.subr.mxu0 0.0
    %2107 = vmatpush1.msra.mxu0 0.0
    %2108 = vmatprep.subr.mxu0 0.0
    %2109 = vmatpush1.msra.mxu0 0.0
    %2110 = vmatprep.subr.mxu0 0.0
    %2111 = vmatpush1.msra.mxu0 0.0
    %2112 = vmatprep.subr.mxu0 0.0
    %2113 = vmatpush1.msra.mxu0 0.0
    %2114 = vmatprep.subr.mxu0 0.0
    %2115 = vmatpush1.msra.mxu0 0.0
    %2116 = vmatprep.subr.mxu0 0.0
    %2117 = vmatpush1.msra.mxu0 0.0
    %2118 = vmatprep.subr.mxu0 0.0
    %2119 = vmatpush1.msra.mxu0 0.0
    %2120 = vmatprep.subr.mxu0 0.0
    %2121 = vmatpush1.msra.mxu0 0.0
    %2122 = vmatprep.subr.mxu0 0.0
    %2123 = vmatpush1.msra.mxu0 0.0
    %2124 = vmatprep.subr.mxu0 0.0
    %2125 = vmatpush1.msra.mxu0 0.0
    %2126 = vmatprep.subr.mxu0 0.0
    %2127 = vmatpush1.msra.mxu0 0.0
    %2128 = vmatprep.subr.mxu0 0.0
    %2129 = vmatpush1.msra.mxu0 0.0
    %2130 = vmatprep.subr.mxu0 0.0
    %2131 = vmatpush1.msra.mxu0 0.0
    %2132 = vmatprep.subr.mxu0 0.0
    %2133 = vmatpush1.msra.mxu0 0.0
    %2134 = vmatprep.subr.mxu0 0.0
    %2135 = vmatpush1.msra.mxu0 0.0
    %2136 = vmatprep.subr.mxu0 0.0
    %2137 = vmatpush1.msra.mxu0 0.0
    %2138 = vmatprep.subr.mxu0 0.0
    %2139 = vmatpush1.msra.mxu0 0.0
    %2140 = vmatprep.subr.mxu0 0.0
    %2141 = vmatpush1.msra.mxu0 0.0
    %2142 = vmatprep.subr.mxu0 0.0
    %2143 = vmatpush1.msra.mxu0 0.0
    %2144 = vmatprep.subr.mxu0 0.0
    %2145 = vmatpush1.msra.mxu0 0.0
    %2146 = vmatprep.subr.mxu0 0.0
    %2147 = vmatpush1.msra.mxu0 0.0
    %2148 = vmatprep.subr.mxu0 0.0
    %2149 = vmatpush1.msra.mxu0 0.0
    %2150 = vmatprep.subr.mxu0 0.0
    %2151 = vmatpush1.msra.mxu0 0.0
    %2152 = vmatprep.subr.mxu0 0.0
    %2153 = vmatpush1.msra.mxu0 0.0
    %2154 = vmatprep.subr.mxu0 0.0
    %2155 = vmatpush1.msra.mxu0 0.0
    %2156 = vmatprep.subr.mxu0 0.0
    %2157 = vmatpush1.msra.mxu0 0.0
    %2158 = vmatprep.mubr.f32.mxu0 0.0
    %2159 = vmatmul.mubr.f32.gmra.mrb[0].mxu0 %v2092
    %v2160 = vpop.f32.mrb[0].mxu0
    %v2161 = vadd.f32 0.0, %v2160
    %v2162 = vpop.f32.mrb[0].mxu0
    %2163 = vdwg.mxu0
    %v2165 = vrot.slane %v2161, 4
    %v2167 = vadd.f32 %v2087, %v2165
    %v2168 = vxor.u32 %v2167, 2147483648
    %v2169 = vmul.f32 %v2168, 1.442695
    %v2170 = vpow.pop %v2169
    %v2171 = vadd.f32 %v2170, 1.0
    %v2172 = vrcp.pop %v2171
    %v2173 = vmul.f32 1.0, %v2172
    %v2174 = vtanh.pop %v2167
    %v2176 = vrot.slane %v2072, 2
    %v2178 = vmul.f32 %v2173, %v2176
    %2180 = vrot.lane.b32.xlu0 %v2174, 32
    %v2181 = vpop.permute.xlu0 %2180
    %v2183 = vmul.f32 %v2173, %v2181
    %2185 = vrot.lane.b32.xlu0 %v2183, 32
    %v2186 = vpop.permute.xlu0 %2185
    %v2188 = vadd.f32 %v2178, %v2186
    %v2189 = vtanh.pop %v2188
    %2191 = vrot.lane.b32.xlu0 %v2189, 32
    %v2192 = vpop.permute.xlu0 %2191
    %v2194 = vmul.f32 %v2173, %v2192
    %v2196 = vrot.slane %v2194, 6
    %v2198 = vadd.f32 %v2079, %v2196
    %v2199 = vrot.slane %v2194, 4
    %2200 = vrot.lane.b32.xlu0 %v2199, 64
    %v2201 = vpop.permute.xlu0 %2200
    %v2202 = vsel %vm333, %v2201, 0
    %2204 = vmatprep.subr.mxu0 0.0
    %2205 = vmatpush1.msra.mxu0 %v1056
    %2206 = vmatprep.subr.mxu0 0.0
    %2207 = vmatpush1.msra.mxu0 %v1057
    %2208 = vmatprep.subr.mxu0 0.0
    %2209 = vmatpush1.msra.mxu0 %v1058
    %2210 = vmatprep.subr.mxu0 0.0
    %2211 = vmatpush1.msra.mxu0 %v1059
    %2212 = vmatprep.subr.mxu0 0.0
    %2213 = vmatpush1.msra.mxu0 0.0
    %2214 = vmatprep.subr.mxu0 0.0
    %2215 = vmatpush1.msra.mxu0 0.0
    %2216 = vmatprep.subr.mxu0 0.0
    %2217 = vmatpush1.msra.mxu0 0.0
    %2218 = vmatprep.subr.mxu0 0.0
    %2219 = vmatpush1.msra.mxu0 0.0
    %2220 = vmatprep.subr.mxu0 0.0
    %2221 = vmatpush1.msra.mxu0 0.0
    %2222 = vmatprep.subr.mxu0 0.0
    %2223 = vmatpush1.msra.mxu0 0.0
    %2224 = vmatprep.subr.mxu0 0.0
    %2225 = vmatpush1.msra.mxu0 0.0
    %2226 = vmatprep.subr.mxu0 0.0
    %2227 = vmatpush1.msra.mxu0 0.0
    %2228 = vmatprep.subr.mxu0 0.0
    %2229 = vmatpush1.msra.mxu0 0.0
    %2230 = vmatprep.subr.mxu0 0.0
    %2231 = vmatpush1.msra.mxu0 0.0
    %2232 = vmatprep.subr.mxu0 0.0
    %2233 = vmatpush1.msra.mxu0 0.0
    %2234 = vmatprep.subr.mxu0 0.0
    %2235 = vmatpush1.msra.mxu0 0.0
    %2236 = vmatprep.subr.mxu0 0.0
    %2237 = vmatpush1.msra.mxu0 0.0
    %2238 = vmatprep.subr.mxu0 0.0
    %2239 = vmatpush1.msra.mxu0 0.0
    %2240 = vmatprep.subr.mxu0 0.0
    %2241 = vmatpush1.msra.mxu0 0.0
    %2242 = vmatprep.subr.mxu0 0.0
    %2243 = vmatpush1.msra.mxu0 0.0
    %2244 = vmatprep.subr.mxu0 0.0
    %2245 = vmatpush1.msra.mxu0 0.0
    %2246 = vmatprep.subr.mxu0 0.0
    %2247 = vmatpush1.msra.mxu0 0.0
    %2248 = vmatprep.subr.mxu0 0.0
    %2249 = vmatpush1.msra.mxu0 0.0
    %2250 = vmatprep.subr.mxu0 0.0
    %2251 = vmatpush1.msra.mxu0 0.0
    %2252 = vmatprep.subr.mxu0 0.0
    %2253 = vmatpush1.msra.mxu0 0.0
    %2254 = vmatprep.subr.mxu0 0.0
    %2255 = vmatpush1.msra.mxu0 0.0
    %2256 = vmatprep.subr.mxu0 0.0
    %2257 = vmatpush1.msra.mxu0 0.0
    %2258 = vmatprep.subr.mxu0 0.0
    %2259 = vmatpush1.msra.mxu0 0.0
    %2260 = vmatprep.subr.mxu0 0.0
    %2261 = vmatpush1.msra.mxu0 0.0
    %2262 = vmatprep.subr.mxu0 0.0
    %2263 = vmatpush1.msra.mxu0 0.0
    %2264 = vmatprep.subr.mxu0 0.0
    %2265 = vmatpush1.msra.mxu0 0.0
    %2266 = vmatprep.subr.mxu0 0.0
    %2267 = vmatpush1.msra.mxu0 0.0
    %2268 = vmatprep.mubr.f32.mxu0 0.0
    %2269 = vmatmul.mubr.f32.gmra.mrb[0].mxu0 %v2202
    %v2270 = vpop.f32.mrb[0].mxu0
    %v2271 = vadd.f32 0.0, %v2270
    %v2272 = vpop.f32.mrb[0].mxu0
    %2273 = vdwg.mxu0
    %v2275 = vrot.slane %v2271, 6
    %v2277 = vadd.f32 %v1973, %v2275
    %v2278 = vxor.u32 %v2277, 2147483648
    %v2279 = vmul.f32 %v2278, 1.442695
    %v2280 = vpow.pop %v2279
    %v2281 = vadd.f32 %v2280, 1.0
    %v2282 = vrcp.pop %v2281
    %v2283 = vmul.f32 1.0, %v2282
    %v2284 = vtanh.pop %v2277
    %v2286 = vrot.slane %v2188, 2
    %v2288 = vmul.f32 %v2283, %v2286
    %2290 = vrot.lane.b32.xlu0 %v2284, 32
    %v2291 = vpop.permute.xlu0 %2290
    %v2293 = vmul.f32 %v2283, %v2291
    %2295 = vrot.lane.b32.xlu0 %v2293, 32
    %v2296 = vpop.permute.xlu0 %2295
    %v2298 = vadd.f32 %v2288, %v2296
    %v2299 = vtanh.pop %v2298
    %2301 = vrot.lane.b32.xlu0 %v2299, 32
    %v2302 = vpop.permute.xlu0 %2301
    %v2304 = vmul.f32 %v2283, %v2302
    %v2306 = vrot.slane %v2304, 4
    %v2308 = vadd.f32 %v2198, %v2306
    %v2309 = vrot.slane %v2304, 2
    %2310 = vrot.lane.b32.xlu0 %v2309, 64
    %v2311 = vpop.permute.xlu0 %2310
    %v2312 = vsel %vm333, %v2311, 0
    %2314 = vmatprep.subr.mxu0 0.0
    %2315 = vmatpush1.msra.mxu0 %v1056
    %2316 = vmatprep.subr.mxu0 0.0
    %2317 = vmatpush1.msra.mxu0 %v1057
    %2318 = vmatprep.subr.mxu0 0.0
    %2319 = vmatpush1.msra.mxu0 %v1058
    %2320 = vmatprep.subr.mxu0 0.0
    %2321 = vmatpush1.msra.mxu0 %v1059
    %2322 = vmatprep.subr.mxu0 0.0
    %2323 = vmatpush1.msra.mxu0 0.0
    %2324 = vmatprep.subr.mxu0 0.0
    %2325 = vmatpush1.msra.mxu0 0.0
    %2326 = vmatprep.subr.mxu0 0.0
    %2327 = vmatpush1.msra.mxu0 0.0
    %2328 = vmatprep.subr.mxu0 0.0
    %2329 = vmatpush1.msra.mxu0 0.0
    %2330 = vmatprep.subr.mxu0 0.0
    %2331 = vmatpush1.msra.mxu0 0.0
    %2332 = vmatprep.subr.mxu0 0.0
    %2333 = vmatpush1.msra.mxu0 0.0
    %2334 = vmatprep.subr.mxu0 0.0
    %2335 = vmatpush1.msra.mxu0 0.0
    %2336 = vmatprep.subr.mxu0 0.0
    %2337 = vmatpush1.msra.mxu0 0.0
    %2338 = vmatprep.subr.mxu0 0.0
    %2339 = vmatpush1.msra.mxu0 0.0
    %2340 = vmatprep.subr.mxu0 0.0
    %2341 = vmatpush1.msra.mxu0 0.0
    %2342 = vmatprep.subr.mxu0 0.0
    %2343 = vmatpush1.msra.mxu0 0.0
    %2344 = vmatprep.subr.mxu0 0.0
    %2345 = vmatpush1.msra.mxu0 0.0
    %2346 = vmatprep.subr.mxu0 0.0
    %2347 = vmatpush1.msra.mxu0 0.0
    %2348 = vmatprep.subr.mxu0 0.0
    %2349 = vmatpush1.msra.mxu0 0.0
    %2350 = vmatprep.subr.mxu0 0.0
    %2351 = vmatpush1.msra.mxu0 0.0
    %2352 = vmatprep.subr.mxu0 0.0
    %2353 = vmatpush1.msra.mxu0 0.0
    %2354 = vmatprep.subr.mxu0 0.0
    %2355 = vmatpush1.msra.mxu0 0.0
    %2356 = vmatprep.subr.mxu0 0.0
    %2357 = vmatpush1.msra.mxu0 0.0
    %2358 = vmatprep.subr.mxu0 0.0
    %2359 = vmatpush1.msra.mxu0 0.0
    %2360 = vmatprep.subr.mxu0 0.0
    %2361 = vmatpush1.msra.mxu0 0.0
    %2362 = vmatprep.subr.mxu0 0.0
    %2363 = vmatpush1.msra.mxu0 0.0
    %2364 = vmatprep.subr.mxu0 0.0
    %2365 = vmatpush1.msra.mxu0 0.0
    %2366 = vmatprep.subr.mxu0 0.0
    %2367 = vmatpush1.msra.mxu0 0.0
    %2368 = vmatprep.subr.mxu0 0.0
    %2369 = vmatpush1.msra.mxu0 0.0
    %2370 = vmatprep.subr.mxu0 0.0
    %2371 = vmatpush1.msra.mxu0 0.0
    %2372 = vmatprep.subr.mxu0 0.0
    %2373 = vmatpush1.msra.mxu0 0.0
    %2374 = vmatprep.subr.mxu0 0.0
    %2375 = vmatpush1.msra.mxu0 0.0
    %2376 = vmatprep.subr.mxu0 0.0
    %2377 = vmatpush1.msra.mxu0 0.0
    %2378 = vmatprep.mubr.f32.mxu0 0.0
    %2379 = vmatmul.mubr.f32.gmra.mrb[0].mxu0 %v2312
    %v2380 = vpop.f32.mrb[0].mxu0
    %v2381 = vadd.f32 0.0, %v2380
    %v2382 = vpop.f32.mrb[0].mxu0
    %2383 = vdwg.mxu0
    %v2384 = vadd.f32 %v2087, %v2381
    %v2385 = vxor.u32 %v2384, 2147483648
    %v2386 = vmul.f32 %v2385, 1.442695
    %v2387 = vpow.pop %v2386
    %v2388 = vadd.f32 %v2387, 1.0
    %v2389 = vrcp.pop %v2388
    %v2390 = vmul.f32 1.0, %v2389
    %v2391 = vtanh.pop %v2384
    %v2393 = vrot.slane %v2298, 2
    %v2395 = vmul.f32 %v2390, %v2393
    %2397 = vrot.lane.b32.xlu0 %v2391, 32
    %v2398 = vpop.permute.xlu0 %2397
    %v2400 = vmul.f32 %v2390, %v2398
    %2402 = vrot.lane.b32.xlu0 %v2400, 32
    %v2403 = vpop.permute.xlu0 %2402
    %v2405 = vadd.f32 %v2395, %v2403
    %v2406 = vtanh.pop %v2405
    %2408 = vrot.lane.b32.xlu0 %v2406, 32
    %v2409 = vpop.permute.xlu0 %2408
    %v2411 = vmul.f32 %v2390, %v2409
    %v2413 = vrot.slane %v2411, 2
    %v2415 = vadd.f32 %v2308, %v2413
    %v2417 = vrot.slane %v1038, 6
    %v2419 = vsub.f32 %v1053, %v2417
    %v2420 = vmul.f32 %v2419, %v1069
    %v2422 = vrot.slane %v2420, 2
    %v2424 = vadd.f32 %v1038, %v2422
    %2425 = vrot.lane.b32.xlu0 %v2411, 64
    %v2426 = vpop.permute.xlu0 %2425
    %v2427 = vsel %vm333, %v2426, 0
    %2429 = vmatprep.subr.mxu0 0.0
    %2430 = vmatpush1.msra.mxu0 %v1056
    %2431 = vmatprep.subr.mxu0 0.0
    %2432 = vmatpush1.msra.mxu0 %v1057
    %2433 = vmatprep.subr.mxu0 0.0
    %2434 = vmatpush1.msra.mxu0 %v1058
    %2435 = vmatprep.subr.mxu0 0.0
    %2436 = vmatpush1.msra.mxu0 %v1059
    %2437 = vmatprep.subr.mxu0 0.0
    %2438 = vmatpush1.msra.mxu0 0.0
    %2439 = vmatprep.subr.mxu0 0.0
    %2440 = vmatpush1.msra.mxu0 0.0
    %2441 = vmatprep.subr.mxu0 0.0
    %2442 = vmatpush1.msra.mxu0 0.0
    %2443 = vmatprep.subr.mxu0 0.0
    %2444 = vmatpush1.msra.mxu0 0.0
    %2445 = vmatprep.subr.mxu0 0.0
    %2446 = vmatpush1.msra.mxu0 0.0
    %2447 = vmatprep.subr.mxu0 0.0
    %2448 = vmatpush1.msra.mxu0 0.0
    %2449 = vmatprep.subr.mxu0 0.0
    %2450 = vmatpush1.msra.mxu0 0.0
    %2451 = vmatprep.subr.mxu0 0.0
    %2452 = vmatpush1.msra.mxu0 0.0
    %2453 = vmatprep.subr.mxu0 0.0
    %2454 = vmatpush1.msra.mxu0 0.0
    %2455 = vmatprep.subr.mxu0 0.0
    %2456 = vmatpush1.msra.mxu0 0.0
    %2457 = vmatprep.subr.mxu0 0.0
    %2458 = vmatpush1.msra.mxu0 0.0
    %2459 = vmatprep.subr.mxu0 0.0
    %2460 = vmatpush1.msra.mxu0 0.0
    %2461 = vmatprep.subr.mxu0 0.0
    %2462 = vmatpush1.msra.mxu0 0.0
    %2463 = vmatprep.subr.mxu0 0.0
    %2464 = vmatpush1.msra.mxu0 0.0
    %2465 = vmatprep.subr.mxu0 0.0
    %2466 = vmatpush1.msra.mxu0 0.0
    %2467 = vmatprep.subr.mxu0 0.0
    %2468 = vmatpush1.msra.mxu0 0.0
    %2469 = vmatprep.subr.mxu0 0.0
    %2470 = vmatpush1.msra.mxu0 0.0
    %2471 = vmatprep.subr.mxu0 0.0
    %2472 = vmatpush1.msra.mxu0 0.0
    %2473 = vmatprep.subr.mxu0 0.0
    %2474 = vmatpush1.msra.mxu0 0.0
    %2475 = vmatprep.subr.mxu0 0.0
    %2476 = vmatpush1.msra.mxu0 0.0
    %2477 = vmatprep.subr.mxu0 0.0
    %2478 = vmatpush1.msra.mxu0 0.0
    %2479 = vmatprep.subr.mxu0 0.0
    %2480 = vmatpush1.msra.mxu0 0.0
    %2481 = vmatprep.subr.mxu0 0.0
    %2482 = vmatpush1.msra.mxu0 0.0
    %2483 = vmatprep.subr.mxu0 0.0
    %2484 = vmatpush1.msra.mxu0 0.0
    %2485 = vmatprep.subr.mxu0 0.0
    %2486 = vmatpush1.msra.mxu0 0.0
    %2487 = vmatprep.subr.mxu0 0.0
    %2488 = vmatpush1.msra.mxu0 0.0
    %2489 = vmatprep.subr.mxu0 0.0
    %2490 = vmatpush1.msra.mxu0 0.0
    %2491 = vmatprep.subr.mxu0 0.0
    %2492 = vmatpush1.msra.mxu0 0.0
    %2493 = vmatprep.mubr.f32.mxu0 0.0
    %2494 = vmatmul.mubr.f32.gmra.mrb[0].mxu0 %v2427
    %v2495 = vpop.f32.mrb[0].mxu0
    %v2496 = vadd.f32 0.0, %v2495
    %v2497 = vpop.f32.mrb[0].mxu0
    %2498 = vdwg.mxu0
    %v2500 = vrot.slane %v2496, 2
    %v2502 = vadd.f32 %v2424, %v2500
    %v2503 = vxor.u32 %v2502, 2147483648
    %v2504 = vmul.f32 %v2503, 1.442695
    %v2505 = vpow.pop %v2504
    %v2506 = vadd.f32 %v2505, 1.0
    %v2507 = vrcp.pop %v2506
    %v2508 = vmul.f32 1.0, %v2507
    %v2509 = vtanh.pop %v2502
    %v2511 = vrot.slane %v2405, 2
    %v2513 = vmul.f32 %v2508, %v2511
    %2515 = vrot.lane.b32.xlu0 %v2509, 32
    %v2516 = vpop.permute.xlu0 %2515
    %v2518 = vmul.f32 %v2508, %v2516
    %2520 = vrot.lane.b32.xlu0 %v2518, 32
    %v2521 = vpop.permute.xlu0 %2520
    %v2523 = vadd.f32 %v2513, %v2521
    %v2524 = vtanh.pop %v2523
    %2526 = vrot.lane.b32.xlu0 %v2524, 32
    %v2527 = vpop.permute.xlu0 %2526
    %v2529 = vmul.f32 %v2508, %v2527
    %v2530 = vadd.f32 %v2415, %v2529
    %v2531 = vrot.slane %v1038, 2
    %v2533 = vsub.f32 %v1053, %v2531
    %v2534 = vmul.f32 %v2533, %v1069
    %v2536 = vrot.slane %v2534, 6
    %v2538 = vadd.f32 %v1038, %v2536
    %v2540 = vrot.slane %v2529, 6
    %2541 = vrot.lane.b32.xlu0 %v2540, 64
    %v2542 = vpop.permute.xlu0 %2541
    %v2543 = vsel %vm333, %v2542, 0
    %2545 = vmatprep.subr.mxu0 0.0
    %2546 = vmatpush1.msra.mxu0 %v1056
    %2547 = vmatprep.subr.mxu0 0.0
    %2548 = vmatpush1.msra.mxu0 %v1057
    %2549 = vmatprep.subr.mxu0 0.0
    %2550 = vmatpush1.msra.mxu0 %v1058
    %2551 = vmatprep.subr.mxu0 0.0
    %2552 = vmatpush1.msra.mxu0 %v1059
    %2553 = vmatprep.subr.mxu0 0.0
    %2554 = vmatpush1.msra.mxu0 0.0
    %2555 = vmatprep.subr.mxu0 0.0
    %2556 = vmatpush1.msra.mxu0 0.0
    %2557 = vmatprep.subr.mxu0 0.0
    %2558 = vmatpush1.msra.mxu0 0.0
    %2559 = vmatprep.subr.mxu0 0.0
    %2560 = vmatpush1.msra.mxu0 0.0
    %2561 = vmatprep.subr.mxu0 0.0
    %2562 = vmatpush1.msra.mxu0 0.0
    %2563 = vmatprep.subr.mxu0 0.0
    %2564 = vmatpush1.msra.mxu0 0.0
    %2565 = vmatprep.subr.mxu0 0.0
    %2566 = vmatpush1.msra.mxu0 0.0
    %2567 = vmatprep.subr.mxu0 0.0
    %2568 = vmatpush1.msra.mxu0 0.0
    %2569 = vmatprep.subr.mxu0 0.0
    %2570 = vmatpush1.msra.mxu0 0.0
    %2571 = vmatprep.subr.mxu0 0.0
    %2572 = vmatpush1.msra.mxu0 0.0
    %2573 = vmatprep.subr.mxu0 0.0
    %2574 = vmatpush1.msra.mxu0 0.0
    %2575 = vmatprep.subr.mxu0 0.0
    %2576 = vmatpush1.msra.mxu0 0.0
    %2577 = vmatprep.subr.mxu0 0.0
    %2578 = vmatpush1.msra.mxu0 0.0
    %2579 = vmatprep.subr.mxu0 0.0
    %2580 = vmatpush1.msra.mxu0 0.0
    %2581 = vmatprep.subr.mxu0 0.0
    %2582 = vmatpush1.msra.mxu0 0.0
    %2583 = vmatprep.subr.mxu0 0.0
    %2584 = vmatpush1.msra.mxu0 0.0
    %2585 = vmatprep.subr.mxu0 0.0
    %2586 = vmatpush1.msra.mxu0 0.0
    %2587 = vmatprep.subr.mxu0 0.0
    %2588 = vmatpush1.msra.mxu0 0.0
    %2589 = vmatprep.subr.mxu0 0.0
    %2590 = vmatpush1.msra.mxu0 0.0
    %2591 = vmatprep.subr.mxu0 0.0
    %2592 = vmatpush1.msra.mxu0 0.0
    %2593 = vmatprep.subr.mxu0 0.0
    %2594 = vmatpush1.msra.mxu0 0.0
    %2595 = vmatprep.subr.mxu0 0.0
    %2596 = vmatpush1.msra.mxu0 0.0
    %2597 = vmatprep.subr.mxu0 0.0
    %2598 = vmatpush1.msra.mxu0 0.0
    %2599 = vmatprep.subr.mxu0 0.0
    %2600 = vmatpush1.msra.mxu0 0.0
    %2601 = vmatprep.subr.mxu0 0.0
    %2602 = vmatpush1.msra.mxu0 0.0
    %2603 = vmatprep.subr.mxu0 0.0
    %2604 = vmatpush1.msra.mxu0 0.0
    %2605 = vmatprep.subr.mxu0 0.0
    %2606 = vmatpush1.msra.mxu0 0.0
    %2607 = vmatprep.subr.mxu0 0.0
    %2608 = vmatpush1.msra.mxu0 0.0
    %2609 = vmatprep.mubr.f32.mxu0 0.0
    %2610 = vmatmul.mubr.f32.gmra.mrb[0].mxu0 %v2543
    %v2611 = vpop.f32.mrb[0].mxu0
    %v2612 = vadd.f32 0.0, %v2611
    %v2613 = vpop.f32.mrb[0].mxu0
    %2614 = vdwg.mxu0
    %v2616 = vrot.slane %v2612, 4
    %v2618 = vadd.f32 %v2538, %v2616
    %v2619 = vxor.u32 %v2618, 2147483648
    %v2620 = vmul.f32 %v2619, 1.442695
    %v2621 = vpow.pop %v2620
    %v2622 = vadd.f32 %v2621, 1.0
    %v2623 = vrcp.pop %v2622
    %v2624 = vmul.f32 1.0, %v2623
    %v2625 = vtanh.pop %v2618
    %v2627 = vrot.slane %v2523, 2
    %v2629 = vmul.f32 %v2624, %v2627
    %2631 = vrot.lane.b32.xlu0 %v2625, 32
    %v2632 = vpop.permute.xlu0 %2631
    %v2634 = vmul.f32 %v2624, %v2632
    %2636 = vrot.lane.b32.xlu0 %v2634, 32
    %v2637 = vpop.permute.xlu0 %2636
    %v2639 = vadd.f32 %v2629, %v2637
    %v2640 = vtanh.pop %v2639
    %2642 = vrot.lane.b32.xlu0 %v2640, 32
    %v2643 = vpop.permute.xlu0 %2642
    %v2645 = vmul.f32 %v2624, %v2643
    %v2647 = vrot.slane %v2645, 6
    %v2649 = vadd.f32 %v2530, %v2647
    %v2650 = vrot.slane %v2645, 4
    %2651 = vrot.lane.b32.xlu0 %v2650, 64
    %v2652 = vpop.permute.xlu0 %2651
    %v2653 = vsel %vm333, %v2652, 0
    %2655 = vmatprep.subr.mxu0 0.0
    %2656 = vmatpush1.msra.mxu0 %v1056
    %2657 = vmatprep.subr.mxu0 0.0
    %2658 = vmatpush1.msra.mxu0 %v1057
    %2659 = vmatprep.subr.mxu0 0.0
    %2660 = vmatpush1.msra.mxu0 %v1058
    %2661 = vmatprep.subr.mxu0 0.0
    %2662 = vmatpush1.msra.mxu0 %v1059
    %2663 = vmatprep.subr.mxu0 0.0
    %2664 = vmatpush1.msra.mxu0 0.0
    %2665 = vmatprep.subr.mxu0 0.0
    %2666 = vmatpush1.msra.mxu0 0.0
    %2667 = vmatprep.subr.mxu0 0.0
    %2668 = vmatpush1.msra.mxu0 0.0
    %2669 = vmatprep.subr.mxu0 0.0
    %2670 = vmatpush1.msra.mxu0 0.0
    %2671 = vmatprep.subr.mxu0 0.0
    %2672 = vmatpush1.msra.mxu0 0.0
    %2673 = vmatprep.subr.mxu0 0.0
    %2674 = vmatpush1.msra.mxu0 0.0
    %2675 = vmatprep.subr.mxu0 0.0
    %2676 = vmatpush1.msra.mxu0 0.0
    %2677 = vmatprep.subr.mxu0 0.0
    %2678 = vmatpush1.msra.mxu0 0.0
    %2679 = vmatprep.subr.mxu0 0.0
    %2680 = vmatpush1.msra.mxu0 0.0
    %2681 = vmatprep.subr.mxu0 0.0
    %2682 = vmatpush1.msra.mxu0 0.0
    %2683 = vmatprep.subr.mxu0 0.0
    %2684 = vmatpush1.msra.mxu0 0.0
    %2685 = vmatprep.subr.mxu0 0.0
    %2686 = vmatpush1.msra.mxu0 0.0
    %2687 = vmatprep.subr.mxu0 0.0
    %2688 = vmatpush1.msra.mxu0 0.0
    %2689 = vmatprep.subr.mxu0 0.0
    %2690 = vmatpush1.msra.mxu0 0.0
    %2691 = vmatprep.subr.mxu0 0.0
    %2692 = vmatpush1.msra.mxu0 0.0
    %2693 = vmatprep.subr.mxu0 0.0
    %2694 = vmatpush1.msra.mxu0 0.0
    %2695 = vmatprep.subr.mxu0 0.0
    %2696 = vmatpush1.msra.mxu0 0.0
    %2697 = vmatprep.subr.mxu0 0.0
    %2698 = vmatpush1.msra.mxu0 0.0
    %2699 = vmatprep.subr.mxu0 0.0
    %2700 = vmatpush1.msra.mxu0 0.0
    %2701 = vmatprep.subr.mxu0 0.0
    %2702 = vmatpush1.msra.mxu0 0.0
    %2703 = vmatprep.subr.mxu0 0.0
    %2704 = vmatpush1.msra.mxu0 0.0
    %2705 = vmatprep.subr.mxu0 0.0
    %2706 = vmatpush1.msra.mxu0 0.0
    %2707 = vmatprep.subr.mxu0 0.0
    %2708 = vmatpush1.msra.mxu0 0.0
    %2709 = vmatprep.subr.mxu0 0.0
    %2710 = vmatpush1.msra.mxu0 0.0
    %2711 = vmatprep.subr.mxu0 0.0
    %2712 = vmatpush1.msra.mxu0 0.0
    %2713 = vmatprep.subr.mxu0 0.0
    %2714 = vmatpush1.msra.mxu0 0.0
    %2715 = vmatprep.subr.mxu0 0.0
    %2716 = vmatpush1.msra.mxu0 0.0
    %2717 = vmatprep.subr.mxu0 0.0
    %2718 = vmatpush1.msra.mxu0 0.0
    %2719 = vmatprep.mubr.f32.mxu0 0.0
    %2720 = vmatmul.mubr.f32.gmra.mrb[0].mxu0 %v2653
    %v2721 = vpop.f32.mrb[0].mxu0
    %v2722 = vadd.f32 0.0, %v2721
    %v2723 = vpop.f32.mrb[0].mxu0
    %2724 = vdwg.mxu0
    %v2726 = vrot.slane %v2722, 6
    %v2728 = vadd.f32 %v2424, %v2726
    %v2729 = vxor.u32 %v2728, 2147483648
    %v2730 = vmul.f32 %v2729, 1.442695
    %v2731 = vpow.pop %v2730
    %v2732 = vadd.f32 %v2731, 1.0
    %v2733 = vrcp.pop %v2732
    %v2734 = vmul.f32 1.0, %v2733
    %v2735 = vtanh.pop %v2728
    %v2737 = vrot.slane %v2639, 2
    %v2739 = vmul.f32 %v2734, %v2737
    %2741 = vrot.lane.b32.xlu0 %v2735, 32
    %v2742 = vpop.permute.xlu0 %2741
    %v2744 = vmul.f32 %v2734, %v2742
    %2746 = vrot.lane.b32.xlu0 %v2744, 32
    %v2747 = vpop.permute.xlu0 %2746
    %v2749 = vadd.f32 %v2739, %v2747
    %v2750 = vtanh.pop %v2749
    %2752 = vrot.lane.b32.xlu0 %v2750, 32
    %v2753 = vpop.permute.xlu0 %2752
    %v2755 = vmul.f32 %v2734, %v2753
    %v2757 = vrot.slane %v2755, 4
    %v2759 = vadd.f32 %v2649, %v2757
    %v2760 = vrot.slane %v2755, 2
    %2761 = vrot.lane.b32.xlu0 %v2760, 64
    %v2762 = vpop.permute.xlu0 %2761
    %v2763 = vsel %vm333, %v2762, 0
    %2765 = vmatprep.subr.mxu0 0.0
    %2766 = vmatpush1.msra.mxu0 %v1056
    %2767 = vmatprep.subr.mxu0 0.0
    %2768 = vmatpush1.msra.mxu0 %v1057
    %2769 = vmatprep.subr.mxu0 0.0
    %2770 = vmatpush1.msra.mxu0 %v1058
    %2771 = vmatprep.subr.mxu0 0.0
    %2772 = vmatpush1.msra.mxu0 %v1059
    %2773 = vmatprep.subr.mxu0 0.0
    %2774 = vmatpush1.msra.mxu0 0.0
    %2775 = vmatprep.subr.mxu0 0.0
    %2776 = vmatpush1.msra.mxu0 0.0
    %2777 = vmatprep.subr.mxu0 0.0
    %2778 = vmatpush1.msra.mxu0 0.0
    %2779 = vmatprep.subr.mxu0 0.0
    %2780 = vmatpush1.msra.mxu0 0.0
    %2781 = vmatprep.subr.mxu0 0.0
    %2782 = vmatpush1.msra.mxu0 0.0
    %2783 = vmatprep.subr.mxu0 0.0
    %2784 = vmatpush1.msra.mxu0 0.0
    %2785 = vmatprep.subr.mxu0 0.0
    %2786 = vmatpush1.msra.mxu0 0.0
    %2787 = vmatprep.subr.mxu0 0.0
    %2788 = vmatpush1.msra.mxu0 0.0
    %2789 = vmatprep.subr.mxu0 0.0
    %2790 = vmatpush1.msra.mxu0 0.0
    %2791 = vmatprep.subr.mxu0 0.0
    %2792 = vmatpush1.msra.mxu0 0.0
    %2793 = vmatprep.subr.mxu0 0.0
    %2794 = vmatpush1.msra.mxu0 0.0
    %2795 = vmatprep.subr.mxu0 0.0
    %2796 = vmatpush1.msra.mxu0 0.0
    %2797 = vmatprep.subr.mxu0 0.0
    %2798 = vmatpush1.msra.mxu0 0.0
    %2799 = vmatprep.subr.mxu0 0.0
    %2800 = vmatpush1.msra.mxu0 0.0
    %2801 = vmatprep.subr.mxu0 0.0
    %2802 = vmatpush1.msra.mxu0 0.0
    %2803 = vmatprep.subr.mxu0 0.0
    %2804 = vmatpush1.msra.mxu0 0.0
    %2805 = vmatprep.subr.mxu0 0.0
    %2806 = vmatpush1.msra.mxu0 0.0
    %2807 = vmatprep.subr.mxu0 0.0
    %2808 = vmatpush1.msra.mxu0 0.0
    %2809 = vmatprep.subr.mxu0 0.0
    %2810 = vmatpush1.msra.mxu0 0.0
    %2811 = vmatprep.subr.mxu0 0.0
    %2812 = vmatpush1.msra.mxu0 0.0
    %2813 = vmatprep.subr.mxu0 0.0
    %2814 = vmatpush1.msra.mxu0 0.0
    %2815 = vmatprep.subr.mxu0 0.0
    %2816 = vmatpush1.msra.mxu0 0.0
    %2817 = vmatprep.subr.mxu0 0.0
    %2818 = vmatpush1.msra.mxu0 0.0
    %2819 = vmatprep.subr.mxu0 0.0
    %2820 = vmatpush1.msra.mxu0 0.0
    %2821 = vmatprep.subr.mxu0 0.0
    %2822 = vmatpush1.msra.mxu0 0.0
    %2823 = vmatprep.subr.mxu0 0.0
    %2824 = vmatpush1.msra.mxu0 0.0
    %2825 = vmatprep.subr.mxu0 0.0
    %2826 = vmatpush1.msra.mxu0 0.0
    %2827 = vmatprep.subr.mxu0 0.0
    %2828 = vmatpush1.msra.mxu0 0.0
    %2829 = vmatprep.mubr.f32.mxu0 0.0
    %2830 = vmatmul.mubr.f32.gmra.mrb[0].mxu0 %v2763
    %v2831 = vpop.f32.mrb[0].mxu0
    %v2832 = vadd.f32 0.0, %v2831
    %v2833 = vpop.f32.mrb[0].mxu0
    %2834 = vdwg.mxu0
    %v2835 = vadd.f32 %v2538, %v2832
    %v2836 = vxor.u32 %v2835, 2147483648
    %v2837 = vmul.f32 %v2836, 1.442695
    %v2838 = vpow.pop %v2837
    %v2839 = vadd.f32 %v2838, 1.0
    %v2840 = vrcp.pop %v2839
    %v2841 = vmul.f32 1.0, %v2840
    %v2842 = vtanh.pop %v2835
    %v2844 = vrot.slane %v2749, 2
    %v2846 = vmul.f32 %v2841, %v2844
    %2848 = vrot.lane.b32.xlu0 %v2842, 32
    %v2849 = vpop.permute.xlu0 %2848
    %v2851 = vmul.f32 %v2841, %v2849
    %2853 = vrot.lane.b32.xlu0 %v2851, 32
    %v2854 = vpop.permute.xlu0 %2853
    %v2856 = vadd.f32 %v2846, %v2854
    %v2857 = vtanh.pop %v2856
    %2859 = vrot.lane.b32.xlu0 %v2857, 32
    %v2860 = vpop.permute.xlu0 %2859
    %v2862 = vmul.f32 %v2841, %v2860
    %v2864 = vrot.slane %v2862, 2
    %v2866 = vadd.f32 %v2759, %v2864
    %v2867 = vmul.f32 %v2866, 0.0625
    %v2868 = vld [vmem:[%s13] sm:$0xff]
    %v2869 = vld [vmem:[%s13 + $0x8] sm:$0xff]
    %v2870 = vld [vmem:[%s13 + $0x10] sm:$0xff]
    %v2871 = vld [vmem:[%s13 + $0x18] sm:$0xff]
    %v2872 = vld [vmem:[%s14] sm:$0x1]
    %v2874 = vlaneseq
    %v2875 = vshrl.u32 %v2874, 7
    %v2876 = vsub.s32 0, %v2875
    %v2877 = vrot.slane %v2872, %v2876
    %v2880 = vrot.slane %v2867, 6
    %2881 = vrot.lane.b32.xlu0 %v2880, 64
    %v2882 = vpop.permute.xlu0 %2881
    %v2883 = vsel %vm333, %v2882, 0
    %2885 = vmatprep.subr.mxu0 0.0
    %2886 = vmatpush1.msra.mxu0 %v2868
    %2887 = vmatprep.subr.mxu0 0.0
    %2888 = vmatpush1.msra.mxu0 %v2869
    %2889 = vmatprep.subr.mxu0 0.0
    %2890 = vmatpush1.msra.mxu0 %v2870
    %2891 = vmatprep.subr.mxu0 0.0
    %2892 = vmatpush1.msra.mxu0 %v2871
    %2893 = vmatprep.subr.mxu0 0.0
    %2894 = vmatpush1.msra.mxu0 0.0
    %2895 = vmatprep.subr.mxu0 0.0
    %2896 = vmatpush1.msra.mxu0 0.0
    %2897 = vmatprep.subr.mxu0 0.0
    %2898 = vmatpush1.msra.mxu0 0.0
    %2899 = vmatprep.subr.mxu0 0.0
    %2900 = vmatpush1.msra.mxu0 0.0
    %2901 = vmatprep.subr.mxu0 0.0
    %2902 = vmatpush1.msra.mxu0 0.0
    %2903 = vmatprep.subr.mxu0 0.0
    %2904 = vmatpush1.msra.mxu0 0.0
    %2905 = vmatprep.subr.mxu0 0.0
    %2906 = vmatpush1.msra.mxu0 0.0
    %2907 = vmatprep.subr.mxu0 0.0
    %2908 = vmatpush1.msra.mxu0 0.0
    %2909 = vmatprep.subr.mxu0 0.0
    %2910 = vmatpush1.msra.mxu0 0.0
    %2911 = vmatprep.subr.mxu0 0.0
    %2912 = vmatpush1.msra.mxu0 0.0
    %2913 = vmatprep.subr.mxu0 0.0
    %2914 = vmatpush1.msra.mxu0 0.0
    %2915 = vmatprep.subr.mxu0 0.0
    %2916 = vmatpush1.msra.mxu0 0.0
    %2917 = vmatprep.subr.mxu0 0.0
    %2918 = vmatpush1.msra.mxu0 0.0
    %2919 = vmatprep.subr.mxu0 0.0
    %2920 = vmatpush1.msra.mxu0 0.0
    %2921 = vmatprep.subr.mxu0 0.0
    %2922 = vmatpush1.msra.mxu0 0.0
    %2923 = vmatprep.subr.mxu0 0.0
    %2924 = vmatpush1.msra.mxu0 0.0
    %2925 = vmatprep.subr.mxu0 0.0
    %2926 = vmatpush1.msra.mxu0 0.0
    %2927 = vmatprep.subr.mxu0 0.0
    %2928 = vmatpush1.msra.mxu0 0.0
    %2929 = vmatprep.subr.mxu0 0.0
    %2930 = vmatpush1.msra.mxu0 0.0
    %2931 = vmatprep.subr.mxu0 0.0
    %2932 = vmatpush1.msra.mxu0 0.0
    %2933 = vmatprep.subr.mxu0 0.0
    %2934 = vmatpush1.msra.mxu0 0.0
    %2935 = vmatprep.subr.mxu0 0.0
    %2936 = vmatpush1.msra.mxu0 0.0
    %2937 = vmatprep.subr.mxu0 0.0
    %2938 = vmatpush1.msra.mxu0 0.0
    %2939 = vmatprep.subr.mxu0 0.0
    %2940 = vmatpush1.msra.mxu0 0.0
    %2941 = vmatprep.subr.mxu0 0.0
    %2942 = vmatpush1.msra.mxu0 0.0
    %2943 = vmatprep.subr.mxu0 0.0
    %2944 = vmatpush1.msra.mxu0 0.0
    %2945 = vmatprep.subr.mxu0 0.0
    %2946 = vmatpush1.msra.mxu0 0.0
    %2947 = vmatprep.subr.mxu0 0.0
    %2948 = vmatpush1.msra.mxu0 0.0
    %2949 = vmatprep.mubr.f32.mxu0 0.0
    %2950 = vmatmul.mubr.f32.gmra.mrb[0].mxu0 %v2883
    %v2951 = vpop.f32.mrb[0].mxu0
    %v2952 = vadd.f32 %v2877, %v2951
    %v2953 = vpop.f32.mrb[0].mxu0
    %2954 = vdwg.mxu0
    %vm2955 = vcmask 25600
    %2956 = vst.msk [vmem:[#allocation11] sm:$0x3] %vm2955, %v2952
    // Predicated region
    $region82: #{tpu_custom_call.1} parent=1 // pred_check
      _
    $region83: #{tpu_custom_call.1} parent=1 // pred_check_branch
      %2958 = sbr.rel (0) target = $region85
    $region84: #{tpu_custom_call.1} parent=1 // pred_region
      %s2960 = ssub.s32 32, 32
      %2961 = vsyncadd [#allocation4], %s2960
      %s2963 = sshll.u32 [#allocation11], 4
      %s2964 = int_to_ptr.vmem [resolvable:$true] %s2963
      %2966 = dma.vmem_to_hbm [thread:$0]  %s2964, 32, %s15, [#allocation4]
    $region85: #{tpu_custom_call.1} parent=1 // pred_fallthru
      _
    // Predicated region
    $region86: #{tpu_custom_call.1} parent=1 // pred_check
      _
    $region87: #{tpu_custom_call.1} parent=1 // pred_check_branch
      %2968 = sbr.rel (0) target = $region89
    $region88: #{tpu_custom_call.1} parent=1 // pred_region
      %2969 = dma.done [#allocation4], 32
    $region89: #{tpu_custom_call.1} parent=1 // pred_fallthru
      _
    %2970 = vsyncpa [#allocation3], 1
    %2971 = vsyncpa [#allocation6], 1
    %2972 = vsyncpa [#allocation9], 1
    %2973 = vsyncpa [#allocation4], 1

</llo_original>
